<compile_context>
chip_gen: v7x
topology: tpu7x:2x2x1
jax: 0.10.0
libtpu: 0.0.40
codegen_flags: <defaults>
</compile_context>

<pallas_src>
import math

import jax
import jax.numpy as jnp
import numpy as np
from jax import lax
from jax.experimental import pallas as pl
from jax.experimental.pallas import tpu as pltpu

LANE = 128   # vreg lane width / MXU column count
SUB = 8      # f32 sublane count


def _round_up(x, m):
    return ((x + m - 1) // m) * m


# --------------------------------------------------------------------------- #
# Static geometry of a Conv2d(kernel=3, stride=2, padding=1) stack.
# Each layer's output is stored row-flattened as m = ho * wop + wo with
# wop = Wo + 1 (one junk column that downstream stages mask out) and channels
# zero-padded to 128 lanes.
# --------------------------------------------------------------------------- #
def conv_geometry(img_size, num_layers):
    geoms = []
    s = img_size
    for _ in range(num_layers):
        h = w = s
        ho = (h - 1) // 2 + 1
        wo = (w - 1) // 2 + 1
        geoms.append(dict(h=h, w=w, ho=ho, wo=wo,
                          hop=ho + 1, wop=wo + 1, m_rows=ho * (wo + 1)))
        s = ho
    return geoms


def tap_offsets(hop, wop):
    """Row offset (into the stacked 4-phase array of the layer's 1-padded input)
    of tap t = kh*3+kw; reading m_rows contiguous rows from that offset gives the
    tap operand for every output row m = ho*wop + wo (junk only in the wop col)."""
    offs = []
    for kh in range(3):
        for kw in range(3):
            p = (kh % 2) * 2 + (kw % 2)
            offs.append(p * hop * wop + (kh // 2) * wop + (kw // 2))
    return tuple(offs)


def build_a0(x_nchw, cin_p0, geom):
    """im2col of the FIRST conv layer only (built once in XLA on the tiny raw
    input; no inter-layer HBM traffic).  Returns (N, m_rows0, 9*cin_p0) bf16."""
    n, cin, h, w = x_nchw.shape
    hop, wop, m_rows = geom['hop'], geom['wop'], geom['m_rows']
    x = jnp.transpose(x_nchw, (0, 2, 3, 1)).astype(jnp.bfloat16)       # NHWC
    x = jnp.pad(x, ((0, 0), (0, 0), (0, 0), (0, cin_p0 - cin)))
    pad_b, pad_r = 1 + (h % 2), 1 + (w % 2)
    xp = jnp.pad(x, ((0, 0), (1, pad_b), (1, pad_r), (0, 0)))
    # stride-2 phase decomposition (volume preserving), stacked along rows
    ph = xp.reshape(n, hop, 2, wop, 2, cin_p0).transpose(0, 2, 4, 1, 3, 5)
    ph = ph.reshape(n, 4 * hop * wop, cin_p0)
    cols = [ph[:, off:off + m_rows, :] for off in tap_offsets(hop, wop)]
    return jnp.concatenate(cols, axis=-1)


# --------------------------------------------------------------------------- #
# Parameters: PyTorch-native layouts at init; one-time packing into kernel
# layouts (all layout work hoisted out of the forward pass).
# --------------------------------------------------------------------------- #
def init_raw_params(key, input_channels, hidden_dims, img_size, latent_dim):
    """PyTorch-style params: conv weights OIHW, Linear weights (out, in)."""
    raw = {"convs": []}
    cin, s = input_channels, img_size
    keys = jax.random.split(key, 2 * len(hidden_dims) + 4)
    ki = 0
    for h in hidden_dims:
        w = jax.random.normal(keys[ki], (h, cin, 3, 3), jnp.float32) * 0.05
        bias = jax.random.normal(keys[ki + 1], (h,), jnp.float32) * 0.05
        ki += 2
        raw["convs"].append((w, bias))
        cin = h
        s = math.floor((s + 2 - 3) / 2) + 1
    feat = hidden_dims[-1] * s * s
    raw["fc_mu_w"] = jax.random.normal(keys[ki], (latent_dim, feat), jnp.float32) * 0.05
    raw["fc_mu_b"] = jax.random.normal(keys[ki + 1], (latent_dim,), jnp.float32) * 0.05
    raw["fc_logvar_w"] = jax.random.normal(keys[ki + 2], (latent_dim, feat), jnp.float32) * 0.05
    raw["fc_logvar_b"] = jax.random.normal(keys[ki + 3], (latent_dim,), jnp.float32) * 0.05
    return raw


def pack_params(raw, input_channels, hidden_dims, img_size, latent_dim):
    L = len(hidden_dims)
    geoms = conv_geometry(img_size, L)
    cin_p0 = _round_up(input_channels, SUB)
    latp2 = _round_up(2 * latent_dim, LANE)

    packed = {"conv_w": [], "conv_b": [], "sel": []}

    # conv OIHW -> single deep-K tap-concatenated matrices (9*Cin_p, 128)
    cin = input_channels
    for l, ((w_oihw, bias), hdim) in enumerate(zip(raw["convs"], hidden_dims)):
        cin_p = cin_p0 if l == 0 else LANE          # 128-padded activations between layers
        w9 = jnp.transpose(w_oihw, (2, 3, 1, 0)).reshape(9, cin, hdim)   # (kh*3+kw, Cin, Cout)
        w9 = jnp.pad(w9, ((0, 0), (0, cin_p - cin), (0, LANE - hdim)))
        packed["conv_w"].append(w9.reshape(9 * cin_p, LANE).astype(jnp.bfloat16))
        packed["conv_b"].append(
            jnp.pad(bias, (0, LANE - hdim)).reshape(1, LANE).astype(jnp.float32))
        cin = hdim

    # 0/1 selection matrices: previous layer's row-flattened output ->
    # stacked, zero-padded stride-2 phases of this layer's 1-padded input.
    # They also zero out the previous layer's junk column (never selected).
    for l in range(1, L):
        gp, g = geoms[l - 1], geoms[l]
        S = np.zeros((4 * g['hop'] * g['wop'], gp['m_rows']), np.float32)
        for ph in range(2):
            for pw in range(2):
                for a in range(g['hop']):
                    for b in range(g['wop']):
                        i, j = 2 * a + ph - 1, 2 * b + pw - 1
                        if 0 <= i < gp['ho'] and 0 <= j < gp['wo']:
                            r = (ph * 2 + pw) * g['hop'] * g['wop'] + a * g['wop'] + b
                            S[r, i * gp['wop'] + j] = 1.0
        packed["sel"].append(jnp.asarray(S, jnp.bfloat16))

    # fc_mu / fc_logvar fused and folded onto the kernel's (spatial-row, channel)
    # layout, reproducing torch.flatten(NCHW, start_dim=1) ordering.  Junk-column
    # rows and padded channels get zero weights.
    gl = geoms[-1]
    s = gl['ho']
    cl = hidden_dims[-1]
    mu_w = np.asarray(raw["fc_mu_w"])
    lv_w = np.asarray(raw["fc_logvar_w"])
    wf = np.zeros((gl['m_rows'], LANE, latp2), np.float32)
    for i in range(s):
        for j in range(s):
            m = i * gl['wop'] + j
            for c in range(cl):
                feat = c * s * s + i * s + j
                wf[m, c, :latent_dim] = mu_w[:, feat]
                wf[m, c, latent_dim:2 * latent_dim] = lv_w[:, feat]
    packed["fc_w"] = jnp.asarray(wf, jnp.bfloat16)

    fcb = np.zeros((1, latp2), np.float32)
    fcb[0, :latent_dim] = np.asarray(raw["fc_mu_b"])
    fcb[0, latent_dim:2 * latent_dim] = np.asarray(raw["fc_logvar_b"])
    packed["fc_b"] = jnp.asarray(fcb)
    return packed


# --------------------------------------------------------------------------- #
# Fully fused encoder kernel: grid=(batch,), one grid step = one image through
# every conv layer + the FC head, entirely in VMEM.
# --------------------------------------------------------------------------- #
def make_encoder_forward(input_channels, hidden_dims, img_size, latent_dim):
    L = len(hidden_dims)
    geoms = conv_geometry(img_size, L)
    cin_p0 = _round_up(input_channels, SUB)
    latp2 = _round_up(2 * latent_dim, LANE)
    k0 = 9 * cin_p0
    m0 = geoms[0]['m_rows']
    m_last = geoms[-1]['m_rows']
    offsets = [tap_offsets(g['hop'], g['wop']) for g in geoms]

    def kernel(*refs):
        # ---- unpack refs: inputs..., output, scratch... ----
        it = iter(refs)
        a0_ref = next(it)
        w_refs, b_refs, s_refs = [next(it)], [next(it)], [None]
        for _ in range(1, L):
            s_refs.append(next(it)); w_refs.append(next(it)); b_refs.append(next(it))
        wfc_ref, fcb_ref, o_ref = next(it), next(it), next(it)
        scratch = list(it)                      # [p1, a1, p2, a2, ..., ylast]

        # ---- conv layer 0: one deep-K MXU matmul on the prebuilt im2col ----
        y = jnp.dot(a0_ref[...], w_refs[0][...], preferred_element_type=jnp.float32)
        y = jnp.maximum(y + b_refs[0][...], 0.0).astype(jnp.bfloat16)   # (m0, 128)

        # ---- conv layers 1..L-1: all in VMEM, no HBM round-trips ----
        for l in range(1, L):
            g = geoms[l]
            p_scr, a_scr = scratch[2 * (l - 1)], scratch[2 * (l - 1) + 1]
            # stride-2 phase gather + zero padding (and junk-column masking)
            # via a 0/1 selection matmul on the MXU.
            p_scr[...] = jnp.dot(s_refs[l][...], y,
                                 preferred_element_type=jnp.float32).astype(jnp.bfloat16)
            # assemble the 9-tap im2col operand ONCE per step into VMEM
            # (lane-aligned 128-wide blocks; amortizes the misaligned row gathers).
            for t, off in enumerate(offsets[l]):
                a_scr[:, t * LANE:(t + 1) * LANE] = p_scr[pl.ds(off, g['m_rows']), :]
            # single deep-K (9*128) matmul + fused bias + ReLU (f32 epilogue)
            y = jnp.dot(a_scr[...], w_refs[l][...], preferred_element_type=jnp.float32)
            y = jnp.maximum(y + b_refs[l][...], 0.0).astype(jnp.bfloat16)

        # ---- fused fc_mu / fc_logvar head (weights folded at pack time) ----
        ylast = scratch[-1]
        ylast[...] = y                                    # (m_last, 128) bf16
        acc = fcb_ref[...]                                # (1, latp2) f32
        for m in range(m_last):                           # tiny static trip count
            acc = acc + jnp.dot(ylast[pl.ds(m, 1), :], wfc_ref[m],
                                preferred_element_type=jnp.float32)
        o_ref[...] = acc

    def build_specs():
        in_specs = [pl.BlockSpec((None, m0, k0), lambda i: (i, 0, 0)),
                    pl.BlockSpec((k0, LANE), lambda i: (0, 0)),
                    pl.BlockSpec((1, LANE), lambda i: (0, 0))]
        for l in range(1, L):
            g, gp = geoms[l], geoms[l - 1]
            in_specs += [
                pl.BlockSpec((4 * g['hop'] * g['wop'], gp['m_rows']), lambda i: (0, 0)),
                pl.BlockSpec((9 * LANE, LANE), lambda i: (0, 0)),
                pl.BlockSpec((1, LANE), lambda i: (0, 0))]
        in_specs += [pl.BlockSpec((m_last, LANE, latp2), lambda i: (0, 0, 0)),
                     pl.BlockSpec((1, latp2), lambda i: (0, 0))]
        out_spec = pl.BlockSpec((None, 1, latp2), lambda i: (i, 0, 0))
        scratch = []
        for l in range(1, L):
            g = geoms[l]
            scratch += [pltpu.VMEM((4 * g['hop'] * g['wop'], LANE), jnp.bfloat16),
                        pltpu.VMEM((g['m_rows'], 9 * LANE), jnp.bfloat16)]
        scratch.append(pltpu.VMEM((m_last, LANE), jnp.bfloat16))
        return in_specs, out_spec, scratch

    @jax.jit
    def forward(x_nchw, packed):
        n = x_nchw.shape[0]
        a0 = build_a0(x_nchw, cin_p0, geoms[0])           # tiny, input only

        args = [a0, packed["conv_w"][0], packed["conv_b"][0]]
        for l in range(1, L):
            args += [packed["sel"][l - 1], packed["conv_w"][l], packed["conv_b"][l]]
        args += [packed["fc_w"], packed["fc_b"]]

        in_specs, out_spec, scratch = build_specs()
        out = pl.pallas_call(
            kernel,
            out_shape=jax.ShapeDtypeStruct((n, 1, latp2), jnp.float32),
            grid=(n,),
            in_specs=in_specs,
            out_specs=out_spec,
            scratch_shapes=scratch,
            compiler_params=pltpu.CompilerParams(
                dimension_semantics=("parallel",),        # batch -> both TCs on v7x
                vmem_limit_bytes=32 * 1024 * 1024),
        )(*args)
        out = out.reshape(n, latp2)
        return out[:, :latent_dim], out[:, latent_dim:2 * latent_dim]

    return forward


# --------------------------------------------------------------------------- #
# Pure-JAX reference (same bf16 quantization points) for correctness checking.
# --------------------------------------------------------------------------- #
def reference_forward(x_nchw, raw):
    def q(a):
        return a.astype(jnp.bfloat16).astype(jnp.float32)

    x = q(x_nchw)
    for (w, b) in raw["convs"]:
        x = lax.conv_general_dilated(x, q(w), window_strides=(2, 2),
                                     padding=((1, 1), (1, 1)),
                                     dimension_numbers=("NCHW", "OIHW", "NCHW"))
        x = q(jnp.maximum(x + b.reshape(1, -1, 1, 1), 0.0))
    flat = x.reshape(x.shape[0], -1)
    mu = flat @ q(raw["fc_mu_w"]).T + raw["fc_mu_b"]
    logvar = flat @ q(raw["fc_logvar_w"]).T + raw["fc_logvar_b"]
    return mu, logvar


if __name__ == "__main__":
    batch = 2
    input_channels = 4
    hidden_dims = [8, 16, 32]
    img_size = 16
    latent_dim = 8

    key = jax.random.PRNGKey(0)
    k_x, k_p = jax.random.split(key)
    x = jax.random.normal(k_x, (batch, input_channels, img_size, img_size), jnp.float32)

    raw = init_raw_params(k_p, input_channels, hidden_dims, img_size, latent_dim)
    packed = pack_params(raw, input_channels, hidden_dims, img_size, latent_dim)
    forward = make_encoder_forward(input_channels, hidden_dims, img_size, latent_dim)

    mu, logvar = forward(x, packed)
    jax.block_until_ready((mu, logvar))

    assert mu.shape == (batch, latent_dim) and logvar.shape == (batch, latent_dim)
    assert bool(jnp.all(jnp.isfinite(mu))) and bool(jnp.all(jnp.isfinite(logvar)))

    mu_ref, lv_ref = reference_forward(x, raw)
    assert bool(jnp.allclose(mu, mu_ref, rtol=2e-2, atol=1e-4)), \
        f"mu mismatch, max abs diff {float(jnp.max(jnp.abs(mu - mu_ref)))}"
    assert bool(jnp.allclose(logvar, lv_ref, rtol=2e-2, atol=1e-4)), \
        f"logvar mismatch, max abs diff {float(jnp.max(jnp.abs(logvar - lv_ref)))}"

    print("KERNEL_OK")
</pallas_src>

<mosaic_0001>
module attributes {stable_mosaic.version = 11 : i64} {
  func.func @kernel(%arg0: i32, %arg1: memref<1x72x72xbf16, #tpu.memory_space<vmem>>, %arg2: memref<72x128xbf16, #tpu.memory_space<vmem>>, %arg3: memref<1x128xf32, #tpu.memory_space<vmem>>, %arg4: memref<100x72xbf16, #tpu.memory_space<vmem>>, %arg5: memref<1152x128xbf16, #tpu.memory_space<vmem>>, %arg6: memref<1x128xf32, #tpu.memory_space<vmem>>, %arg7: memref<36x20xbf16, #tpu.memory_space<vmem>>, %arg8: memref<1152x128xbf16, #tpu.memory_space<vmem>>, %arg9: memref<1x128xf32, #tpu.memory_space<vmem>>, %arg10: memref<6x128x128xbf16, #tpu.memory_space<vmem>>, %arg11: memref<1x128xf32, #tpu.memory_space<vmem>>, %arg12: memref<1x1x128xf32, #tpu.memory_space<vmem>>, %arg13: memref<100x128xbf16, #tpu.memory_space<vmem>>, %arg14: memref<20x1152xbf16, #tpu.memory_space<vmem>>, %arg15: memref<36x128xbf16, #tpu.memory_space<vmem>>, %arg16: memref<6x1152xbf16, #tpu.memory_space<vmem>>, %arg17: memref<6x128xbf16, #tpu.memory_space<vmem>>) attributes {dimension_semantics = [#tpu.dimension_semantics<parallel>], iteration_bounds = array<i64: 2>, scalar_prefetch = 0 : i64, scratch_operands = 5 : i64, tpu.core_type = #tpu.core_type<tc>, window_params = [{transform_indices = @transform_0, window_bounds = array<i64: 1, 72, 72>}, {pipeline_mode = #tpu.pipeline_mode<synchronous>, transform_indices = @transform_1, window_bounds = array<i64: 72, 128>}, {pipeline_mode = #tpu.pipeline_mode<synchronous>, transform_indices = @transform_2, window_bounds = array<i64: 1, 128>}, {pipeline_mode = #tpu.pipeline_mode<synchronous>, transform_indices = @transform_3, window_bounds = array<i64: 100, 72>}, {pipeline_mode = #tpu.pipeline_mode<synchronous>, transform_indices = @transform_4, window_bounds = array<i64: 1152, 128>}, {pipeline_mode = #tpu.pipeline_mode<synchronous>, transform_indices = @transform_5, window_bounds = array<i64: 1, 128>}, {pipeline_mode = #tpu.pipeline_mode<synchronous>, transform_indices = @transform_6, window_bounds = array<i64: 36, 20>}, {pipeline_mode = #tpu.pipeline_mode<synchronous>, transform_indices = @transform_7, window_bounds = array<i64: 1152, 128>}, {pipeline_mode = #tpu.pipeline_mode<synchronous>, transform_indices = @transform_8, window_bounds = array<i64: 1, 128>}, {pipeline_mode = #tpu.pipeline_mode<synchronous>, transform_indices = @transform_9, window_bounds = array<i64: 6, 128, 128>}, {pipeline_mode = #tpu.pipeline_mode<synchronous>, transform_indices = @transform_10, window_bounds = array<i64: 1, 128>}, {transform_indices = @transform_11, window_bounds = array<i64: 1, 1, 128>}]} {
    %c0 = arith.constant 0 : index
    %c0_0 = arith.constant 0 : index
    %c0_1 = arith.constant 0 : index
    %0 = vector.load %arg1[%c0, %c0_0, %c0_1] : memref<1x72x72xbf16, #tpu.memory_space<vmem>>, vector<1x72x72xbf16>
    %1 = vector.shape_cast %0 : vector<1x72x72xbf16> to vector<72x72xbf16>
    %c0_2 = arith.constant 0 : index
    %c0_3 = arith.constant 0 : index
    %2 = vector.load %arg2[%c0_2, %c0_3] : memref<72x128xbf16, #tpu.memory_space<vmem>>, vector<72x128xbf16>
    %cst = arith.constant dense<0.000000e+00> : vector<72x128xf32>
    %3 = tpu.matmul %1, %2, %cst {dimension_numbers = #tpu.dot_dimension_numbers<[1], [0], [0], [1], [0, 0, 1, 1], [], []>} : vector<72x72xbf16>, vector<72x128xbf16>, vector<72x128xf32> -> vector<72x128xf32>
    %c0_4 = arith.constant 0 : index
    %c0_5 = arith.constant 0 : index
    %4 = vector.load %arg3[%c0_4, %c0_5] : memref<1x128xf32, #tpu.memory_space<vmem>>, vector<1x128xf32>
    %5 = vector.broadcast %4 : vector<1x128xf32> to vector<72x128xf32>
    %6 = arith.addf %3, %5 : vector<72x128xf32>
    %cst_6 = arith.constant 0.000000e+00 : f32
    %7 = vector.broadcast %cst_6 : f32 to vector<72x128xf32>
    %8 = arith.maximumf %6, %7 : vector<72x128xf32>
    %9 = arith.truncf %8 : vector<72x128xf32> to vector<72x128xbf16>
    %c0_7 = arith.constant 0 : index
    %c0_8 = arith.constant 0 : index
    %10 = vector.load %arg4[%c0_7, %c0_8] : memref<100x72xbf16, #tpu.memory_space<vmem>>, vector<100x72xbf16>
    %cst_9 = arith.constant dense<0.000000e+00> : vector<100x128xf32>
    %11 = tpu.matmul %10, %9, %cst_9 {dimension_numbers = #tpu.dot_dimension_numbers<[1], [0], [0], [1], [0, 0, 1, 1], [], []>} : vector<100x72xbf16>, vector<72x128xbf16>, vector<100x128xf32> -> vector<100x128xf32>
    %12 = arith.truncf %11 : vector<100x128xf32> to vector<100x128xbf16>
    %c0_10 = arith.constant 0 : index
    %c0_11 = arith.constant 0 : index
    %13 = vector.load %arg13[%c0_10, %c0_11] : memref<100x128xbf16, #tpu.memory_space<vmem>>, vector<100x128xbf16>
    tpu.vector_store %arg13[%c0_10, %c0_11], %12 {strides = array<i32>} : memref<100x128xbf16, #tpu.memory_space<vmem>>, vector<100x128xbf16>,
    %c0_12 = arith.constant 0 : index
    %c0_13 = arith.constant 0 : index
    %14 = vector.load %arg13[%c0_12, %c0_13] : memref<100x128xbf16, #tpu.memory_space<vmem>>, vector<20x128xbf16>
    %c0_14 = arith.constant 0 : index
    %c0_15 = arith.constant 0 : index
    %15 = vector.load %arg14[%c0_14, %c0_15] : memref<20x1152xbf16, #tpu.memory_space<vmem>>, vector<20x128xbf16>
    tpu.vector_store %arg14[%c0_14, %c0_15], %14 {strides = array<i32>} : memref<20x1152xbf16, #tpu.memory_space<vmem>>, vector<20x128xbf16>,
    %c25 = arith.constant 25 : index
    %c0_16 = arith.constant 0 : index
    %16 = vector.load %arg13[%c25, %c0_16] : memref<100x128xbf16, #tpu.memory_space<vmem>>, vector<20x128xbf16>
    %c0_17 = arith.constant 0 : index
    %c128 = arith.constant 128 : index
    %17 = vector.load %arg14[%c0_17, %c128] : memref<20x1152xbf16, #tpu.memory_space<vmem>>, vector<20x128xbf16>
    tpu.vector_store %arg14[%c0_17, %c128], %16 {strides = array<i32>} : memref<20x1152xbf16, #tpu.memory_space<vmem>>, vector<20x128xbf16>,
    %c1 = arith.constant 1 : index
    %c0_18 = arith.constant 0 : index
    %18 = vector.load %arg13[%c1, %c0_18] : memref<100x128xbf16, #tpu.memory_space<vmem>>, vector<20x128xbf16>
    %c0_19 = arith.constant 0 : index
    %c256 = arith.constant 256 : index
    %19 = vector.load %arg14[%c0_19, %c256] : memref<20x1152xbf16, #tpu.memory_space<vmem>>, vector<20x128xbf16>
    tpu.vector_store %arg14[%c0_19, %c256], %18 {strides = array<i32>} : memref<20x1152xbf16, #tpu.memory_space<vmem>>, vector<20x128xbf16>,
    %c50 = arith.constant 50 : index
    %c0_20 = arith.constant 0 : index
    %20 = vector.load %arg13[%c50, %c0_20] : memref<100x128xbf16, #tpu.memory_space<vmem>>, vector<20x128xbf16>
    %c0_21 = arith.constant 0 : index
    %c384 = arith.constant 384 : index
    %21 = vector.load %arg14[%c0_21, %c384] : memref<20x1152xbf16, #tpu.memory_space<vmem>>, vector<20x128xbf16>
    tpu.vector_store %arg14[%c0_21, %c384], %20 {strides = array<i32>} : memref<20x1152xbf16, #tpu.memory_space<vmem>>, vector<20x128xbf16>,
    %c75 = arith.constant 75 : index
    %c0_22 = arith.constant 0 : index
    %22 = vector.load %arg13[%c75, %c0_22] : memref<100x128xbf16, #tpu.memory_space<vmem>>, vector<20x128xbf16>
    %c0_23 = arith.constant 0 : index
    %c512 = arith.constant 512 : index
    %23 = vector.load %arg14[%c0_23, %c512] : memref<20x1152xbf16, #tpu.memory_space<vmem>>, vector<20x128xbf16>
    tpu.vector_store %arg14[%c0_23, %c512], %22 {strides = array<i32>} : memref<20x1152xbf16, #tpu.memory_space<vmem>>, vector<20x128xbf16>,
    %c51 = arith.constant 51 : index
    %c0_24 = arith.constant 0 : index
    %24 = vector.load %arg13[%c51, %c0_24] : memref<100x128xbf16, #tpu.memory_space<vmem>>, vector<20x128xbf16>
    %c0_25 = arith.constant 0 : index
    %c640 = arith.constant 640 : index
    %25 = vector.load %arg14[%c0_25, %c640] : memref<20x1152xbf16, #tpu.memory_space<vmem>>, vector<20x128xbf16>
    tpu.vector_store %arg14[%c0_25, %c640], %24 {strides = array<i32>} : memref<20x1152xbf16, #tpu.memory_space<vmem>>, vector<20x128xbf16>,
    %c5 = arith.constant 5 : index
    %c0_26 = arith.constant 0 : index
    %26 = vector.load %arg13[%c5, %c0_26] : memref<100x128xbf16, #tpu.memory_space<vmem>>, vector<20x128xbf16>
    %c0_27 = arith.constant 0 : index
    %c768 = arith.constant 768 : index
    %27 = vector.load %arg14[%c0_27, %c768] : memref<20x1152xbf16, #tpu.memory_space<vmem>>, vector<20x128xbf16>
    tpu.vector_store %arg14[%c0_27, %c768], %26 {strides = array<i32>} : memref<20x1152xbf16, #tpu.memory_space<vmem>>, vector<20x128xbf16>,
    %c30 = arith.constant 30 : index
    %c0_28 = arith.constant 0 : index
    %28 = vector.load %arg13[%c30, %c0_28] : memref<100x128xbf16, #tpu.memory_space<vmem>>, vector<20x128xbf16>
    %c0_29 = arith.constant 0 : index
    %c896 = arith.constant 896 : index
    %29 = vector.load %arg14[%c0_29, %c896] : memref<20x1152xbf16, #tpu.memory_space<vmem>>, vector<20x128xbf16>
    tpu.vector_store %arg14[%c0_29, %c896], %28 {strides = array<i32>} : memref<20x1152xbf16, #tpu.memory_space<vmem>>, vector<20x128xbf16>,
    %c6 = arith.constant 6 : index
    %c0_30 = arith.constant 0 : index
    %30 = vector.load %arg13[%c6, %c0_30] : memref<100x128xbf16, #tpu.memory_space<vmem>>, vector<20x128xbf16>
    %c0_31 = arith.constant 0 : index
    %c1024 = arith.constant 1024 : index
    %31 = vector.load %arg14[%c0_31, %c1024] : memref<20x1152xbf16, #tpu.memory_space<vmem>>, vector<20x128xbf16>
    tpu.vector_store %arg14[%c0_31, %c1024], %30 {strides = array<i32>} : memref<20x1152xbf16, #tpu.memory_space<vmem>>, vector<20x128xbf16>,
    %c0_32 = arith.constant 0 : index
    %c0_33 = arith.constant 0 : index
    %32 = vector.load %arg14[%c0_32, %c0_33] : memref<20x1152xbf16, #tpu.memory_space<vmem>>, vector<20x1152xbf16>
    %c0_34 = arith.constant 0 : index
    %c0_35 = arith.constant 0 : index
    %33 = vector.load %arg5[%c0_34, %c0_35] : memref<1152x128xbf16, #tpu.memory_space<vmem>>, vector<1152x128xbf16>
    %cst_36 = arith.constant dense<0.000000e+00> : vector<20x128xf32>
    %34 = tpu.matmul %32, %33, %cst_36 {dimension_numbers = #tpu.dot_dimension_numbers<[1], [0], [0], [1], [0, 0, 1, 1], [], []>} : vector<20x1152xbf16>, vector<1152x128xbf16>, vector<20x128xf32> -> vector<20x128xf32>
    %c0_37 = arith.constant 0 : index
    %c0_38 = arith.constant 0 : index
    %35 = vector.load %arg6[%c0_37, %c0_38] : memref<1x128xf32, #tpu.memory_space<vmem>>, vector<1x128xf32>
    %36 = vector.broadcast %35 : vector<1x128xf32> to vector<20x128xf32>
    %37 = arith.addf %34, %36 : vector<20x128xf32>
    %cst_39 = arith.constant 0.000000e+00 : f32
    %38 = vector.broadcast %cst_39 : f32 to vector<20x128xf32>
    %39 = arith.maximumf %37, %38 : vector<20x128xf32>
    %40 = arith.truncf %39 : vector<20x128xf32> to vector<20x128xbf16>
    %c0_40 = arith.constant 0 : index
    %c0_41 = arith.constant 0 : index
    %41 = vector.load %arg7[%c0_40, %c0_41] : memref<36x20xbf16, #tpu.memory_space<vmem>>, vector<36x20xbf16>
    %cst_42 = arith.constant dense<0.000000e+00> : vector<36x128xf32>
    %42 = tpu.matmul %41, %40, %cst_42 {dimension_numbers = #tpu.dot_dimension_numbers<[1], [0], [0], [1], [0, 0, 1, 1], [], []>} : vector<36x20xbf16>, vector<20x128xbf16>, vector<36x128xf32> -> vector<36x128xf32>
    %43 = arith.truncf %42 : vector<36x128xf32> to vector<36x128xbf16>
    %c0_43 = arith.constant 0 : index
    %c0_44 = arith.constant 0 : index
    %44 = vector.load %arg15[%c0_43, %c0_44] : memref<36x128xbf16, #tpu.memory_space<vmem>>, vector<36x128xbf16>
    tpu.vector_store %arg15[%c0_43, %c0_44], %43 {strides = array<i32>} : memref<36x128xbf16, #tpu.memory_space<vmem>>, vector<36x128xbf16>,
    %c0_45 = arith.constant 0 : index
    %c0_46 = arith.constant 0 : index
    %45 = vector.load %arg15[%c0_45, %c0_46] : memref<36x128xbf16, #tpu.memory_space<vmem>>, vector<6x128xbf16>
    %c0_47 = arith.constant 0 : index
    %c0_48 = arith.constant 0 : index
    %46 = vector.load %arg16[%c0_47, %c0_48] : memref<6x1152xbf16, #tpu.memory_space<vmem>>, vector<6x128xbf16>
    tpu.vector_store %arg16[%c0_47, %c0_48], %45 {strides = array<i32>} : memref<6x1152xbf16, #tpu.memory_space<vmem>>, vector<6x128xbf16>,
    %c9 = arith.constant 9 : index
    %c0_49 = arith.constant 0 : index
    %47 = vector.load %arg15[%c9, %c0_49] : memref<36x128xbf16, #tpu.memory_space<vmem>>, vector<6x128xbf16>
    %c0_50 = arith.constant 0 : index
    %c128_51 = arith.constant 128 : index
    %48 = vector.load %arg16[%c0_50, %c128_51] : memref<6x1152xbf16, #tpu.memory_space<vmem>>, vector<6x128xbf16>
    tpu.vector_store %arg16[%c0_50, %c128_51], %47 {strides = array<i32>} : memref<6x1152xbf16, #tpu.memory_space<vmem>>, vector<6x128xbf16>,
    %c1_52 = arith.constant 1 : index
    %c0_53 = arith.constant 0 : index
    %49 = vector.load %arg15[%c1_52, %c0_53] : memref<36x128xbf16, #tpu.memory_space<vmem>>, vector<6x128xbf16>
    %c0_54 = arith.constant 0 : index
    %c256_55 = arith.constant 256 : index
    %50 = vector.load %arg16[%c0_54, %c256_55] : memref<6x1152xbf16, #tpu.memory_space<vmem>>, vector<6x128xbf16>
    tpu.vector_store %arg16[%c0_54, %c256_55], %49 {strides = array<i32>} : memref<6x1152xbf16, #tpu.memory_space<vmem>>, vector<6x128xbf16>,
    %c18 = arith.constant 18 : index
    %c0_56 = arith.constant 0 : index
    %51 = vector.load %arg15[%c18, %c0_56] : memref<36x128xbf16, #tpu.memory_space<vmem>>, vector<6x128xbf16>
    %c0_57 = arith.constant 0 : index
    %c384_58 = arith.constant 384 : index
    %52 = vector.load %arg16[%c0_57, %c384_58] : memref<6x1152xbf16, #tpu.memory_space<vmem>>, vector<6x128xbf16>
    tpu.vector_store %arg16[%c0_57, %c384_58], %51 {strides = array<i32>} : memref<6x1152xbf16, #tpu.memory_space<vmem>>, vector<6x128xbf16>,
    %c27 = arith.constant 27 : index
    %c0_59 = arith.constant 0 : index
    %53 = vector.load %arg15[%c27, %c0_59] : memref<36x128xbf16, #tpu.memory_space<vmem>>, vector<6x128xbf16>
    %c0_60 = arith.constant 0 : index
    %c512_61 = arith.constant 512 : index
    %54 = vector.load %arg16[%c0_60, %c512_61] : memref<6x1152xbf16, #tpu.memory_space<vmem>>, vector<6x128xbf16>
    tpu.vector_store %arg16[%c0_60, %c512_61], %53 {strides = array<i32>} : memref<6x1152xbf16, #tpu.memory_space<vmem>>, vector<6x128xbf16>,
    %c19 = arith.constant 19 : index
    %c0_62 = arith.constant 0 : index
    %55 = vector.load %arg15[%c19, %c0_62] : memref<36x128xbf16, #tpu.memory_space<vmem>>, vector<6x128xbf16>
    %c0_63 = arith.constant 0 : index
    %c640_64 = arith.constant 640 : index
    %56 = vector.load %arg16[%c0_63, %c640_64] : memref<6x1152xbf16, #tpu.memory_space<vmem>>, vector<6x128xbf16>
    tpu.vector_store %arg16[%c0_63, %c640_64], %55 {strides = array<i32>} : memref<6x1152xbf16, #tpu.memory_space<vmem>>, vector<6x128xbf16>,
    %c3 = arith.constant 3 : index
    %c0_65 = arith.constant 0 : index
    %57 = vector.load %arg15[%c3, %c0_65] : memref<36x128xbf16, #tpu.memory_space<vmem>>, vector<6x128xbf16>
    %c0_66 = arith.constant 0 : index
    %c768_67 = arith.constant 768 : index
    %58 = vector.load %arg16[%c0_66, %c768_67] : memref<6x1152xbf16, #tpu.memory_space<vmem>>, vector<6x128xbf16>
    tpu.vector_store %arg16[%c0_66, %c768_67], %57 {strides = array<i32>} : memref<6x1152xbf16, #tpu.memory_space<vmem>>, vector<6x128xbf16>,
    %c12 = arith.constant 12 : index
    %c0_68 = arith.constant 0 : index
    %59 = vector.load %arg15[%c12, %c0_68] : memref<36x128xbf16, #tpu.memory_space<vmem>>, vector<6x128xbf16>
    %c0_69 = arith.constant 0 : index
    %c896_70 = arith.constant 896 : index
    %60 = vector.load %arg16[%c0_69, %c896_70] : memref<6x1152xbf16, #tpu.memory_space<vmem>>, vector<6x128xbf16>
    tpu.vector_store %arg16[%c0_69, %c896_70], %59 {strides = array<i32>} : memref<6x1152xbf16, #tpu.memory_space<vmem>>, vector<6x128xbf16>,
    %c4 = arith.constant 4 : index
    %c0_71 = arith.constant 0 : index
    %61 = vector.load %arg15[%c4, %c0_71] : memref<36x128xbf16, #tpu.memory_space<vmem>>, vector<6x128xbf16>
    %c0_72 = arith.constant 0 : index
    %c1024_73 = arith.constant 1024 : index
    %62 = vector.load %arg16[%c0_72, %c1024_73] : memref<6x1152xbf16, #tpu.memory_space<vmem>>, vector<6x128xbf16>
    tpu.vector_store %arg16[%c0_72, %c1024_73], %61 {strides = array<i32>} : memref<6x1152xbf16, #tpu.memory_space<vmem>>, vector<6x128xbf16>,
    %c0_74 = arith.constant 0 : index
    %c0_75 = arith.constant 0 : index
    %63 = vector.load %arg16[%c0_74, %c0_75] : memref<6x1152xbf16, #tpu.memory_space<vmem>>, vector<6x1152xbf16>
    %c0_76 = arith.constant 0 : index
    %c0_77 = arith.constant 0 : index
    %64 = vector.load %arg8[%c0_76, %c0_77] : memref<1152x128xbf16, #tpu.memory_space<vmem>>, vector<1152x128xbf16>
    %cst_78 = arith.constant dense<0.000000e+00> : vector<6x128xf32>
    %65 = tpu.matmul %63, %64, %cst_78 {dimension_numbers = #tpu.dot_dimension_numbers<[1], [0], [0], [1], [0, 0, 1, 1], [], []>} : vector<6x1152xbf16>, vector<1152x128xbf16>, vector<6x128xf32> -> vector<6x128xf32>
    %c0_79 = arith.constant 0 : index
    %c0_80 = arith.constant 0 : index
    %66 = vector.load %arg9[%c0_79, %c0_80] : memref<1x128xf32, #tpu.memory_space<vmem>>, vector<1x128xf32>
    %67 = vector.broadcast %66 : vector<1x128xf32> to vector<6x128xf32>
    %68 = arith.addf %65, %67 : vector<6x128xf32>
    %cst_81 = arith.constant 0.000000e+00 : f32
    %69 = vector.broadcast %cst_81 : f32 to vector<6x128xf32>
    %70 = arith.maximumf %68, %69 : vector<6x128xf32>
    %71 = arith.truncf %70 : vector<6x128xf32> to vector<6x128xbf16>
    %c0_82 = arith.constant 0 : index
    %c0_83 = arith.constant 0 : index
    %72 = vector.load %arg17[%c0_82, %c0_83] : memref<6x128xbf16, #tpu.memory_space<vmem>>, vector<6x128xbf16>
    tpu.vector_store %arg17[%c0_82, %c0_83], %71 {strides = array<i32>} : memref<6x128xbf16, #tpu.memory_space<vmem>>, vector<6x128xbf16>,
    %c0_84 = arith.constant 0 : index
    %c0_85 = arith.constant 0 : index
    %73 = vector.load %arg11[%c0_84, %c0_85] : memref<1x128xf32, #tpu.memory_space<vmem>>, vector<1x128xf32>
    %c0_86 = arith.constant 0 : index
    %c0_87 = arith.constant 0 : index
    %74 = vector.load %arg17[%c0_86, %c0_87] : memref<6x128xbf16, #tpu.memory_space<vmem>>, vector<1x128xbf16>
    %c0_88 = arith.constant 0 : index
    %c0_89 = arith.constant 0 : index
    %c0_90 = arith.constant 0 : index
    %75 = vector.load %arg10[%c0_88, %c0_89, %c0_90] : memref<6x128x128xbf16, #tpu.memory_space<vmem>>, vector<1x128x128xbf16>
    %76 = vector.shape_cast %75 : vector<1x128x128xbf16> to vector<128x128xbf16>
    %cst_91 = arith.constant dense<0.000000e+00> : vector<1x128xf32>
    %77 = tpu.matmul %74, %76, %cst_91 {dimension_numbers = #tpu.dot_dimension_numbers<[1], [0], [0], [1], [0, 0, 1, 1], [], []>} : vector<1x128xbf16>, vector<128x128xbf16>, vector<1x128xf32> -> vector<1x128xf32>
    %78 = arith.addf %73, %77 : vector<1x128xf32>
    %c1_92 = arith.constant 1 : index
    %c0_93 = arith.constant 0 : index
    %79 = vector.load %arg17[%c1_92, %c0_93] : memref<6x128xbf16, #tpu.memory_space<vmem>>, vector<1x128xbf16>
    %c1_94 = arith.constant 1 : index
    %c0_95 = arith.constant 0 : index
    %c0_96 = arith.constant 0 : index
    %80 = vector.load %arg10[%c1_94, %c0_95, %c0_96] : memref<6x128x128xbf16, #tpu.memory_space<vmem>>, vector<1x128x128xbf16>
    %81 = vector.shape_cast %80 : vector<1x128x128xbf16> to vector<128x128xbf16>
    %cst_97 = arith.constant dense<0.000000e+00> : vector<1x128xf32>
    %82 = tpu.matmul %79, %81, %cst_97 {dimension_numbers = #tpu.dot_dimension_numbers<[1], [0], [0], [1], [0, 0, 1, 1], [], []>} : vector<1x128xbf16>, vector<128x128xbf16>, vector<1x128xf32> -> vector<1x128xf32>
    %83 = arith.addf %78, %82 : vector<1x128xf32>
    %c2 = arith.constant 2 : index
    %c0_98 = arith.constant 0 : index
    %84 = vector.load %arg17[%c2, %c0_98] : memref<6x128xbf16, #tpu.memory_space<vmem>>, vector<1x128xbf16>
    %c2_99 = arith.constant 2 : index
    %c0_100 = arith.constant 0 : index
    %c0_101 = arith.constant 0 : index
    %85 = vector.load %arg10[%c2_99, %c0_100, %c0_101] : memref<6x128x128xbf16, #tpu.memory_space<vmem>>, vector<1x128x128xbf16>
    %86 = vector.shape_cast %85 : vector<1x128x128xbf16> to vector<128x128xbf16>
    %cst_102 = arith.constant dense<0.000000e+00> : vector<1x128xf32>
    %87 = tpu.matmul %84, %86, %cst_102 {dimension_numbers = #tpu.dot_dimension_numbers<[1], [0], [0], [1], [0, 0, 1, 1], [], []>} : vector<1x128xbf16>, vector<128x128xbf16>, vector<1x128xf32> -> vector<1x128xf32>
    %88 = arith.addf %83, %87 : vector<1x128xf32>
    %c3_103 = arith.constant 3 : index
    %c0_104 = arith.constant 0 : index
    %89 = vector.load %arg17[%c3_103, %c0_104] : memref<6x128xbf16, #tpu.memory_space<vmem>>, vector<1x128xbf16>
    %c3_105 = arith.constant 3 : index
    %c0_106 = arith.constant 0 : index
    %c0_107 = arith.constant 0 : index
    %90 = vector.load %arg10[%c3_105, %c0_106, %c0_107] : memref<6x128x128xbf16, #tpu.memory_space<vmem>>, vector<1x128x128xbf16>
    %91 = vector.shape_cast %90 : vector<1x128x128xbf16> to vector<128x128xbf16>
    %cst_108 = arith.constant dense<0.000000e+00> : vector<1x128xf32>
    %92 = tpu.matmul %89, %91, %cst_108 {dimension_numbers = #tpu.dot_dimension_numbers<[1], [0], [0], [1], [0, 0, 1, 1], [], []>} : vector<1x128xbf16>, vector<128x128xbf16>, vector<1x128xf32> -> vector<1x128xf32>
    %93 = arith.addf %88, %92 : vector<1x128xf32>
    %c4_109 = arith.constant 4 : index
    %c0_110 = arith.constant 0 : index
    %94 = vector.load %arg17[%c4_109, %c0_110] : memref<6x128xbf16, #tpu.memory_space<vmem>>, vector<1x128xbf16>
    %c4_111 = arith.constant 4 : index
    %c0_112 = arith.constant 0 : index
    %c0_113 = arith.constant 0 : index
    %95 = vector.load %arg10[%c4_111, %c0_112, %c0_113] : memref<6x128x128xbf16, #tpu.memory_space<vmem>>, vector<1x128x128xbf16>
    %96 = vector.shape_cast %95 : vector<1x128x128xbf16> to vector<128x128xbf16>
    %cst_114 = arith.constant dense<0.000000e+00> : vector<1x128xf32>
    %97 = tpu.matmul %94, %96, %cst_114 {dimension_numbers = #tpu.dot_dimension_numbers<[1], [0], [0], [1], [0, 0, 1, 1], [], []>} : vector<1x128xbf16>, vector<128x128xbf16>, vector<1x128xf32> -> vector<1x128xf32>
    %98 = arith.addf %93, %97 : vector<1x128xf32>
    %c5_115 = arith.constant 5 : index
    %c0_116 = arith.constant 0 : index
    %99 = vector.load %arg17[%c5_115, %c0_116] : memref<6x128xbf16, #tpu.memory_space<vmem>>, vector<1x128xbf16>
    %c5_117 = arith.constant 5 : index
    %c0_118 = arith.constant 0 : index
    %c0_119 = arith.constant 0 : index
    %100 = vector.load %arg10[%c5_117, %c0_118, %c0_119] : memref<6x128x128xbf16, #tpu.memory_space<vmem>>, vector<1x128x128xbf16>
    %101 = vector.shape_cast %100 : vector<1x128x128xbf16> to vector<128x128xbf16>
    %cst_120 = arith.constant dense<0.000000e+00> : vector<1x128xf32>
    %102 = tpu.matmul %99, %101, %cst_120 {dimension_numbers = #tpu.dot_dimension_numbers<[1], [0], [0], [1], [0, 0, 1, 1], [], []>} : vector<1x128xbf16>, vector<128x128xbf16>, vector<1x128xf32> -> vector<1x128xf32>
    %103 = arith.addf %98, %102 : vector<1x128xf32>
    %c0_121 = arith.constant 0 : index
    %c0_122 = arith.constant 0 : index
    %c0_123 = arith.constant 0 : index
    %104 = vector.load %arg12[%c0_121, %c0_122, %c0_123] : memref<1x1x128xf32, #tpu.memory_space<vmem>>, vector<1x1x128xf32>
    %105 = vector.shape_cast %104 : vector<1x1x128xf32> to vector<1x128xf32>
    %106 = vector.shape_cast %103 : vector<1x128xf32> to vector<1x1x128xf32>
    tpu.vector_store %arg12[%c0_121, %c0_122, %c0_123], %106 {strides = array<i32>} : memref<1x1x128xf32, #tpu.memory_space<vmem>>, vector<1x1x128xf32>,
    return
  }
  func.func @transform_0(%arg0: i32) -> (i32, i32, i32) {
    %c0_i32 = arith.constant 0 : i32
    %c0_i32_0 = arith.constant 0 : i32
    %c0_i32_1 = arith.constant 0 : i32
    return %arg0, %c0_i32, %c0_i32_0 : i32, i32, i32
  }
  func.func @transform_1(%arg0: i32) -> (i32, i32) {
    %c0_i32 = arith.constant 0 : i32
    %c0_i32_0 = arith.constant 0 : i32
    %c0_i32_1 = arith.constant 0 : i32
    return %c0_i32, %c0_i32_0 : i32, i32
  }
  func.func @transform_2(%arg0: i32) -> (i32, i32) {
    %c0_i32 = arith.constant 0 : i32
    %c0_i32_0 = arith.constant 0 : i32
    %c0_i32_1 = arith.constant 0 : i32
    return %c0_i32, %c0_i32_0 : i32, i32
  }
  func.func @transform_3(%arg0: i32) -> (i32, i32) {
    %c0_i32 = arith.constant 0 : i32
    %c0_i32_0 = arith.constant 0 : i32
    %c0_i32_1 = arith.constant 0 : i32
    return %c0_i32, %c0_i32_0 : i32, i32
  }
  func.func @transform_4(%arg0: i32) -> (i32, i32) {
    %c0_i32 = arith.constant 0 : i32
    %c0_i32_0 = arith.constant 0 : i32
    %c0_i32_1 = arith.constant 0 : i32
    return %c0_i32, %c0_i32_0 : i32, i32
  }
  func.func @transform_5(%arg0: i32) -> (i32, i32) {
    %c0_i32 = arith.constant 0 : i32
    %c0_i32_0 = arith.constant 0 : i32
    %c0_i32_1 = arith.constant 0 : i32
    return %c0_i32, %c0_i32_0 : i32, i32
  }
  func.func @transform_6(%arg0: i32) -> (i32, i32) {
    %c0_i32 = arith.constant 0 : i32
    %c0_i32_0 = arith.constant 0 : i32
    %c0_i32_1 = arith.constant 0 : i32
    return %c0_i32, %c0_i32_0 : i32, i32
  }
  func.func @transform_7(%arg0: i32) -> (i32, i32) {
    %c0_i32 = arith.constant 0 : i32
    %c0_i32_0 = arith.constant 0 : i32
    %c0_i32_1 = arith.constant 0 : i32
    return %c0_i32, %c0_i32_0 : i32, i32
  }
  func.func @transform_8(%arg0: i32) -> (i32, i32) {
    %c0_i32 = arith.constant 0 : i32
    %c0_i32_0 = arith.constant 0 : i32
    %c0_i32_1 = arith.constant 0 : i32
    return %c0_i32, %c0_i32_0 : i32, i32
  }
  func.func @transform_9(%arg0: i32) -> (i32, i32, i32) {
    %c0_i32 = arith.constant 0 : i32
    %c0_i32_0 = arith.constant 0 : i32
    %c0_i32_1 = arith.constant 0 : i32
    %c0_i32_2 = arith.constant 0 : i32
    return %c0_i32, %c0_i32_0, %c0_i32_1 : i32, i32, i32
  }
  func.func @transform_10(%arg0: i32) -> (i32, i32) {
    %c0_i32 = arith.constant 0 : i32
    %c0_i32_0 = arith.constant 0 : i32
    %c0_i32_1 = arith.constant 0 : i32
    return %c0_i32, %c0_i32_0 : i32, i32
  }
  func.func @transform_11(%arg0: i32) -> (i32, i32, i32) {
    %c0_i32 = arith.constant 0 : i32
    %c0_i32_0 = arith.constant 0 : i32
    %c0_i32_1 = arith.constant 0 : i32
    return %arg0, %c0_i32, %c0_i32_0 : i32, i32, i32
  }
}

</mosaic_0001>

<llo_original>
// kernel: forward.1
$region0: #{forward.1}
  #allocation0 [shape = 'u32[]', space=smem, size = 0x4, offset = 0x4, fixed_abs, tag = 'smem constant byte address 0x4 - core index']
  #allocation1 [shape = 'u32[144,128]{1,0:T(1,128)}', space=vmem, size = 0x12000, scoped, tag = 'internal scratch']
  #allocation2 [shape = 'bf16[100,128]{1,0:T(8,128)(2,1)}', space=vmem, size = 0x6800, scoped, tag = 'scratch operand']
  #allocation3 [shape = 'bf16[20,1152]{1,0:T(8,128)(2,1)}', space=vmem, size = 0xd800, scoped, tag = 'scratch operand']
  #allocation4 [shape = 'bf16[36,128]{1,0:T(8,128)(2,1)}', space=vmem, size = 0x2800, scoped, tag = 'scratch operand']
  #allocation5 [shape = 'bf16[6,1152]{1,0:T(8,128)(2,1)}', space=vmem, size = 0x4800, scoped, tag = 'scratch operand']
  #allocation6 [shape = 'bf16[6,128]{1,0:T(8,128)(2,1)}', space=vmem, size = 0x800, scoped, tag = 'scratch operand']
  %s0 = inlined_call_operand.vmem [shape: bf16[2,72,72], index: 0, kind: input, shape index: {}]
  %s1 = inlined_call_operand.vmem [shape: bf16[72,128], index: 1, kind: input, shape index: {}]
  %s2 = inlined_call_operand.vmem [shape: f32[1,128], index: 2, kind: input, shape index: {}]
  %s3 = inlined_call_operand.vmem [shape: bf16[100,72], index: 3, kind: input, shape index: {}]
  %s4 = inlined_call_operand.vmem [shape: bf16[1152,128], index: 4, kind: input, shape index: {}]
  %s5 = inlined_call_operand.vmem [shape: f32[1,128], index: 5, kind: input, shape index: {}]
  %s6 = inlined_call_operand.vmem [shape: bf16[36,20], index: 6, kind: input, shape index: {}]
  %s7 = inlined_call_operand.vmem [shape: bf16[1152,128], index: 7, kind: input, shape index: {}]
  %s8 = inlined_call_operand.vmem [shape: f32[1,128], index: 8, kind: input, shape index: {}]
  %s9 = inlined_call_operand.vmem [shape: bf16[6,128,128], index: 9, kind: input, shape index: {}]
  %s10 = inlined_call_operand.vmem [shape: f32[1,128], index: 10, kind: input, shape index: {}]
  %s11 = inlined_call_operand.vmem [shape: f32[2,1,128], index: 11, kind: output, shape index: {}]
  %s12 = sld [smem:[#allocation0]]
  $region77: #{forward.1} parent=0
    _
  %s14 = ssub.s32 1, %s12
  %s15 = scalar_select 0, %s14, %s12
  loop: start=0, step=1, limit=4
  $region2: #{forward.1} parent=0 // loop_pre_header
    _
  $region3: #{forward.1} parent=0 // loop_header
    %s17 = sphi 0, %s21
    %p18 = scmp.ge.s32.totalorder %s17, 4
    %s27 = sphi 0, %s29
    %s30 = sphi 0, %s27
    %s31 = sphi 0, %s30
    %s47 = sphi 0, %s31
    %s51 = sphi 0, %s51
    %s53 = sphi 0, %s51
    %s54 = sphi 0, %s53
    %s68 = sphi 0, %s54
    %s72 = sphi 0, %s72
    %s74 = sphi 0, %s72
    %s75 = sphi 0, %s74
    %s89 = sphi 0, %s75
    %s93 = sphi 0, %s93
    %s95 = sphi 0, %s93
    %s96 = sphi 0, %s95
    %s110 = sphi 0, %s96
    %s114 = sphi 0, %s114
    %s116 = sphi 0, %s114
    %s117 = sphi 0, %s116
    %s131 = sphi 0, %s117
    %s135 = sphi 0, %s135
    %s137 = sphi 0, %s135
    %s138 = sphi 0, %s137
    %s152 = sphi 0, %s138
    %s156 = sphi 0, %s156
    %s158 = sphi 0, %s156
    %s159 = sphi 0, %s158
    %s173 = sphi 0, %s159
    %s177 = sphi 0, %s177
    %s179 = sphi 0, %s177
    %s180 = sphi 0, %s179
    %s194 = sphi 0, %s180
    %s198 = sphi 0, %s198
    %s200 = sphi 0, %s198
    %s201 = sphi 0, %s200
    %s215 = sphi 0, %s201
    %s219 = sphi 0, %s219
    %s221 = sphi 0, %s219
    %s222 = sphi 0, %s221
    %s236 = sphi 0, %s222
    %s240 = sphi 0, %s240
    %s242 = sphi 0, %s240
    %s243 = sphi 0, %s242
    %s257 = sphi 0, %s243
    %s263 = sphi 0, %s265
    %s266 = sphi 0, %s263
    %s267 = sphi 0, %s266
    %s283 = sphi 0, %s267
  $region4: #{forward.1} parent=0 // loop_header_branch
    %20 = sbr.rel (%p18) target = $region8
  $region5: #{forward.1} parent=0 // loop_body
    %s22 = ssub.s32 %s17, 1
    %s23 = ssub.s32 %s17, 2
    %s24 = sadd.s32 %s17, 1
    %s25 = ssub.s32 %s17, %s24
    %p26 = scmp.eq.s32.totalorder %s25, 0
    %s28 = sadd.s32 %s27, 1
    %s29 = scalar_select %p26, %s27, %s28
    %p32 = pneg %p26
    %p33 = scmp.eq.s32.totalorder %s17, 1
    %p34 = por %p32, %p33
    %p35 = scmp.ne.s32.totalorder %s27, %s30
    %p36 = scmp.eq.s32.totalorder %s17, 0
    %p37 = por %p35, %p36
    %p38 = scmp.ne.s32.totalorder %s27, %s30
    %p39 = scmp.eq.s32.totalorder %s22, 1
    %p40 = por %p38, %p39
    %p41 = scmp.ne.s32.totalorder %s30, %s31
    %p42 = scmp.eq.s32.totalorder %s22, 0
    %p43 = por %p41, %p42
    %p44 = scmp.ne.s32.totalorder %s30, %s31
    %p45 = scmp.eq.s32.totalorder %s23, 1
    %p46 = por %p44, %p45
    %p48 = scmp.ne.s32.totalorder %s31, %s47
    %p49 = scmp.eq.s32.totalorder %s23, 0
    %p50 = por %p48, %p49
    %s52 = sadd.s32 %s51, 1
    %p55 = scmp.eq.s32.totalorder %s17, 1
    %p56 = scmp.ne.s32.totalorder %s51, %s53
    %p57 = scmp.eq.s32.totalorder %s17, 0
    %p58 = por %p56, %p57
    %p59 = scmp.ne.s32.totalorder %s51, %s53
    %p60 = scmp.eq.s32.totalorder %s22, 1
    %p61 = por %p59, %p60
    %p62 = scmp.ne.s32.totalorder %s53, %s54
    %p63 = scmp.eq.s32.totalorder %s22, 0
    %p64 = por %p62, %p63
    %p65 = scmp.ne.s32.totalorder %s53, %s54
    %p66 = scmp.eq.s32.totalorder %s23, 1
    %p67 = por %p65, %p66
    %p69 = scmp.ne.s32.totalorder %s54, %s68
    %p70 = scmp.eq.s32.totalorder %s23, 0
    %p71 = por %p69, %p70
    %s73 = sadd.s32 %s72, 1
    %p76 = scmp.eq.s32.totalorder %s17, 1
    %p77 = scmp.ne.s32.totalorder %s72, %s74
    %p78 = scmp.eq.s32.totalorder %s17, 0
    %p79 = por %p77, %p78
    %p80 = scmp.ne.s32.totalorder %s72, %s74
    %p81 = scmp.eq.s32.totalorder %s22, 1
    %p82 = por %p80, %p81
    %p83 = scmp.ne.s32.totalorder %s74, %s75
    %p84 = scmp.eq.s32.totalorder %s22, 0
    %p85 = por %p83, %p84
    %p86 = scmp.ne.s32.totalorder %s74, %s75
    %p87 = scmp.eq.s32.totalorder %s23, 1
    %p88 = por %p86, %p87
    %p90 = scmp.ne.s32.totalorder %s75, %s89
    %p91 = scmp.eq.s32.totalorder %s23, 0
    %p92 = por %p90, %p91
    %s94 = sadd.s32 %s93, 1
    %p97 = scmp.eq.s32.totalorder %s17, 1
    %p98 = scmp.ne.s32.totalorder %s93, %s95
    %p99 = scmp.eq.s32.totalorder %s17, 0
    %p100 = por %p98, %p99
    %p101 = scmp.ne.s32.totalorder %s93, %s95
    %p102 = scmp.eq.s32.totalorder %s22, 1
    %p103 = por %p101, %p102
    %p104 = scmp.ne.s32.totalorder %s95, %s96
    %p105 = scmp.eq.s32.totalorder %s22, 0
    %p106 = por %p104, %p105
    %p107 = scmp.ne.s32.totalorder %s95, %s96
    %p108 = scmp.eq.s32.totalorder %s23, 1
    %p109 = por %p107, %p108
    %p111 = scmp.ne.s32.totalorder %s96, %s110
    %p112 = scmp.eq.s32.totalorder %s23, 0
    %p113 = por %p111, %p112
    %s115 = sadd.s32 %s114, 1
    %p118 = scmp.eq.s32.totalorder %s17, 1
    %p119 = scmp.ne.s32.totalorder %s114, %s116
    %p120 = scmp.eq.s32.totalorder %s17, 0
    %p121 = por %p119, %p120
    %p122 = scmp.ne.s32.totalorder %s114, %s116
    %p123 = scmp.eq.s32.totalorder %s22, 1
    %p124 = por %p122, %p123
    %p125 = scmp.ne.s32.totalorder %s116, %s117
    %p126 = scmp.eq.s32.totalorder %s22, 0
    %p127 = por %p125, %p126
    %p128 = scmp.ne.s32.totalorder %s116, %s117
    %p129 = scmp.eq.s32.totalorder %s23, 1
    %p130 = por %p128, %p129
    %p132 = scmp.ne.s32.totalorder %s117, %s131
    %p133 = scmp.eq.s32.totalorder %s23, 0
    %p134 = por %p132, %p133
    %s136 = sadd.s32 %s135, 1
    %p139 = scmp.eq.s32.totalorder %s17, 1
    %p140 = scmp.ne.s32.totalorder %s135, %s137
    %p141 = scmp.eq.s32.totalorder %s17, 0
    %p142 = por %p140, %p141
    %p143 = scmp.ne.s32.totalorder %s135, %s137
    %p144 = scmp.eq.s32.totalorder %s22, 1
    %p145 = por %p143, %p144
    %p146 = scmp.ne.s32.totalorder %s137, %s138
    %p147 = scmp.eq.s32.totalorder %s22, 0
    %p148 = por %p146, %p147
    %p149 = scmp.ne.s32.totalorder %s137, %s138
    %p150 = scmp.eq.s32.totalorder %s23, 1
    %p151 = por %p149, %p150
    %p153 = scmp.ne.s32.totalorder %s138, %s152
    %p154 = scmp.eq.s32.totalorder %s23, 0
    %p155 = por %p153, %p154
    %s157 = sadd.s32 %s156, 1
    %p160 = scmp.eq.s32.totalorder %s17, 1
    %p161 = scmp.ne.s32.totalorder %s156, %s158
    %p162 = scmp.eq.s32.totalorder %s17, 0
    %p163 = por %p161, %p162
    %p164 = scmp.ne.s32.totalorder %s156, %s158
    %p165 = scmp.eq.s32.totalorder %s22, 1
    %p166 = por %p164, %p165
    %p167 = scmp.ne.s32.totalorder %s158, %s159
    %p168 = scmp.eq.s32.totalorder %s22, 0
    %p169 = por %p167, %p168
    %p170 = scmp.ne.s32.totalorder %s158, %s159
    %p171 = scmp.eq.s32.totalorder %s23, 1
    %p172 = por %p170, %p171
    %p174 = scmp.ne.s32.totalorder %s159, %s173
    %p175 = scmp.eq.s32.totalorder %s23, 0
    %p176 = por %p174, %p175
    %s178 = sadd.s32 %s177, 1
    %p181 = scmp.eq.s32.totalorder %s17, 1
    %p182 = scmp.ne.s32.totalorder %s177, %s179
    %p183 = scmp.eq.s32.totalorder %s17, 0
    %p184 = por %p182, %p183
    %p185 = scmp.ne.s32.totalorder %s177, %s179
    %p186 = scmp.eq.s32.totalorder %s22, 1
    %p187 = por %p185, %p186
    %p188 = scmp.ne.s32.totalorder %s179, %s180
    %p189 = scmp.eq.s32.totalorder %s22, 0
    %p190 = por %p188, %p189
    %p191 = scmp.ne.s32.totalorder %s179, %s180
    %p192 = scmp.eq.s32.totalorder %s23, 1
    %p193 = por %p191, %p192
    %p195 = scmp.ne.s32.totalorder %s180, %s194
    %p196 = scmp.eq.s32.totalorder %s23, 0
    %p197 = por %p195, %p196
    %s199 = sadd.s32 %s198, 1
    %p202 = scmp.eq.s32.totalorder %s17, 1
    %p203 = scmp.ne.s32.totalorder %s198, %s200
    %p204 = scmp.eq.s32.totalorder %s17, 0
    %p205 = por %p203, %p204
    %p206 = scmp.ne.s32.totalorder %s198, %s200
    %p207 = scmp.eq.s32.totalorder %s22, 1
    %p208 = por %p206, %p207
    %p209 = scmp.ne.s32.totalorder %s200, %s201
    %p210 = scmp.eq.s32.totalorder %s22, 0
    %p211 = por %p209, %p210
    %p212 = scmp.ne.s32.totalorder %s200, %s201
    %p213 = scmp.eq.s32.totalorder %s23, 1
    %p214 = por %p212, %p213
    %p216 = scmp.ne.s32.totalorder %s201, %s215
    %p217 = scmp.eq.s32.totalorder %s23, 0
    %p218 = por %p216, %p217
    %s220 = sadd.s32 %s219, 1
    %p223 = scmp.eq.s32.totalorder %s17, 1
    %p224 = scmp.ne.s32.totalorder %s219, %s221
    %p225 = scmp.eq.s32.totalorder %s17, 0
    %p226 = por %p224, %p225
    %p227 = scmp.ne.s32.totalorder %s219, %s221
    %p228 = scmp.eq.s32.totalorder %s22, 1
    %p229 = por %p227, %p228
    %p230 = scmp.ne.s32.totalorder %s221, %s222
    %p231 = scmp.eq.s32.totalorder %s22, 0
    %p232 = por %p230, %p231
    %p233 = scmp.ne.s32.totalorder %s221, %s222
    %p234 = scmp.eq.s32.totalorder %s23, 1
    %p235 = por %p233, %p234
    %p237 = scmp.ne.s32.totalorder %s222, %s236
    %p238 = scmp.eq.s32.totalorder %s23, 0
    %p239 = por %p237, %p238
    %s241 = sadd.s32 %s240, 1
    %p244 = scmp.eq.s32.totalorder %s17, 1
    %p245 = scmp.ne.s32.totalorder %s240, %s242
    %p246 = scmp.eq.s32.totalorder %s17, 0
    %p247 = por %p245, %p246
    %p248 = scmp.ne.s32.totalorder %s240, %s242
    %p249 = scmp.eq.s32.totalorder %s22, 1
    %p250 = por %p248, %p249
    %p251 = scmp.ne.s32.totalorder %s242, %s243
    %p252 = scmp.eq.s32.totalorder %s22, 0
    %p253 = por %p251, %p252
    %p254 = scmp.ne.s32.totalorder %s242, %s243
    %p255 = scmp.eq.s32.totalorder %s23, 1
    %p256 = por %p254, %p255
    %p258 = scmp.ne.s32.totalorder %s243, %s257
    %p259 = scmp.eq.s32.totalorder %s23, 0
    %p260 = por %p258, %p259
    %s261 = ssub.s32 %s17, %s24
    %p262 = scmp.eq.s32.totalorder %s261, 0
    %s264 = sadd.s32 %s263, 1
    %s265 = scalar_select %p262, %s263, %s264
    %p268 = pneg %p262
    %p269 = scmp.eq.s32.totalorder %s17, 1
    %p270 = por %p268, %p269
    %p271 = scmp.ne.s32.totalorder %s263, %s266
    %p272 = scmp.eq.s32.totalorder %s17, 0
    %p273 = por %p271, %p272
    %p274 = scmp.ne.s32.totalorder %s263, %s266
    %p275 = scmp.eq.s32.totalorder %s22, 1
    %p276 = por %p274, %p275
    %p277 = scmp.ne.s32.totalorder %s266, %s267
    %p278 = scmp.eq.s32.totalorder %s22, 0
    %p279 = por %p277, %p278
    %p280 = scmp.ne.s32.totalorder %s266, %s267
    %p281 = scmp.eq.s32.totalorder %s23, 1
    %p282 = por %p280, %p281
    %p284 = scmp.ne.s32.totalorder %s267, %s283
    %p285 = scmp.eq.s32.totalorder %s23, 0
    %p286 = por %p284, %p285
    %p287 = scmp.le.s32.totalorder 1, %s17
    %p288 = scmp.lt.s32.totalorder %s17, 3
    %p289 = pnand %p287, %p288
    %p290 = pneg %p289
    // Predicated region
    $region9: #{forward.1} parent=5 // pred_check
      _
    $region10: #{forward.1} parent=5 // pred_check_branch
      %292 = sbr.rel (%p289) target = $region12
    $region11: #{forward.1} parent=5 // pred_region
      %s293 = ssub.s32 %s17, 1
      // Predicated region
      $region13: #{forward.1} parent=11 // pred_check
        %p294 = pneg %p64
      $region14: #{forward.1} parent=11 // pred_check_branch
        %296 = sbr.rel (%p294) target = $region16
      $region15: #{forward.1} parent=11 // pred_region
        _
      $region16: #{forward.1} parent=11 // pred_fallthru
        _
      // Predicated region
      $region17: #{forward.1} parent=11 // pred_check
        %p297 = pneg %p85
      $region18: #{forward.1} parent=11 // pred_check_branch
        %299 = sbr.rel (%p297) target = $region20
      $region19: #{forward.1} parent=11 // pred_region
        _
      $region20: #{forward.1} parent=11 // pred_fallthru
        _
      // Predicated region
      $region21: #{forward.1} parent=11 // pred_check
        %p300 = pneg %p106
      $region22: #{forward.1} parent=11 // pred_check_branch
        %302 = sbr.rel (%p300) target = $region24
      $region23: #{forward.1} parent=11 // pred_region
        _
      $region24: #{forward.1} parent=11 // pred_fallthru
        _
      // Predicated region
      $region25: #{forward.1} parent=11 // pred_check
        %p303 = pneg %p127
      $region26: #{forward.1} parent=11 // pred_check_branch
        %305 = sbr.rel (%p303) target = $region28
      $region27: #{forward.1} parent=11 // pred_region
        _
      $region28: #{forward.1} parent=11 // pred_fallthru
        _
      // Predicated region
      $region29: #{forward.1} parent=11 // pred_check
        %p306 = pneg %p148
      $region30: #{forward.1} parent=11 // pred_check_branch
        %308 = sbr.rel (%p306) target = $region32
      $region31: #{forward.1} parent=11 // pred_region
        _
      $region32: #{forward.1} parent=11 // pred_fallthru
        _
      // Predicated region
      $region33: #{forward.1} parent=11 // pred_check
        %p309 = pneg %p169
      $region34: #{forward.1} parent=11 // pred_check_branch
        %311 = sbr.rel (%p309) target = $region36
      $region35: #{forward.1} parent=11 // pred_region
        _
      $region36: #{forward.1} parent=11 // pred_fallthru
        _
      // Predicated region
      $region37: #{forward.1} parent=11 // pred_check
        %p312 = pneg %p190
      $region38: #{forward.1} parent=11 // pred_check_branch
        %314 = sbr.rel (%p312) target = $region40
      $region39: #{forward.1} parent=11 // pred_region
        _
      $region40: #{forward.1} parent=11 // pred_fallthru
        _
      // Predicated region
      $region41: #{forward.1} parent=11 // pred_check
        %p315 = pneg %p211
      $region42: #{forward.1} parent=11 // pred_check_branch
        %317 = sbr.rel (%p315) target = $region44
      $region43: #{forward.1} parent=11 // pred_region
        _
      $region44: #{forward.1} parent=11 // pred_fallthru
        _
      // Predicated region
      $region45: #{forward.1} parent=11 // pred_check
        %p318 = pneg %p232
      $region46: #{forward.1} parent=11 // pred_check_branch
        %320 = sbr.rel (%p318) target = $region48
      $region47: #{forward.1} parent=11 // pred_region
        _
      $region48: #{forward.1} parent=11 // pred_fallthru
        _
      // Predicated region
      $region49: #{forward.1} parent=11 // pred_check
        %p321 = pneg %p253
      $region50: #{forward.1} parent=11 // pred_check_branch
        %323 = sbr.rel (%p321) target = $region52
      $region51: #{forward.1} parent=11 // pred_region
        _
      $region52: #{forward.1} parent=11 // pred_fallthru
        _
    $region12: #{forward.1} parent=5 // pred_fallthru
      _
    %p324 = scmp.lt.s32.totalorder %s17, 2
    // Predicated region
    $region53: #{forward.1} parent=5 // pred_check
      %p325 = pneg %p324
    $region54: #{forward.1} parent=5 // pred_check_branch
      %327 = sbr.rel (%p325) target = $region56
    $region55: #{forward.1} parent=5 // pred_region
      // Predicated region
      $region57: #{forward.1} parent=55 // pred_check
        %p328 = pneg %p37
      $region58: #{forward.1} parent=55 // pred_check_branch
        %330 = sbr.rel (%p328) target = $region60
      $region59: #{forward.1} parent=55 // pred_region
        %p331 = scmp.lt.s32.totalorder %s17, 1
        %s332 = scalar_select %p331, %s17, 1
        %s333 = smul.addr %s332, 9
        %s334 = smul.addr %s333, 4
        %s335 = scalar_lea.vmem %s0, %s334
      $region60: #{forward.1} parent=55 // pred_fallthru
        _
    $region56: #{forward.1} parent=5 // pred_fallthru
      _
    %p336 = scmp.le.s32.totalorder 1, %s17
    %p337 = scmp.lt.s32.totalorder %s17, 3
    %p338 = pnand %p336, %p337
    %p339 = pneg %p338
    // Predicated region
    $region61: #{forward.1} parent=5 // pred_check
      _
    $region62: #{forward.1} parent=5 // pred_check_branch
      %341 = sbr.rel (%p338) target = $region64
    $region63: #{forward.1} parent=5 // pred_region
      %s342 = ssub.s32 %s17, 1
      %p343 = scmp.lt.s32.totalorder %s22, 1
      %s344 = scalar_select %p343, %s22, 1
      %s345 = smul.addr %s344, 9
      %s346 = smul.addr %s345, 4
      %s347 = scalar_lea.vmem %s0, %s346
      %p348 = pneg %p43
      %p349 = pneg %p40
      %p350 = pneg %p64
      %p351 = pneg %p61
      %p352 = pneg %p85
      %p353 = pneg %p82
      %p354 = pneg %p106
      %p355 = pneg %p103
      %p356 = pneg %p127
      %p357 = pneg %p124
      %p358 = pneg %p148
      %p359 = pneg %p145
      %p360 = pneg %p169
      %p361 = pneg %p166
      %p362 = pneg %p190
      %p363 = pneg %p187
      %p364 = pneg %p211
      %p365 = pneg %p208
      %p366 = pneg %p232
      %p367 = pneg %p229
      %p368 = pneg %p253
      %p369 = pneg %p250
      %p370 = pneg %p279
      %p371 = pneg %p276
      %p372 = scmp.lt.s32.totalorder %s22, 1
      %s373 = scalar_select %p372, %s22, 1
      %s374 = scalar_lea.vmem %s11, %s373
      %p375 = scmp.lt.s32.totalorder %s22, 1
      %s376 = scalar_select %p375, %s22, 1
      %s377 = smul.addr %s376, 9
      %s378 = smul.addr %s377, 4
      %s379 = scalar_lea.vmem %s0, %s378
      %p380 = scmp.lt.s32.totalorder %s22, 1
      %s381 = scalar_select %p380, %s22, 1
      %s382 = scalar_lea.vmem %s11, %s381
      %v384 = vld [vmem:[%s379] sm:$0xf]
      %v385 = vld [vmem:[%s379 + $0x4] sm:$0xf]
      %v386 = vld [vmem:[%s379 + $0x8] sm:$0xf]
      %v387 = vld [vmem:[%s379 + $0xc] sm:$0xf]
      %v388 = vld [vmem:[%s379 + $0x10] sm:$0xf]
      %v389 = vld [vmem:[%s379 + $0x14] sm:$0xf]
      %v390 = vld [vmem:[%s379 + $0x18] sm:$0xf]
      %v391 = vld [vmem:[%s379 + $0x1c] sm:$0xf]
      %v392 = vld [vmem:[%s379 + $0x20] sm:$0xf]
      %v393 = vld [vmem:[%s1] sm:$0xf]
      %v394 = vld [vmem:[%s1 + $0x4] sm:$0xf]
      %v395 = vld [vmem:[%s1 + $0x8] sm:$0xf]
      %v396 = vld [vmem:[%s1 + $0xc] sm:$0xf]
      %v397 = vld [vmem:[%s1 + $0x10] sm:$0xf]
      %v398 = vld [vmem:[%s1 + $0x14] sm:$0xf]
      %v399 = vld [vmem:[%s1 + $0x18] sm:$0xf]
      %v400 = vld [vmem:[%s1 + $0x1c] sm:$0xf]
      %v401 = vld [vmem:[%s1 + $0x20] sm:$0xf]
      %v402 = vld [vmem:[%s2] sm:$0x1]
      %v404 = vlaneseq
      %v405 = vshrl.u32 %v404, 7
      %v406 = vsub.s32 0, %v405
      %v407 = vrot.slane %v402, %v406
      %v418 = vunpack.c.l.b16 %v384
      %v419 = vunpack.c.l.b16 %v385
      %v420 = vunpack.c.l.b16 %v386
      %v421 = vunpack.c.l.b16 %v387
      %v422 = vunpack.c.l.b16 %v388
      %v423 = vunpack.c.l.b16 %v389
      %v424 = vunpack.c.l.b16 %v390
      %v425 = vunpack.c.l.b16 %v391
      %v426 = vunpack.c.l.b16 %v392
      %v427 = vpack.c.b16 %v419, %v418
      %v428 = vpack.c.b16 %v421, %v420
      %v429 = vpack.c.b16 %v423, %v422
      %v430 = vpack.c.b16 %v425, %v424
      %v431 = vpack.c.b16 %v426, %v426
      %v441 = vunpack.c.l.b16 %v393
      %v442 = vunpack.c.l.b16 %v394
      %v443 = vunpack.c.l.b16 %v395
      %v444 = vunpack.c.l.b16 %v396
      %v445 = vunpack.c.l.b16 %v397
      %v446 = vunpack.c.l.b16 %v398
      %v447 = vunpack.c.l.b16 %v399
      %v448 = vunpack.c.l.b16 %v400
      %v449 = vunpack.c.l.b16 %v401
      %v450 = vpack.c.b16 %v442, %v441
      %v451 = vpack.c.b16 %v444, %v443
      %v452 = vpack.c.b16 %v446, %v445
      %v453 = vpack.c.b16 %v448, %v447
      %v454 = vpack.c.b16 %v449, %v449
      %vm459 = vcmask 588800
      %v461 = vsel %vm459, %v427, 0
      %v464 = vsel %vm459, %v428, 0
      %v467 = vsel %vm459, %v429, 0
      %v470 = vsel %vm459, %v430, 0
      %v473 = vsel %vm459, %v431, 0
      %vm475 = vcmask 1043456
      %v477 = vsel %vm475, %v454, 0
      %479 = vmatprep.subr.bf16.mxu0 0
      %480 = vmatpush1.bf16.msra.mxu0 %v450
      %481 = vmatprep.subr.bf16.mxu0 0
      %482 = vmatpush1.bf16.msra.mxu0 %v451
      %483 = vmatprep.subr.bf16.mxu0 0
      %484 = vmatpush1.bf16.msra.mxu0 %v452
      %485 = vmatprep.subr.bf16.mxu0 0
      %486 = vmatpush1.bf16.msra.mxu0 %v453
      %487 = vmatprep.subr.bf16.mxu0 0
      %488 = vmatpush1.bf16.msra.mxu0 %v477
      %489 = vmatprep.subr.bf16.mxu0 0
      %490 = vmatpush1.bf16.msra.mxu0 0
      %491 = vmatprep.subr.bf16.mxu0 0
      %492 = vmatpush1.bf16.msra.mxu0 0
      %493 = vmatprep.subr.bf16.mxu0 0
      %494 = vmatpush1.bf16.msra.mxu0 0
      %495 = vmatprep.subr.bf16.mxu0 0
      %496 = vmatpush1.bf16.msra.mxu0 0
      %497 = vmatprep.subr.bf16.mxu0 0
      %498 = vmatpush1.bf16.msra.mxu0 0
      %499 = vmatprep.subr.bf16.mxu0 0
      %500 = vmatpush1.bf16.msra.mxu0 0
      %501 = vmatprep.subr.bf16.mxu0 0
      %502 = vmatpush1.bf16.msra.mxu0 0
      %503 = vmatprep.subr.bf16.mxu0 0
      %504 = vmatpush1.bf16.msra.mxu0 0
      %505 = vmatprep.subr.bf16.mxu0 0
      %506 = vmatpush1.bf16.msra.mxu0 0
      %507 = vmatprep.subr.bf16.mxu0 0
      %508 = vmatpush1.bf16.msra.mxu0 0
      %509 = vmatprep.subr.bf16.mxu0 0
      %510 = vmatpush1.bf16.msra.mxu0 0
      %511 = vmatprep.mubr.bf16.mxu0 0
      %512 = vmatmul.mubr.bf16.gmra.mrb[0].mxu0 %v461
      %v513 = vpop.f32.mrb[0].mxu0
      %v514 = vadd.f32 %v407, %v513
      %v515 = vpop.f32.mrb[0].mxu0
      %v516 = vpop.f32.mrb[0].mxu0
      %v517 = vadd.f32 %v407, %v516
      %v518 = vpop.f32.mrb[0].mxu0
      %519 = vmatprep.mubr.bf16.mxu0 0
      %520 = vmatmul.mubr.bf16.gmra.mrb[0].mxu0 %v464
      %v521 = vpop.f32.mrb[0].mxu0
      %v522 = vadd.f32 %v407, %v521
      %v523 = vpop.f32.mrb[0].mxu0
      %v524 = vpop.f32.mrb[0].mxu0
      %v525 = vadd.f32 %v407, %v524
      %v526 = vpop.f32.mrb[0].mxu0
      %527 = vmatprep.mubr.bf16.mxu0 0
      %528 = vmatmul.mubr.bf16.gmra.mrb[0].mxu0 %v467
      %v529 = vpop.f32.mrb[0].mxu0
      %v530 = vadd.f32 %v407, %v529
      %v531 = vpop.f32.mrb[0].mxu0
      %v532 = vpop.f32.mrb[0].mxu0
      %v533 = vadd.f32 %v407, %v532
      %v534 = vpop.f32.mrb[0].mxu0
      %535 = vmatprep.mubr.bf16.mxu0 0
      %536 = vmatmul.mubr.bf16.gmra.mrb[0].mxu0 %v470
      %v537 = vpop.f32.mrb[0].mxu0
      %v538 = vadd.f32 %v407, %v537
      %v539 = vpop.f32.mrb[0].mxu0
      %v540 = vpop.f32.mrb[0].mxu0
      %v541 = vadd.f32 %v407, %v540
      %v542 = vpop.f32.mrb[0].mxu0
      %543 = vmatprep.mubr.bf16.mxu0 0
      %544 = vmatmul.mubr.bf16.gmra.mrb[0].mxu0 %v473
      %v545 = vpop.f32.mrb[0].mxu0
      %v546 = vadd.f32 %v407, %v545
      %v547 = vpop.f32.mrb[0].mxu0
      %v548 = vpop.f32.mrb[0].mxu0
      %v549 = vpop.f32.mrb[0].mxu0
      %550 = vdwg.mxu0
      %v551 = vmax.f32 %v514, 0.0
      %v552 = vmax.f32 %v517, 0.0
      %v553 = vmax.f32 %v522, 0.0
      %v554 = vmax.f32 %v525, 0.0
      %v555 = vmax.f32 %v530, 0.0
      %v556 = vmax.f32 %v533, 0.0
      %v557 = vmax.f32 %v538, 0.0
      %v558 = vmax.f32 %v541, 0.0
      %v559 = vmax.f32 %v546, 0.0
      %v560 = vpack.c.bf16 %v552, %v551
      %v561 = vpack.c.bf16 %v554, %v553
      %v562 = vpack.c.bf16 %v556, %v555
      %v563 = vpack.c.bf16 %v558, %v557
      %v564 = vpack.c.bf16 %v559, %v559
      %v565 = vld [vmem:[%s3] sm:$0xf]
      %v566 = vld [vmem:[%s3 + $0x4] sm:$0xf]
      %v567 = vld [vmem:[%s3 + $0x8] sm:$0xf]
      %v568 = vld [vmem:[%s3 + $0xc] sm:$0xf]
      %v569 = vld [vmem:[%s3 + $0x10] sm:$0xf]
      %v570 = vld [vmem:[%s3 + $0x14] sm:$0xf]
      %v571 = vld [vmem:[%s3 + $0x18] sm:$0xf]
      %v572 = vld [vmem:[%s3 + $0x1c] sm:$0xf]
      %v573 = vld [vmem:[%s3 + $0x20] sm:$0xf]
      %v574 = vld [vmem:[%s3 + $0x24] sm:$0xf]
      %v575 = vld [vmem:[%s3 + $0x28] sm:$0xf]
      %v576 = vld [vmem:[%s3 + $0x2c] sm:$0xf]
      %v577 = vld [vmem:[%s3 + $0x30] sm:$0x3]
      %v591 = vunpack.c.l.b16 %v565
      %v592 = vunpack.c.l.b16 %v566
      %v593 = vunpack.c.l.b16 %v567
      %v594 = vunpack.c.l.b16 %v568
      %v595 = vunpack.c.l.b16 %v569
      %v596 = vunpack.c.l.b16 %v570
      %v597 = vunpack.c.l.b16 %v571
      %v598 = vunpack.c.l.b16 %v572
      %v599 = vunpack.c.l.b16 %v573
      %v600 = vunpack.c.l.b16 %v574
      %v601 = vunpack.c.l.b16 %v575
      %v602 = vunpack.c.l.b16 %v576
      %v603 = vunpack.c.l.b16 %v577
      %v604 = vpack.c.b16 %v592, %v591
      %v605 = vpack.c.b16 %v594, %v593
      %v606 = vpack.c.b16 %v596, %v595
      %v607 = vpack.c.b16 %v598, %v597
      %v608 = vpack.c.b16 %v600, %v599
      %v609 = vpack.c.b16 %v602, %v601
      %v610 = vpack.c.b16 %v603, %v603
      %v612 = vsel %vm459, %v604, 0
      %v615 = vsel %vm459, %v605, 0
      %v618 = vsel %vm459, %v606, 0
      %v621 = vsel %vm459, %v607, 0
      %v624 = vsel %vm459, %v608, 0
      %v627 = vsel %vm459, %v609, 0
      %v630 = vsel %vm459, %v610, 0
      %v633 = vsel %vm475, %v564, 0
      %635 = vmatprep.subr.bf16.mxu0 0
      %636 = vmatpush1.bf16.msra.mxu0 %v560
      %637 = vmatprep.subr.bf16.mxu0 0
      %638 = vmatpush1.bf16.msra.mxu0 %v561
      %639 = vmatprep.subr.bf16.mxu0 0
      %640 = vmatpush1.bf16.msra.mxu0 %v562
      %641 = vmatprep.subr.bf16.mxu0 0
      %642 = vmatpush1.bf16.msra.mxu0 %v563
      %643 = vmatprep.subr.bf16.mxu0 0
      %644 = vmatpush1.bf16.msra.mxu0 %v633
      %645 = vmatprep.subr.bf16.mxu0 0
      %646 = vmatpush1.bf16.msra.mxu0 0
      %647 = vmatprep.subr.bf16.mxu0 0
      %648 = vmatpush1.bf16.msra.mxu0 0
      %649 = vmatprep.subr.bf16.mxu0 0
      %650 = vmatpush1.bf16.msra.mxu0 0
      %651 = vmatprep.subr.bf16.mxu0 0
      %652 = vmatpush1.bf16.msra.mxu0 0
      %653 = vmatprep.subr.bf16.mxu0 0
      %654 = vmatpush1.bf16.msra.mxu0 0
      %655 = vmatprep.subr.bf16.mxu0 0
      %656 = vmatpush1.bf16.msra.mxu0 0
      %657 = vmatprep.subr.bf16.mxu0 0
      %658 = vmatpush1.bf16.msra.mxu0 0
      %659 = vmatprep.subr.bf16.mxu0 0
      %660 = vmatpush1.bf16.msra.mxu0 0
      %661 = vmatprep.subr.bf16.mxu0 0
      %662 = vmatpush1.bf16.msra.mxu0 0
      %663 = vmatprep.subr.bf16.mxu0 0
      %664 = vmatpush1.bf16.msra.mxu0 0
      %665 = vmatprep.subr.bf16.mxu0 0
      %666 = vmatpush1.bf16.msra.mxu0 0
      %667 = vmatprep.mubr.bf16.mxu0 0
      %668 = vmatmul.mubr.bf16.gmra.mrb[0].mxu0 %v612
      %v669 = vpop.f32.mrb[0].mxu0
      %v670 = vadd.f32 0.0, %v669
      %v671 = vpop.f32.mrb[0].mxu0
      %v672 = vpop.f32.mrb[0].mxu0
      %v673 = vadd.f32 0.0, %v672
      %v674 = vpop.f32.mrb[0].mxu0
      %675 = vmatprep.mubr.bf16.mxu0 0
      %676 = vmatmul.mubr.bf16.gmra.mrb[0].mxu0 %v615
      %v677 = vpop.f32.mrb[0].mxu0
      %v678 = vadd.f32 0.0, %v677
      %v679 = vpop.f32.mrb[0].mxu0
      %v680 = vpop.f32.mrb[0].mxu0
      %v681 = vadd.f32 0.0, %v680
      %v682 = vpop.f32.mrb[0].mxu0
      %683 = vmatprep.mubr.bf16.mxu0 0
      %684 = vmatmul.mubr.bf16.gmra.mrb[0].mxu0 %v618
      %v685 = vpop.f32.mrb[0].mxu0
      %v686 = vadd.f32 0.0, %v685
      %v687 = vpop.f32.mrb[0].mxu0
      %v688 = vpop.f32.mrb[0].mxu0
      %v689 = vadd.f32 0.0, %v688
      %v690 = vpop.f32.mrb[0].mxu0
      %691 = vmatprep.mubr.bf16.mxu0 0
      %692 = vmatmul.mubr.bf16.gmra.mrb[0].mxu0 %v621
      %v693 = vpop.f32.mrb[0].mxu0
      %v694 = vadd.f32 0.0, %v693
      %v695 = vpop.f32.mrb[0].mxu0
      %v696 = vpop.f32.mrb[0].mxu0
      %v697 = vadd.f32 0.0, %v696
      %v698 = vpop.f32.mrb[0].mxu0
      %699 = vmatprep.mubr.bf16.mxu0 0
      %700 = vmatmul.mubr.bf16.gmra.mrb[0].mxu0 %v624
      %v701 = vpop.f32.mrb[0].mxu0
      %v702 = vadd.f32 0.0, %v701
      %v703 = vpop.f32.mrb[0].mxu0
      %v704 = vpop.f32.mrb[0].mxu0
      %v705 = vadd.f32 0.0, %v704
      %v706 = vpop.f32.mrb[0].mxu0
      %707 = vmatprep.mubr.bf16.mxu0 0
      %708 = vmatmul.mubr.bf16.gmra.mrb[0].mxu0 %v627
      %v709 = vpop.f32.mrb[0].mxu0
      %v710 = vadd.f32 0.0, %v709
      %v711 = vpop.f32.mrb[0].mxu0
      %v712 = vpop.f32.mrb[0].mxu0
      %v713 = vadd.f32 0.0, %v712
      %v714 = vpop.f32.mrb[0].mxu0
      %715 = vmatprep.mubr.bf16.mxu0 0
      %716 = vmatmul.mubr.bf16.gmra.mrb[0].mxu0 %v630
      %v717 = vpop.f32.mrb[0].mxu0
      %v718 = vadd.f32 0.0, %v717
      %v719 = vpop.f32.mrb[0].mxu0
      %v720 = vpop.f32.mrb[0].mxu0
      %v721 = vpop.f32.mrb[0].mxu0
      %722 = vdwg.mxu0
      %v723 = vpack.c.bf16 %v673, %v670
      %v724 = vpack.c.bf16 %v681, %v678
      %v725 = vpack.c.bf16 %v689, %v686
      %v726 = vpack.c.bf16 %v697, %v694
      %v727 = vpack.c.bf16 %v705, %v702
      %v728 = vpack.c.bf16 %v713, %v710
      %v729 = vpack.c.bf16 %v718, %v718
      %v737 = vunpack.c.l.b16 %v723
      %v738 = vunpack.c.h.b16 %v723
      %v739 = vunpack.c.l.b16 %v724
      %v740 = vunpack.c.h.b16 %v724
      %v741 = vunpack.c.l.b16 %v725
      %v742 = vunpack.c.h.b16 %v725
      %v743 = vunpack.c.l.b16 %v726
      %v744 = vunpack.c.h.b16 %v726
      %v745 = vunpack.c.l.b16 %v727
      %v746 = vunpack.c.h.b16 %v727
      %v747 = vunpack.c.l.b16 %v728
      %v748 = vunpack.c.h.b16 %v728
      %v749 = vunpack.c.l.b16 %v729
      %v750 = vpack.c.b16 %v737, %v737
      %v751 = vpack.c.b16 %v738, %v738
      %v752 = vpack.c.b16 %v739, %v739
      %v753 = vpack.c.b16 %v740, %v740
      %v754 = vpack.c.b16 %v741, %v741
      %v755 = vpack.c.b16 %v742, %v742
      %v756 = vpack.c.b16 %v743, %v743
      %v757 = vpack.c.b16 %v744, %v744
      %v758 = vpack.c.b16 %v745, %v745
      %v759 = vpack.c.b16 %v746, %v746
      %v760 = vpack.c.b16 %v747, %v747
      %v761 = vpack.c.b16 %v748, %v748
      %v762 = vpack.c.b16 %v749, %v749
      %776 = vst [vmem:[#allocation2] sm:$0xf] %v750
      %777 = vst [vmem:[#allocation2 + $0x4] sm:$0xf] %v751
      %778 = vst [vmem:[#allocation2 + $0x8] sm:$0xf] %v752
      %779 = vst [vmem:[#allocation2 + $0xc] sm:$0xf] %v753
      %780 = vst [vmem:[#allocation2 + $0x10] sm:$0xf] %v754
      %781 = vst [vmem:[#allocation2 + $0x14] sm:$0xf] %v755
      %782 = vst [vmem:[#allocation2 + $0x18] sm:$0xf] %v756
      %783 = vst [vmem:[#allocation2 + $0x1c] sm:$0xf] %v757
      %784 = vst [vmem:[#allocation2 + $0x20] sm:$0xf] %v758
      %785 = vst [vmem:[#allocation2 + $0x24] sm:$0xf] %v759
      %786 = vst [vmem:[#allocation2 + $0x28] sm:$0xf] %v760
      %787 = vst [vmem:[#allocation2 + $0x2c] sm:$0xf] %v761
      %788 = vst [vmem:[#allocation2 + $0x30] sm:$0x3] %v762
      %v789 = vld [vmem:[#allocation2] sm:$0xf]
      %v790 = vld [vmem:[#allocation2 + $0x4] sm:$0xf]
      %v791 = vld [vmem:[#allocation2 + $0x8] sm:$0x3]
      %792 = vst [vmem:[#allocation3] sm:$0xf] %v789
      %793 = vst [vmem:[#allocation3 + $0x24] sm:$0xf] %v790
      %794 = vst [vmem:[#allocation3 + $0x48] sm:$0x3] %v791
      %v795 = vld [vmem:[#allocation2 + $0xc] sm:$0xf]
      %v796 = vld [vmem:[#allocation2 + $0x10] sm:$0xf]
      %v797 = vld [vmem:[#allocation2 + $0x14] sm:$0x7]
      %vm798 = vsmask.f32 3328
      %vm799 = vsmask.f32 7440
      %vm800 = vmor %vm798, %vm799
      %v802 = vshrl.u32 %v795, 16
      %v804 = vrot.slane %v802, 4
      %v805 = vshll.u32 %v795, 16
      %v807 = vrot.slane %v805, 5
      %v808 = vor.u32 %v804, %v807
      %v809 = vrot.slane %v808, 4
      %v811 = vshll.u32 %v796, 16
      %v813 = vrot.slane %v811, 5
      %v814 = vsel %vm800, %v809, %v813
      %v815 = vshrl.u32 %v796, 16
      %v817 = vrot.slane %v815, 4
      %v818 = vor.u32 %v817, %v813
      %v819 = vrot.slane %v818, 4
      %v821 = vshll.u32 %v797, 16
      %v823 = vrot.slane %v821, 5
      %v824 = vsel %vm800, %v819, %v823
      %v825 = vshrl.u32 %v797, 16
      %v827 = vrot.slane %v825, 4
      %v828 = vor.u32 %v827, %v823
      %v829 = vrot.slane %v828, 4
      %833 = vst [vmem:[#allocation3 + $0x4] sm:$0xf] %v814
      %834 = vst [vmem:[#allocation3 + $0x28] sm:$0xf] %v824
      %835 = vst [vmem:[#allocation3 + $0x4c] sm:$0x3] %v829
      %v836 = vld [vmem:[#allocation2] sm:$0xf]
      %v837 = vld [vmem:[#allocation2 + $0x4] sm:$0xf]
      %v838 = vld [vmem:[#allocation2 + $0x8] sm:$0x7]
      %v840 = vshrl.u32 %v836, 16
      %v842 = vrot.slane %v840, 4
      %v843 = vshll.u32 %v836, 16
      %v845 = vrot.slane %v843, 5
      %v846 = vor.u32 %v842, %v845
      %v847 = vrot.slane %v846, 4
      %v849 = vshll.u32 %v837, 16
      %v851 = vrot.slane %v849, 5
      %v852 = vsel %vm800, %v847, %v851
      %v853 = vshrl.u32 %v837, 16
      %v855 = vrot.slane %v853, 4
      %v856 = vor.u32 %v855, %v851
      %v857 = vrot.slane %v856, 4
      %v859 = vshll.u32 %v838, 16
      %v861 = vrot.slane %v859, 5
      %v862 = vsel %vm800, %v857, %v861
      %v863 = vshrl.u32 %v838, 16
      %v865 = vrot.slane %v863, 4
      %v866 = vor.u32 %v865, %v861
      %v867 = vrot.slane %v866, 4
      %871 = vst [vmem:[#allocation3 + $0x8] sm:$0xf] %v852
      %872 = vst [vmem:[#allocation3 + $0x2c] sm:$0xf] %v862
      %873 = vst [vmem:[#allocation3 + $0x50] sm:$0x3] %v867
      %v874 = vld [vmem:[#allocation2 + $0x18] sm:$0xe]
      %v875 = vld [vmem:[#allocation2 + $0x1c] sm:$0xf]
      %v876 = vld [vmem:[#allocation2 + $0x20] sm:$0x7]
      %vm880 = vcmask 1042432
      %vm881 = vcmask 1046532
      %vm882 = vmor %vm880, %vm881
      %v883 = vrot.slane %v874, 5
      %v884 = vrot.slane %v883, 4
      %v885 = vrot.slane %v875, 5
      %v886 = vsel %vm882, %v884, %v885
      %v887 = vrot.slane %v885, 4
      %v888 = vrot.slane %v876, 5
      %v889 = vsel %vm882, %v887, %v888
      %v890 = vrot.slane %v888, 4
      %894 = vst [vmem:[#allocation3 + $0xc] sm:$0xf] %v886
      %895 = vst [vmem:[#allocation3 + $0x30] sm:$0xf] %v889
      %896 = vst [vmem:[#allocation3 + $0x54] sm:$0x3] %v890
      %v897 = vld [vmem:[#allocation2 + $0x24] sm:$0xe]
      %v898 = vld [vmem:[#allocation2 + $0x28] sm:$0xf]
      %v899 = vld [vmem:[#allocation2 + $0x2c] sm:$0xf]
      %vm900 = vsmask.f32 2304
      %vm901 = vsmask.f32 6416
      %vm902 = vmor %vm900, %vm901
      %v904 = vshrl.u32 %v897, 16
      %v906 = vrot.slane %v904, 5
      %v907 = vshll.u32 %v897, 16
      %v909 = vrot.slane %v907, 6
      %v910 = vor.u32 %v906, %v909
      %v911 = vrot.slane %v910, 4
      %v913 = vshrl.u32 %v898, 16
      %v915 = vrot.slane %v913, 5
      %v916 = vshll.u32 %v898, 16
      %v918 = vrot.slane %v916, 6
      %v919 = vor.u32 %v915, %v918
      %v920 = vsel %vm902, %v911, %v919
      %v921 = vrot.slane %v919, 4
      %v923 = vshrl.u32 %v899, 16
      %v925 = vrot.slane %v923, 5
      %v926 = vshll.u32 %v899, 16
      %v928 = vrot.slane %v926, 6
      %v929 = vor.u32 %v925, %v928
      %v930 = vsel %vm902, %v921, %v929
      %v931 = vrot.slane %v929, 4
      %935 = vst [vmem:[#allocation3 + $0x10] sm:$0xf] %v920
      %936 = vst [vmem:[#allocation3 + $0x34] sm:$0xf] %v930
      %937 = vst [vmem:[#allocation3 + $0x58] sm:$0x3] %v931
      %v938 = vld [vmem:[#allocation2 + $0x18] sm:$0xe]
      %v939 = vld [vmem:[#allocation2 + $0x1c] sm:$0xf]
      %v940 = vld [vmem:[#allocation2 + $0x20] sm:$0xf]
      %v942 = vshrl.u32 %v938, 16
      %v944 = vrot.slane %v942, 5
      %v945 = vshll.u32 %v938, 16
      %v947 = vrot.slane %v945, 6
      %v948 = vor.u32 %v944, %v947
      %v949 = vrot.slane %v948, 4
      %v951 = vshrl.u32 %v939, 16
      %v953 = vrot.slane %v951, 5
      %v954 = vshll.u32 %v939, 16
      %v956 = vrot.slane %v954, 6
      %v957 = vor.u32 %v953, %v956
      %v958 = vsel %vm902, %v949, %v957
      %v959 = vrot.slane %v957, 4
      %v961 = vshrl.u32 %v940, 16
      %v963 = vrot.slane %v961, 5
      %v964 = vshll.u32 %v940, 16
      %v966 = vrot.slane %v964, 6
      %v967 = vor.u32 %v963, %v966
      %v968 = vsel %vm902, %v959, %v967
      %v969 = vrot.slane %v967, 4
      %973 = vst [vmem:[#allocation3 + $0x14] sm:$0xf] %v958
      %974 = vst [vmem:[#allocation3 + $0x38] sm:$0xf] %v968
      %975 = vst [vmem:[#allocation3 + $0x5c] sm:$0x3] %v969
      %v976 = vld [vmem:[#allocation2] sm:$0xc]
      %v977 = vld [vmem:[#allocation2 + $0x4] sm:$0xf]
      %v978 = vld [vmem:[#allocation2 + $0x8] sm:$0xf]
      %v979 = vld [vmem:[#allocation2 + $0xc] sm:$0x1]
      %vm980 = vsmask.f32 1280
      %vm981 = vsmask.f32 5392
      %vm982 = vmor %vm980, %vm981
      %v984 = vshrl.u32 %v976, 16
      %v986 = vrot.slane %v984, 6
      %v987 = vshll.u32 %v976, 16
      %v989 = vrot.slane %v987, 7
      %v990 = vor.u32 %v986, %v989
      %v991 = vrot.slane %v990, 4
      %v993 = vshrl.u32 %v977, 16
      %v995 = vrot.slane %v993, 6
      %v996 = vshll.u32 %v977, 16
      %v998 = vrot.slane %v996, 7
      %v999 = vor.u32 %v995, %v998
      %v1000 = vsel %vm982, %v991, %v999
      %v1001 = vrot.slane %v999, 4
      %v1003 = vshrl.u32 %v978, 16
      %v1005 = vrot.slane %v1003, 6
      %v1006 = vshll.u32 %v978, 16
      %v1008 = vrot.slane %v1006, 7
      %v1009 = vor.u32 %v1005, %v1008
      %v1010 = vsel %vm982, %v1001, %v1009
      %v1011 = vrot.slane %v1009, 4
      %v1013 = vshll.u32 %v979, 16
      %v1015 = vrot.slane %v1013, 7
      %v1016 = vsel %vm982, %v1011, %v1015
      %1020 = vst [vmem:[#allocation3 + $0x18] sm:$0xf] %v1000
      %1021 = vst [vmem:[#allocation3 + $0x3c] sm:$0xf] %v1010
      %1022 = vst [vmem:[#allocation3 + $0x60] sm:$0x3] %v1016
      %v1023 = vld [vmem:[#allocation2 + $0xc] sm:$0x8]
      %v1024 = vld [vmem:[#allocation2 + $0x10] sm:$0xf]
      %v1025 = vld [vmem:[#allocation2 + $0x14] sm:$0xf]
      %v1026 = vld [vmem:[#allocation2 + $0x18] sm:$0x1]
      %vm1031 = vcmask 1040384
      %vm1032 = vcmask 1044484
      %vm1033 = vmor %vm1031, %vm1032
      %v1034 = vrot.slane %v1023, 7
      %v1035 = vrot.slane %v1034, 4
      %v1036 = vrot.slane %v1024, 7
      %v1037 = vsel %vm1033, %v1035, %v1036
      %v1038 = vrot.slane %v1036, 4
      %v1039 = vrot.slane %v1025, 7
      %v1040 = vsel %vm1033, %v1038, %v1039
      %v1041 = vrot.slane %v1039, 4
      %v1042 = vrot.slane %v1026, 7
      %v1043 = vsel %vm1033, %v1041, %v1042
      %1047 = vst [vmem:[#allocation3 + $0x1c] sm:$0xf] %v1037
      %1048 = vst [vmem:[#allocation3 + $0x40] sm:$0xf] %v1040
      %1049 = vst [vmem:[#allocation3 + $0x64] sm:$0x3] %v1043
      %v1050 = vld [vmem:[#allocation2] sm:$0x8]
      %v1051 = vld [vmem:[#allocation2 + $0x4] sm:$0xf]
      %v1052 = vld [vmem:[#allocation2 + $0x8] sm:$0xf]
      %v1053 = vld [vmem:[#allocation2 + $0xc] sm:$0x1]
      %v1058 = vrot.slane %v1050, 7
      %v1059 = vrot.slane %v1058, 4
      %v1060 = vrot.slane %v1051, 7
      %v1061 = vsel %vm1033, %v1059, %v1060
      %v1062 = vrot.slane %v1060, 4
      %v1063 = vrot.slane %v1052, 7
      %v1064 = vsel %vm1033, %v1062, %v1063
      %v1065 = vrot.slane %v1063, 4
      %v1066 = vrot.slane %v1053, 7
      %v1067 = vsel %vm1033, %v1065, %v1066
      %1071 = vst [vmem:[#allocation3 + $0x20] sm:$0xf] %v1061
      %1072 = vst [vmem:[#allocation3 + $0x44] sm:$0xf] %v1064
      %1073 = vst [vmem:[#allocation3 + $0x68] sm:$0x3] %v1067
      %v1074 = vld [vmem:[#allocation3] sm:$0xff]
      %v1075 = vld [vmem:[#allocation3 + $0x8] sm:$0xff]
      %v1076 = vld [vmem:[#allocation3 + $0x10] sm:$0xff]
      %v1077 = vld [vmem:[#allocation3 + $0x18] sm:$0xff]
      %v1078 = vld [vmem:[#allocation3 + $0x20] sm:$0xf]
      %v1079 = vld [vmem:[#allocation3 + $0x24] sm:$0xff]
      %v1080 = vld [vmem:[#allocation3 + $0x2c] sm:$0xff]
      %v1081 = vld [vmem:[#allocation3 + $0x34] sm:$0xff]
      %v1082 = vld [vmem:[#allocation3 + $0x3c] sm:$0xff]
      %v1083 = vld [vmem:[#allocation3 + $0x44] sm:$0xf]
      %v1084 = vld [vmem:[#allocation3 + $0x48] sm:$0x33]
      %v1085 = vld [vmem:[#allocation3 + $0x50] sm:$0x33]
      %v1086 = vld [vmem:[#allocation3 + $0x58] sm:$0x33]
      %v1087 = vld [vmem:[#allocation3 + $0x60] sm:$0x33]
      %v1088 = vld [vmem:[#allocation3 + $0x68] sm:$0x3]
      %v1089 = vld [vmem:[%s4] sm:$0xf]
      %v1090 = vld [vmem:[%s4 + $0x4] sm:$0xf]
      %v1091 = vld [vmem:[%s4 + $0x8] sm:$0xf]
      %v1092 = vld [vmem:[%s4 + $0xc] sm:$0xf]
      %v1093 = vld [vmem:[%s4 + $0x10] sm:$0xf]
      %v1094 = vld [vmem:[%s4 + $0x14] sm:$0xf]
      %v1095 = vld [vmem:[%s4 + $0x18] sm:$0xf]
      %v1096 = vld [vmem:[%s4 + $0x1c] sm:$0xf]
      %v1097 = vld [vmem:[%s4 + $0x20] sm:$0xf]
      %v1098 = vld [vmem:[%s4 + $0x24] sm:$0xf]
      %v1099 = vld [vmem:[%s4 + $0x28] sm:$0xf]
      %v1100 = vld [vmem:[%s4 + $0x2c] sm:$0xf]
      %v1101 = vld [vmem:[%s4 + $0x30] sm:$0xf]
      %v1102 = vld [vmem:[%s4 + $0x34] sm:$0xf]
      %v1103 = vld [vmem:[%s4 + $0x38] sm:$0xf]
      %v1104 = vld [vmem:[%s4 + $0x3c] sm:$0xf]
      %v1105 = vld [vmem:[%s4 + $0x40] sm:$0xf]
      %v1106 = vld [vmem:[%s4 + $0x44] sm:$0xf]
      %v1107 = vld [vmem:[%s4 + $0x48] sm:$0xf]
      %v1108 = vld [vmem:[%s4 + $0x4c] sm:$0xf]
      %v1109 = vld [vmem:[%s4 + $0x50] sm:$0xf]
      %v1110 = vld [vmem:[%s4 + $0x54] sm:$0xf]
      %v1111 = vld [vmem:[%s4 + $0x58] sm:$0xf]
      %v1112 = vld [vmem:[%s4 + $0x5c] sm:$0xf]
      %v1113 = vld [vmem:[%s4 + $0x60] sm:$0xf]
      %v1114 = vld [vmem:[%s4 + $0x64] sm:$0xf]
      %v1115 = vld [vmem:[%s4 + $0x68] sm:$0xf]
      %v1116 = vld [vmem:[%s4 + $0x6c] sm:$0xf]
      %v1117 = vld [vmem:[%s4 + $0x70] sm:$0xf]
      %v1118 = vld [vmem:[%s4 + $0x74] sm:$0xf]
      %v1119 = vld [vmem:[%s4 + $0x78] sm:$0xf]
      %v1120 = vld [vmem:[%s4 + $0x7c] sm:$0xf]
      %v1121 = vld [vmem:[%s4 + $0x80] sm:$0xf]
      %v1122 = vld [vmem:[%s4 + $0x84] sm:$0xf]
      %v1123 = vld [vmem:[%s4 + $0x88] sm:$0xf]
      %v1124 = vld [vmem:[%s4 + $0x8c] sm:$0xf]
      %v1125 = vld [vmem:[%s4 + $0x90] sm:$0xf]
      %v1126 = vld [vmem:[%s4 + $0x94] sm:$0xf]
      %v1127 = vld [vmem:[%s4 + $0x98] sm:$0xf]
      %v1128 = vld [vmem:[%s4 + $0x9c] sm:$0xf]
      %v1129 = vld [vmem:[%s4 + $0xa0] sm:$0xf]
      %v1130 = vld [vmem:[%s4 + $0xa4] sm:$0xf]
      %v1131 = vld [vmem:[%s4 + $0xa8] sm:$0xf]
      %v1132 = vld [vmem:[%s4 + $0xac] sm:$0xf]
      %v1133 = vld [vmem:[%s4 + $0xb0] sm:$0xf]
      %v1134 = vld [vmem:[%s4 + $0xb4] sm:$0xf]
      %v1135 = vld [vmem:[%s4 + $0xb8] sm:$0xf]
      %v1136 = vld [vmem:[%s4 + $0xbc] sm:$0xf]
      %v1137 = vld [vmem:[%s4 + $0xc0] sm:$0xf]
      %v1138 = vld [vmem:[%s4 + $0xc4] sm:$0xf]
      %v1139 = vld [vmem:[%s4 + $0xc8] sm:$0xf]
      %v1140 = vld [vmem:[%s4 + $0xcc] sm:$0xf]
      %v1141 = vld [vmem:[%s4 + $0xd0] sm:$0xf]
      %v1142 = vld [vmem:[%s4 + $0xd4] sm:$0xf]
      %v1143 = vld [vmem:[%s4 + $0xd8] sm:$0xf]
      %v1144 = vld [vmem:[%s4 + $0xdc] sm:$0xf]
      %v1145 = vld [vmem:[%s4 + $0xe0] sm:$0xf]
      %v1146 = vld [vmem:[%s4 + $0xe4] sm:$0xf]
      %v1147 = vld [vmem:[%s4 + $0xe8] sm:$0xf]
      %v1148 = vld [vmem:[%s4 + $0xec] sm:$0xf]
      %v1149 = vld [vmem:[%s4 + $0xf0] sm:$0xf]
      %v1150 = vld [vmem:[%s4 + $0xf4] sm:$0xf]
      %v1151 = vld [vmem:[%s4 + $0xf8] sm:$0xf]
      %v1152 = vld [vmem:[%s4 + $0xfc] sm:$0xf]
      %v1153 = vld [vmem:[%s4 + $0x100] sm:$0xf]
      %v1154 = vld [vmem:[%s4 + $0x104] sm:$0xf]
      %v1155 = vld [vmem:[%s4 + $0x108] sm:$0xf]
      %v1156 = vld [vmem:[%s4 + $0x10c] sm:$0xf]
      %v1157 = vld [vmem:[%s4 + $0x110] sm:$0xf]
      %v1158 = vld [vmem:[%s4 + $0x114] sm:$0xf]
      %v1159 = vld [vmem:[%s4 + $0x118] sm:$0xf]
      %v1160 = vld [vmem:[%s4 + $0x11c] sm:$0xf]
      %v1161 = vld [vmem:[%s4 + $0x120] sm:$0xf]
      %v1162 = vld [vmem:[%s4 + $0x124] sm:$0xf]
      %v1163 = vld [vmem:[%s4 + $0x128] sm:$0xf]
      %v1164 = vld [vmem:[%s4 + $0x12c] sm:$0xf]
      %v1165 = vld [vmem:[%s4 + $0x130] sm:$0xf]
      %v1166 = vld [vmem:[%s4 + $0x134] sm:$0xf]
      %v1167 = vld [vmem:[%s4 + $0x138] sm:$0xf]
      %v1168 = vld [vmem:[%s4 + $0x13c] sm:$0xf]
      %v1169 = vld [vmem:[%s4 + $0x140] sm:$0xf]
      %v1170 = vld [vmem:[%s4 + $0x144] sm:$0xf]
      %v1171 = vld [vmem:[%s4 + $0x148] sm:$0xf]
      %v1172 = vld [vmem:[%s4 + $0x14c] sm:$0xf]
      %v1173 = vld [vmem:[%s4 + $0x150] sm:$0xf]
      %v1174 = vld [vmem:[%s4 + $0x154] sm:$0xf]
      %v1175 = vld [vmem:[%s4 + $0x158] sm:$0xf]
      %v1176 = vld [vmem:[%s4 + $0x15c] sm:$0xf]
      %v1177 = vld [vmem:[%s4 + $0x160] sm:$0xf]
      %v1178 = vld [vmem:[%s4 + $0x164] sm:$0xf]
      %v1179 = vld [vmem:[%s4 + $0x168] sm:$0xf]
      %v1180 = vld [vmem:[%s4 + $0x16c] sm:$0xf]
      %v1181 = vld [vmem:[%s4 + $0x170] sm:$0xf]
      %v1182 = vld [vmem:[%s4 + $0x174] sm:$0xf]
      %v1183 = vld [vmem:[%s4 + $0x178] sm:$0xf]
      %v1184 = vld [vmem:[%s4 + $0x17c] sm:$0xf]
      %v1185 = vld [vmem:[%s4 + $0x180] sm:$0xf]
      %v1186 = vld [vmem:[%s4 + $0x184] sm:$0xf]
      %v1187 = vld [vmem:[%s4 + $0x188] sm:$0xf]
      %v1188 = vld [vmem:[%s4 + $0x18c] sm:$0xf]
      %v1189 = vld [vmem:[%s4 + $0x190] sm:$0xf]
      %v1190 = vld [vmem:[%s4 + $0x194] sm:$0xf]
      %v1191 = vld [vmem:[%s4 + $0x198] sm:$0xf]
      %v1192 = vld [vmem:[%s4 + $0x19c] sm:$0xf]
      %v1193 = vld [vmem:[%s4 + $0x1a0] sm:$0xf]
      %v1194 = vld [vmem:[%s4 + $0x1a4] sm:$0xf]
      %v1195 = vld [vmem:[%s4 + $0x1a8] sm:$0xf]
      %v1196 = vld [vmem:[%s4 + $0x1ac] sm:$0xf]
      %v1197 = vld [vmem:[%s4 + $0x1b0] sm:$0xf]
      %v1198 = vld [vmem:[%s4 + $0x1b4] sm:$0xf]
      %v1199 = vld [vmem:[%s4 + $0x1b8] sm:$0xf]
      %v1200 = vld [vmem:[%s4 + $0x1bc] sm:$0xf]
      %v1201 = vld [vmem:[%s4 + $0x1c0] sm:$0xf]
      %v1202 = vld [vmem:[%s4 + $0x1c4] sm:$0xf]
      %v1203 = vld [vmem:[%s4 + $0x1c8] sm:$0xf]
      %v1204 = vld [vmem:[%s4 + $0x1cc] sm:$0xf]
      %v1205 = vld [vmem:[%s4 + $0x1d0] sm:$0xf]
      %v1206 = vld [vmem:[%s4 + $0x1d4] sm:$0xf]
      %v1207 = vld [vmem:[%s4 + $0x1d8] sm:$0xf]
      %v1208 = vld [vmem:[%s4 + $0x1dc] sm:$0xf]
      %v1209 = vld [vmem:[%s4 + $0x1e0] sm:$0xf]
      %v1210 = vld [vmem:[%s4 + $0x1e4] sm:$0xf]
      %v1211 = vld [vmem:[%s4 + $0x1e8] sm:$0xf]
      %v1212 = vld [vmem:[%s4 + $0x1ec] sm:$0xf]
      %v1213 = vld [vmem:[%s4 + $0x1f0] sm:$0xf]
      %v1214 = vld [vmem:[%s4 + $0x1f4] sm:$0xf]
      %v1215 = vld [vmem:[%s4 + $0x1f8] sm:$0xf]
      %v1216 = vld [vmem:[%s4 + $0x1fc] sm:$0xf]
      %v1217 = vld [vmem:[%s4 + $0x200] sm:$0xf]
      %v1218 = vld [vmem:[%s4 + $0x204] sm:$0xf]
      %v1219 = vld [vmem:[%s4 + $0x208] sm:$0xf]
      %v1220 = vld [vmem:[%s4 + $0x20c] sm:$0xf]
      %v1221 = vld [vmem:[%s4 + $0x210] sm:$0xf]
      %v1222 = vld [vmem:[%s4 + $0x214] sm:$0xf]
      %v1223 = vld [vmem:[%s4 + $0x218] sm:$0xf]
      %v1224 = vld [vmem:[%s4 + $0x21c] sm:$0xf]
      %v1225 = vld [vmem:[%s4 + $0x220] sm:$0xf]
      %v1226 = vld [vmem:[%s4 + $0x224] sm:$0xf]
      %v1227 = vld [vmem:[%s4 + $0x228] sm:$0xf]
      %v1228 = vld [vmem:[%s4 + $0x22c] sm:$0xf]
      %v1229 = vld [vmem:[%s4 + $0x230] sm:$0xf]
      %v1230 = vld [vmem:[%s4 + $0x234] sm:$0xf]
      %v1231 = vld [vmem:[%s4 + $0x238] sm:$0xf]
      %v1232 = vld [vmem:[%s4 + $0x23c] sm:$0xf]
      %v1233 = vld [vmem:[%s5] sm:$0x1]
      %v1235 = vlaneseq
      %v1236 = vshrl.u32 %v1235, 7
      %v1237 = vsub.s32 0, %v1236
      %v1238 = vrot.slane %v1233, %v1237
      %v1255 = vunpack.c.l.b16 %v1074
      %v1256 = vunpack.c.h.b16 %v1074
      %v1257 = vunpack.c.l.b16 %v1075
      %v1258 = vunpack.c.h.b16 %v1075
      %v1259 = vunpack.c.l.b16 %v1076
      %v1260 = vunpack.c.h.b16 %v1076
      %v1261 = vunpack.c.l.b16 %v1077
      %v1262 = vunpack.c.h.b16 %v1077
      %v1263 = vunpack.c.l.b16 %v1078
      %v1264 = vunpack.c.l.b16 %v1079
      %v1265 = vunpack.c.h.b16 %v1079
      %v1266 = vunpack.c.l.b16 %v1080
      %v1267 = vunpack.c.h.b16 %v1080
      %v1268 = vunpack.c.l.b16 %v1081
      %v1269 = vunpack.c.h.b16 %v1081
      %v1270 = vunpack.c.l.b16 %v1082
      %v1271 = vunpack.c.h.b16 %v1082
      %v1272 = vunpack.c.l.b16 %v1083
      %v1273 = vunpack.c.l.b16 %v1084
      %v1274 = vunpack.c.h.b16 %v1084
      %v1275 = vunpack.c.l.b16 %v1085
      %v1276 = vunpack.c.h.b16 %v1085
      %v1277 = vunpack.c.l.b16 %v1086
      %v1278 = vunpack.c.h.b16 %v1086
      %v1279 = vunpack.c.l.b16 %v1087
      %v1280 = vunpack.c.h.b16 %v1087
      %v1281 = vunpack.c.l.b16 %v1088
      %v1282 = vpack.c.b16 %v1264, %v1255
      %v1283 = vpack.c.b16 %v1265, %v1256
      %v1284 = vpack.c.b16 %v1266, %v1257
      %v1285 = vpack.c.b16 %v1267, %v1258
      %v1286 = vpack.c.b16 %v1268, %v1259
      %v1287 = vpack.c.b16 %v1269, %v1260
      %v1288 = vpack.c.b16 %v1270, %v1261
      %v1289 = vpack.c.b16 %v1271, %v1262
      %v1290 = vpack.c.b16 %v1272, %v1263
      %v1291 = vpack.c.b16 %v1273, %v1273
      %v1292 = vpack.c.b16 %v1274, %v1274
      %v1293 = vpack.c.b16 %v1275, %v1275
      %v1294 = vpack.c.b16 %v1276, %v1276
      %v1295 = vpack.c.b16 %v1277, %v1277
      %v1296 = vpack.c.b16 %v1278, %v1278
      %v1297 = vpack.c.b16 %v1279, %v1279
      %v1298 = vpack.c.b16 %v1280, %v1280
      %v1299 = vpack.c.b16 %v1281, %v1281
      %v1462 = vunpack.c.l.b16 %v1089
      %v1463 = vunpack.c.l.b16 %v1090
      %v1464 = vunpack.c.l.b16 %v1091
      %v1465 = vunpack.c.l.b16 %v1092
      %v1466 = vunpack.c.l.b16 %v1093
      %v1467 = vunpack.c.l.b16 %v1094
      %v1468 = vunpack.c.l.b16 %v1095
      %v1469 = vunpack.c.l.b16 %v1096
      %v1470 = vunpack.c.l.b16 %v1097
      %v1471 = vunpack.c.l.b16 %v1098
      %v1472 = vunpack.c.l.b16 %v1099
      %v1473 = vunpack.c.l.b16 %v1100
      %v1474 = vunpack.c.l.b16 %v1101
      %v1475 = vunpack.c.l.b16 %v1102
      %v1476 = vunpack.c.l.b16 %v1103
      %v1477 = vunpack.c.l.b16 %v1104
      %v1478 = vunpack.c.l.b16 %v1105
      %v1479 = vunpack.c.l.b16 %v1106
      %v1480 = vunpack.c.l.b16 %v1107
      %v1481 = vunpack.c.l.b16 %v1108
      %v1482 = vunpack.c.l.b16 %v1109
      %v1483 = vunpack.c.l.b16 %v1110
      %v1484 = vunpack.c.l.b16 %v1111
      %v1485 = vunpack.c.l.b16 %v1112
      %v1486 = vunpack.c.l.b16 %v1113
      %v1487 = vunpack.c.l.b16 %v1114
      %v1488 = vunpack.c.l.b16 %v1115
      %v1489 = vunpack.c.l.b16 %v1116
      %v1490 = vunpack.c.l.b16 %v1117
      %v1491 = vunpack.c.l.b16 %v1118
      %v1492 = vunpack.c.l.b16 %v1119
      %v1493 = vunpack.c.l.b16 %v1120
      %v1494 = vunpack.c.l.b16 %v1121
      %v1495 = vunpack.c.l.b16 %v1122
      %v1496 = vunpack.c.l.b16 %v1123
      %v1497 = vunpack.c.l.b16 %v1124
      %v1498 = vunpack.c.l.b16 %v1125
      %v1499 = vunpack.c.l.b16 %v1126
      %v1500 = vunpack.c.l.b16 %v1127
      %v1501 = vunpack.c.l.b16 %v1128
      %v1502 = vunpack.c.l.b16 %v1129
      %v1503 = vunpack.c.l.b16 %v1130
      %v1504 = vunpack.c.l.b16 %v1131
      %v1505 = vunpack.c.l.b16 %v1132
      %v1506 = vunpack.c.l.b16 %v1133
      %v1507 = vunpack.c.l.b16 %v1134
      %v1508 = vunpack.c.l.b16 %v1135
      %v1509 = vunpack.c.l.b16 %v1136
      %v1510 = vunpack.c.l.b16 %v1137
      %v1511 = vunpack.c.l.b16 %v1138
      %v1512 = vunpack.c.l.b16 %v1139
      %v1513 = vunpack.c.l.b16 %v1140
      %v1514 = vunpack.c.l.b16 %v1141
      %v1515 = vunpack.c.l.b16 %v1142
      %v1516 = vunpack.c.l.b16 %v1143
      %v1517 = vunpack.c.l.b16 %v1144
      %v1518 = vunpack.c.l.b16 %v1145
      %v1519 = vunpack.c.l.b16 %v1146
      %v1520 = vunpack.c.l.b16 %v1147
      %v1521 = vunpack.c.l.b16 %v1148
      %v1522 = vunpack.c.l.b16 %v1149
      %v1523 = vunpack.c.l.b16 %v1150
      %v1524 = vunpack.c.l.b16 %v1151
      %v1525 = vunpack.c.l.b16 %v1152
      %v1526 = vunpack.c.l.b16 %v1153
      %v1527 = vunpack.c.l.b16 %v1154
      %v1528 = vunpack.c.l.b16 %v1155
      %v1529 = vunpack.c.l.b16 %v1156
      %v1530 = vunpack.c.l.b16 %v1157
      %v1531 = vunpack.c.l.b16 %v1158
      %v1532 = vunpack.c.l.b16 %v1159
      %v1533 = vunpack.c.l.b16 %v1160
      %v1534 = vunpack.c.l.b16 %v1161
      %v1535 = vunpack.c.l.b16 %v1162
      %v1536 = vunpack.c.l.b16 %v1163
      %v1537 = vunpack.c.l.b16 %v1164
      %v1538 = vunpack.c.l.b16 %v1165
      %v1539 = vunpack.c.l.b16 %v1166
      %v1540 = vunpack.c.l.b16 %v1167
      %v1541 = vunpack.c.l.b16 %v1168
      %v1542 = vunpack.c.l.b16 %v1169
      %v1543 = vunpack.c.l.b16 %v1170
      %v1544 = vunpack.c.l.b16 %v1171
      %v1545 = vunpack.c.l.b16 %v1172
      %v1546 = vunpack.c.l.b16 %v1173
      %v1547 = vunpack.c.l.b16 %v1174
      %v1548 = vunpack.c.l.b16 %v1175
      %v1549 = vunpack.c.l.b16 %v1176
      %v1550 = vunpack.c.l.b16 %v1177
      %v1551 = vunpack.c.l.b16 %v1178
      %v1552 = vunpack.c.l.b16 %v1179
      %v1553 = vunpack.c.l.b16 %v1180
      %v1554 = vunpack.c.l.b16 %v1181
      %v1555 = vunpack.c.l.b16 %v1182
      %v1556 = vunpack.c.l.b16 %v1183
      %v1557 = vunpack.c.l.b16 %v1184
      %v1558 = vunpack.c.l.b16 %v1185
      %v1559 = vunpack.c.l.b16 %v1186
      %v1560 = vunpack.c.l.b16 %v1187
      %v1561 = vunpack.c.l.b16 %v1188
      %v1562 = vunpack.c.l.b16 %v1189
      %v1563 = vunpack.c.l.b16 %v1190
      %v1564 = vunpack.c.l.b16 %v1191
      %v1565 = vunpack.c.l.b16 %v1192
      %v1566 = vunpack.c.l.b16 %v1193
      %v1567 = vunpack.c.l.b16 %v1194
      %v1568 = vunpack.c.l.b16 %v1195
      %v1569 = vunpack.c.l.b16 %v1196
      %v1570 = vunpack.c.l.b16 %v1197
      %v1571 = vunpack.c.l.b16 %v1198
      %v1572 = vunpack.c.l.b16 %v1199
      %v1573 = vunpack.c.l.b16 %v1200
      %v1574 = vunpack.c.l.b16 %v1201
      %v1575 = vunpack.c.l.b16 %v1202
      %v1576 = vunpack.c.l.b16 %v1203
      %v1577 = vunpack.c.l.b16 %v1204
      %v1578 = vunpack.c.l.b16 %v1205
      %v1579 = vunpack.c.l.b16 %v1206
      %v1580 = vunpack.c.l.b16 %v1207
      %v1581 = vunpack.c.l.b16 %v1208
      %v1582 = vunpack.c.l.b16 %v1209
      %v1583 = vunpack.c.l.b16 %v1210
      %v1584 = vunpack.c.l.b16 %v1211
      %v1585 = vunpack.c.l.b16 %v1212
      %v1586 = vunpack.c.l.b16 %v1213
      %v1587 = vunpack.c.l.b16 %v1214
      %v1588 = vunpack.c.l.b16 %v1215
      %v1589 = vunpack.c.l.b16 %v1216
      %v1590 = vunpack.c.l.b16 %v1217
      %v1591 = vunpack.c.l.b16 %v1218
      %v1592 = vunpack.c.l.b16 %v1219
      %v1593 = vunpack.c.l.b16 %v1220
      %v1594 = vunpack.c.l.b16 %v1221
      %v1595 = vunpack.c.l.b16 %v1222
      %v1596 = vunpack.c.l.b16 %v1223
      %v1597 = vunpack.c.l.b16 %v1224
      %v1598 = vunpack.c.l.b16 %v1225
      %v1599 = vunpack.c.l.b16 %v1226
      %v1600 = vunpack.c.l.b16 %v1227
      %v1601 = vunpack.c.l.b16 %v1228
      %v1602 = vunpack.c.l.b16 %v1229
      %v1603 = vunpack.c.l.b16 %v1230
      %v1604 = vunpack.c.l.b16 %v1231
      %v1605 = vunpack.c.l.b16 %v1232
      %v1606 = vpack.c.b16 %v1463, %v1462
      %v1607 = vpack.c.b16 %v1465, %v1464
      %v1608 = vpack.c.b16 %v1467, %v1466
      %v1609 = vpack.c.b16 %v1469, %v1468
      %v1610 = vpack.c.b16 %v1471, %v1470
      %v1611 = vpack.c.b16 %v1473, %v1472
      %v1612 = vpack.c.b16 %v1475, %v1474
      %v1613 = vpack.c.b16 %v1477, %v1476
      %v1614 = vpack.c.b16 %v1479, %v1478
      %v1615 = vpack.c.b16 %v1481, %v1480
      %v1616 = vpack.c.b16 %v1483, %v1482
      %v1617 = vpack.c.b16 %v1485, %v1484
      %v1618 = vpack.c.b16 %v1487, %v1486
      %v1619 = vpack.c.b16 %v1489, %v1488
      %v1620 = vpack.c.b16 %v1491, %v1490
      %v1621 = vpack.c.b16 %v1493, %v1492
      %v1622 = vpack.c.b16 %v1495, %v1494
      %v1623 = vpack.c.b16 %v1497, %v1496
      %v1624 = vpack.c.b16 %v1499, %v1498
      %v1625 = vpack.c.b16 %v1501, %v1500
      %v1626 = vpack.c.b16 %v1503, %v1502
      %v1627 = vpack.c.b16 %v1505, %v1504
      %v1628 = vpack.c.b16 %v1507, %v1506
      %v1629 = vpack.c.b16 %v1509, %v1508
      %v1630 = vpack.c.b16 %v1511, %v1510
      %v1631 = vpack.c.b16 %v1513, %v1512
      %v1632 = vpack.c.b16 %v1515, %v1514
      %v1633 = vpack.c.b16 %v1517, %v1516
      %v1634 = vpack.c.b16 %v1519, %v1518
      %v1635 = vpack.c.b16 %v1521, %v1520
      %v1636 = vpack.c.b16 %v1523, %v1522
      %v1637 = vpack.c.b16 %v1525, %v1524
      %v1638 = vpack.c.b16 %v1527, %v1526
      %v1639 = vpack.c.b16 %v1529, %v1528
      %v1640 = vpack.c.b16 %v1531, %v1530
      %v1641 = vpack.c.b16 %v1533, %v1532
      %v1642 = vpack.c.b16 %v1535, %v1534
      %v1643 = vpack.c.b16 %v1537, %v1536
      %v1644 = vpack.c.b16 %v1539, %v1538
      %v1645 = vpack.c.b16 %v1541, %v1540
      %v1646 = vpack.c.b16 %v1543, %v1542
      %v1647 = vpack.c.b16 %v1545, %v1544
      %v1648 = vpack.c.b16 %v1547, %v1546
      %v1649 = vpack.c.b16 %v1549, %v1548
      %v1650 = vpack.c.b16 %v1551, %v1550
      %v1651 = vpack.c.b16 %v1553, %v1552
      %v1652 = vpack.c.b16 %v1555, %v1554
      %v1653 = vpack.c.b16 %v1557, %v1556
      %v1654 = vpack.c.b16 %v1559, %v1558
      %v1655 = vpack.c.b16 %v1561, %v1560
      %v1656 = vpack.c.b16 %v1563, %v1562
      %v1657 = vpack.c.b16 %v1565, %v1564
      %v1658 = vpack.c.b16 %v1567, %v1566
      %v1659 = vpack.c.b16 %v1569, %v1568
      %v1660 = vpack.c.b16 %v1571, %v1570
      %v1661 = vpack.c.b16 %v1573, %v1572
      %v1662 = vpack.c.b16 %v1575, %v1574
      %v1663 = vpack.c.b16 %v1577, %v1576
      %v1664 = vpack.c.b16 %v1579, %v1578
      %v1665 = vpack.c.b16 %v1581, %v1580
      %v1666 = vpack.c.b16 %v1583, %v1582
      %v1667 = vpack.c.b16 %v1585, %v1584
      %v1668 = vpack.c.b16 %v1587, %v1586
      %v1669 = vpack.c.b16 %v1589, %v1588
      %v1670 = vpack.c.b16 %v1591, %v1590
      %v1671 = vpack.c.b16 %v1593, %v1592
      %v1672 = vpack.c.b16 %v1595, %v1594
      %v1673 = vpack.c.b16 %v1597, %v1596
      %v1674 = vpack.c.b16 %v1599, %v1598
      %v1675 = vpack.c.b16 %v1601, %v1600
      %v1676 = vpack.c.b16 %v1603, %v1602
      %v1677 = vpack.c.b16 %v1605, %v1604
      %1750 = vmatprep.subr.bf16.mxu0 0
      %1751 = vmatpush1.bf16.msra.mxu0 %v1606
      %1752 = vmatprep.subr.bf16.mxu0 0
      %1753 = vmatpush1.bf16.msra.mxu0 %v1607
      %1754 = vmatprep.subr.bf16.mxu0 0
      %1755 = vmatpush1.bf16.msra.mxu0 %v1608
      %1756 = vmatprep.subr.bf16.mxu0 0
      %1757 = vmatpush1.bf16.msra.mxu0 %v1609
      %1758 = vmatprep.subr.bf16.mxu0 0
      %1759 = vmatpush1.bf16.msra.mxu0 %v1610
      %1760 = vmatprep.subr.bf16.mxu0 0
      %1761 = vmatpush1.bf16.msra.mxu0 %v1611
      %1762 = vmatprep.subr.bf16.mxu0 0
      %1763 = vmatpush1.bf16.msra.mxu0 %v1612
      %1764 = vmatprep.subr.bf16.mxu0 0
      %1765 = vmatpush1.bf16.msra.mxu0 %v1613
      %1766 = vmatprep.subr.bf16.mxu0 0
      %1767 = vmatpush1.bf16.msra.mxu0 %v1614
      %1768 = vmatprep.subr.bf16.mxu0 0
      %1769 = vmatpush1.bf16.msra.mxu0 %v1615
      %1770 = vmatprep.subr.bf16.mxu0 0
      %1771 = vmatpush1.bf16.msra.mxu0 %v1616
      %1772 = vmatprep.subr.bf16.mxu0 0
      %1773 = vmatpush1.bf16.msra.mxu0 %v1617
      %1774 = vmatprep.subr.bf16.mxu0 0
      %1775 = vmatpush1.bf16.msra.mxu0 %v1618
      %1776 = vmatprep.subr.bf16.mxu0 0
      %1777 = vmatpush1.bf16.msra.mxu0 %v1619
      %1778 = vmatprep.subr.bf16.mxu0 0
      %1779 = vmatpush1.bf16.msra.mxu0 %v1620
      %1780 = vmatprep.subr.bf16.mxu0 0
      %1781 = vmatpush1.bf16.msra.mxu0 %v1621
      %1782 = vmatprep.mubr.bf16.mxu0 %v1283
      %1783 = vmatmul.mubr.bf16.gmra.mrb[0].mxu0 %v1282
      %v1784 = vpop.f32.mrb[0].mxu0
      %v1785 = vadd.f32 %v1238, %v1784
      %v1786 = vpop.f32.mrb[0].mxu0
      %v1787 = vpop.f32.mrb[0].mxu0
      %v1788 = vadd.f32 %v1238, %v1787
      %v1789 = vpop.f32.mrb[0].mxu0
      %1790 = vmatprep.mubr.bf16.mxu0 %v1292
      %1791 = vmatmul.mubr.bf16.gmra.mrb[0].mxu0 %v1291
      %v1792 = vpop.f32.mrb[0].mxu0
      %v1793 = vadd.f32 %v1238, %v1792
      %v1794 = vpop.f32.mrb[0].mxu0
      %v1795 = vpop.f32.mrb[0].mxu0
      %v1796 = vpop.f32.mrb[0].mxu0
      %1797 = vdwg.mxu0
      %1798 = vmatprep.subr.bf16.mxu0 0
      %1799 = vmatpush1.bf16.msra.mxu0 %v1622
      %1800 = vmatprep.subr.bf16.mxu0 0
      %1801 = vmatpush1.bf16.msra.mxu0 %v1623
      %1802 = vmatprep.subr.bf16.mxu0 0
      %1803 = vmatpush1.bf16.msra.mxu0 %v1624
      %1804 = vmatprep.subr.bf16.mxu0 0
      %1805 = vmatpush1.bf16.msra.mxu0 %v1625
      %1806 = vmatprep.subr.bf16.mxu0 0
      %1807 = vmatpush1.bf16.msra.mxu0 %v1626
      %1808 = vmatprep.subr.bf16.mxu0 0
      %1809 = vmatpush1.bf16.msra.mxu0 %v1627
      %1810 = vmatprep.subr.bf16.mxu0 0
      %1811 = vmatpush1.bf16.msra.mxu0 %v1628
      %1812 = vmatprep.subr.bf16.mxu0 0
      %1813 = vmatpush1.bf16.msra.mxu0 %v1629
      %1814 = vmatprep.subr.bf16.mxu0 0
      %1815 = vmatpush1.bf16.msra.mxu0 %v1630
      %1816 = vmatprep.subr.bf16.mxu0 0
      %1817 = vmatpush1.bf16.msra.mxu0 %v1631
      %1818 = vmatprep.subr.bf16.mxu0 0
      %1819 = vmatpush1.bf16.msra.mxu0 %v1632
      %1820 = vmatprep.subr.bf16.mxu0 0
      %1821 = vmatpush1.bf16.msra.mxu0 %v1633
      %1822 = vmatprep.subr.bf16.mxu0 0
      %1823 = vmatpush1.bf16.msra.mxu0 %v1634
      %1824 = vmatprep.subr.bf16.mxu0 0
      %1825 = vmatpush1.bf16.msra.mxu0 %v1635
      %1826 = vmatprep.subr.bf16.mxu0 0
      %1827 = vmatpush1.bf16.msra.mxu0 %v1636
      %1828 = vmatprep.subr.bf16.mxu0 0
      %1829 = vmatpush1.bf16.msra.mxu0 %v1637
      %1830 = vmatprep.mubr.bf16.mxu0 %v1285
      %1831 = vmatmul.mubr.bf16.gmra.mrb[0].mxu0 %v1284
      %v1832 = vpop.f32.mrb[0].mxu0
      %v1833 = vadd.f32 %v1785, %v1832
      %v1834 = vpop.f32.mrb[0].mxu0
      %v1835 = vpop.f32.mrb[0].mxu0
      %v1836 = vadd.f32 %v1788, %v1835
      %v1837 = vpop.f32.mrb[0].mxu0
      %1838 = vmatprep.mubr.bf16.mxu0 %v1294
      %1839 = vmatmul.mubr.bf16.gmra.mrb[0].mxu0 %v1293
      %v1840 = vpop.f32.mrb[0].mxu0
      %v1841 = vadd.f32 %v1793, %v1840
      %v1842 = vpop.f32.mrb[0].mxu0
      %v1843 = vpop.f32.mrb[0].mxu0
      %v1844 = vpop.f32.mrb[0].mxu0
      %1845 = vdwg.mxu0
      %1846 = vmatprep.subr.bf16.mxu0 0
      %1847 = vmatpush1.bf16.msra.mxu0 %v1638
      %1848 = vmatprep.subr.bf16.mxu0 0
      %1849 = vmatpush1.bf16.msra.mxu0 %v1639
      %1850 = vmatprep.subr.bf16.mxu0 0
      %1851 = vmatpush1.bf16.msra.mxu0 %v1640
      %1852 = vmatprep.subr.bf16.mxu0 0
      %1853 = vmatpush1.bf16.msra.mxu0 %v1641
      %1854 = vmatprep.subr.bf16.mxu0 0
      %1855 = vmatpush1.bf16.msra.mxu0 %v1642
      %1856 = vmatprep.subr.bf16.mxu0 0
      %1857 = vmatpush1.bf16.msra.mxu0 %v1643
      %1858 = vmatprep.subr.bf16.mxu0 0
      %1859 = vmatpush1.bf16.msra.mxu0 %v1644
      %1860 = vmatprep.subr.bf16.mxu0 0
      %1861 = vmatpush1.bf16.msra.mxu0 %v1645
      %1862 = vmatprep.subr.bf16.mxu0 0
      %1863 = vmatpush1.bf16.msra.mxu0 %v1646
      %1864 = vmatprep.subr.bf16.mxu0 0
      %1865 = vmatpush1.bf16.msra.mxu0 %v1647
      %1866 = vmatprep.subr.bf16.mxu0 0
      %1867 = vmatpush1.bf16.msra.mxu0 %v1648
      %1868 = vmatprep.subr.bf16.mxu0 0
      %1869 = vmatpush1.bf16.msra.mxu0 %v1649
      %1870 = vmatprep.subr.bf16.mxu0 0
      %1871 = vmatpush1.bf16.msra.mxu0 %v1650
      %1872 = vmatprep.subr.bf16.mxu0 0
      %1873 = vmatpush1.bf16.msra.mxu0 %v1651
      %1874 = vmatprep.subr.bf16.mxu0 0
      %1875 = vmatpush1.bf16.msra.mxu0 %v1652
      %1876 = vmatprep.subr.bf16.mxu0 0
      %1877 = vmatpush1.bf16.msra.mxu0 %v1653
      %1878 = vmatprep.mubr.bf16.mxu0 %v1287
      %1879 = vmatmul.mubr.bf16.gmra.mrb[0].mxu0 %v1286
      %v1880 = vpop.f32.mrb[0].mxu0
      %v1881 = vadd.f32 %v1833, %v1880
      %v1882 = vpop.f32.mrb[0].mxu0
      %v1883 = vpop.f32.mrb[0].mxu0
      %v1884 = vadd.f32 %v1836, %v1883
      %v1885 = vpop.f32.mrb[0].mxu0
      %1886 = vmatprep.mubr.bf16.mxu0 %v1296
      %1887 = vmatmul.mubr.bf16.gmra.mrb[0].mxu0 %v1295
      %v1888 = vpop.f32.mrb[0].mxu0
      %v1889 = vadd.f32 %v1841, %v1888
      %v1890 = vpop.f32.mrb[0].mxu0
      %v1891 = vpop.f32.mrb[0].mxu0
      %v1892 = vpop.f32.mrb[0].mxu0
      %1893 = vdwg.mxu0
      %1894 = vmatprep.subr.bf16.mxu0 0
      %1895 = vmatpush1.bf16.msra.mxu0 %v1654
      %1896 = vmatprep.subr.bf16.mxu0 0
      %1897 = vmatpush1.bf16.msra.mxu0 %v1655
      %1898 = vmatprep.subr.bf16.mxu0 0
      %1899 = vmatpush1.bf16.msra.mxu0 %v1656
      %1900 = vmatprep.subr.bf16.mxu0 0
      %1901 = vmatpush1.bf16.msra.mxu0 %v1657
      %1902 = vmatprep.subr.bf16.mxu0 0
      %1903 = vmatpush1.bf16.msra.mxu0 %v1658
      %1904 = vmatprep.subr.bf16.mxu0 0
      %1905 = vmatpush1.bf16.msra.mxu0 %v1659
      %1906 = vmatprep.subr.bf16.mxu0 0
      %1907 = vmatpush1.bf16.msra.mxu0 %v1660
      %1908 = vmatprep.subr.bf16.mxu0 0
      %1909 = vmatpush1.bf16.msra.mxu0 %v1661
      %1910 = vmatprep.subr.bf16.mxu0 0
      %1911 = vmatpush1.bf16.msra.mxu0 %v1662
      %1912 = vmatprep.subr.bf16.mxu0 0
      %1913 = vmatpush1.bf16.msra.mxu0 %v1663
      %1914 = vmatprep.subr.bf16.mxu0 0
      %1915 = vmatpush1.bf16.msra.mxu0 %v1664
      %1916 = vmatprep.subr.bf16.mxu0 0
      %1917 = vmatpush1.bf16.msra.mxu0 %v1665
      %1918 = vmatprep.subr.bf16.mxu0 0
      %1919 = vmatpush1.bf16.msra.mxu0 %v1666
      %1920 = vmatprep.subr.bf16.mxu0 0
      %1921 = vmatpush1.bf16.msra.mxu0 %v1667
      %1922 = vmatprep.subr.bf16.mxu0 0
      %1923 = vmatpush1.bf16.msra.mxu0 %v1668
      %1924 = vmatprep.subr.bf16.mxu0 0
      %1925 = vmatpush1.bf16.msra.mxu0 %v1669
      %1926 = vmatprep.mubr.bf16.mxu0 %v1289
      %1927 = vmatmul.mubr.bf16.gmra.mrb[0].mxu0 %v1288
      %v1928 = vpop.f32.mrb[0].mxu0
      %v1929 = vadd.f32 %v1881, %v1928
      %v1930 = vpop.f32.mrb[0].mxu0
      %v1931 = vpop.f32.mrb[0].mxu0
      %v1932 = vadd.f32 %v1884, %v1931
      %v1933 = vpop.f32.mrb[0].mxu0
      %1934 = vmatprep.mubr.bf16.mxu0 %v1298
      %1935 = vmatmul.mubr.bf16.gmra.mrb[0].mxu0 %v1297
      %v1936 = vpop.f32.mrb[0].mxu0
      %v1937 = vadd.f32 %v1889, %v1936
      %v1938 = vpop.f32.mrb[0].mxu0
      %v1939 = vpop.f32.mrb[0].mxu0
      %v1940 = vpop.f32.mrb[0].mxu0
      %1941 = vdwg.mxu0
      %1942 = vmatprep.subr.bf16.mxu0 0
      %1943 = vmatpush1.bf16.msra.mxu0 %v1670
      %1944 = vmatprep.subr.bf16.mxu0 0
      %1945 = vmatpush1.bf16.msra.mxu0 %v1671
      %1946 = vmatprep.subr.bf16.mxu0 0
      %1947 = vmatpush1.bf16.msra.mxu0 %v1672
      %1948 = vmatprep.subr.bf16.mxu0 0
      %1949 = vmatpush1.bf16.msra.mxu0 %v1673
      %1950 = vmatprep.subr.bf16.mxu0 0
      %1951 = vmatpush1.bf16.msra.mxu0 %v1674
      %1952 = vmatprep.subr.bf16.mxu0 0
      %1953 = vmatpush1.bf16.msra.mxu0 %v1675
      %1954 = vmatprep.subr.bf16.mxu0 0
      %1955 = vmatpush1.bf16.msra.mxu0 %v1676
      %1956 = vmatprep.subr.bf16.mxu0 0
      %1957 = vmatpush1.bf16.msra.mxu0 %v1677
      %1958 = vmatprep.subr.bf16.mxu0 0
      %1959 = vmatpush1.bf16.msra.mxu0 0
      %1960 = vmatprep.subr.bf16.mxu0 0
      %1961 = vmatpush1.bf16.msra.mxu0 0
      %1962 = vmatprep.subr.bf16.mxu0 0
      %1963 = vmatpush1.bf16.msra.mxu0 0
      %1964 = vmatprep.subr.bf16.mxu0 0
      %1965 = vmatpush1.bf16.msra.mxu0 0
      %1966 = vmatprep.subr.bf16.mxu0 0
      %1967 = vmatpush1.bf16.msra.mxu0 0
      %1968 = vmatprep.subr.bf16.mxu0 0
      %1969 = vmatpush1.bf16.msra.mxu0 0
      %1970 = vmatprep.subr.bf16.mxu0 0
      %1971 = vmatpush1.bf16.msra.mxu0 0
      %1972 = vmatprep.subr.bf16.mxu0 0
      %1973 = vmatpush1.bf16.msra.mxu0 0
      %1974 = vmatprep.mubr.bf16.mxu0 0
      %1975 = vmatmul.mubr.bf16.gmra.mrb[0].mxu0 %v1290
      %v1976 = vpop.f32.mrb[0].mxu0
      %v1977 = vadd.f32 %v1929, %v1976
      %v1978 = vpop.f32.mrb[0].mxu0
      %v1979 = vpop.f32.mrb[0].mxu0
      %v1980 = vadd.f32 %v1932, %v1979
      %v1981 = vpop.f32.mrb[0].mxu0
      %1982 = vmatprep.mubr.bf16.mxu0 0
      %1983 = vmatmul.mubr.bf16.gmra.mrb[0].mxu0 %v1299
      %v1984 = vpop.f32.mrb[0].mxu0
      %v1985 = vadd.f32 %v1937, %v1984
      %v1986 = vpop.f32.mrb[0].mxu0
      %v1987 = vpop.f32.mrb[0].mxu0
      %v1988 = vpop.f32.mrb[0].mxu0
      %1989 = vdwg.mxu0
      %v1990 = vmax.f32 %v1977, 0.0
      %v1991 = vmax.f32 %v1980, 0.0
      %v1992 = vmax.f32 %v1985, 0.0
      %v1993 = vpack.c.bf16 %v1991, %v1990
      %v1994 = vpack.c.bf16 %v1992, %v1992
      %v1995 = vld [vmem:[%s6] sm:$0xf]
      %v1996 = vld [vmem:[%s6 + $0x4] sm:$0xf]
      %v1997 = vld [vmem:[%s6 + $0x8] sm:$0xf]
      %v1998 = vld [vmem:[%s6 + $0xc] sm:$0xf]
      %v1999 = vld [vmem:[%s6 + $0x10] sm:$0x3]
      %v2005 = vunpack.c.l.b16 %v1995
      %v2006 = vunpack.c.l.b16 %v1996
      %v2007 = vunpack.c.l.b16 %v1997
      %v2008 = vunpack.c.l.b16 %v1998
      %v2009 = vunpack.c.l.b16 %v1999
      %v2010 = vpack.c.b16 %v2006, %v2005
      %v2011 = vpack.c.b16 %v2008, %v2007
      %v2012 = vpack.c.b16 %v2009, %v2009
      %vm2013 = vcmask 162816
      %v2015 = vsel %vm2013, %v2010, 0
      %v2018 = vsel %vm2013, %v2011, 0
      %v2021 = vsel %vm2013, %v2012, 0
      %vm2023 = vcmask 1041408
      %v2025 = vsel %vm2023, %v1994, 0
      %2027 = vmatprep.subr.bf16.mxu0 0
      %2028 = vmatpush1.bf16.msra.mxu0 %v1993
      %2029 = vmatprep.subr.bf16.mxu0 0
      %2030 = vmatpush1.bf16.msra.mxu0 %v2025
      %2031 = vmatprep.subr.bf16.mxu0 0
      %2032 = vmatpush1.bf16.msra.mxu0 0
      %2033 = vmatprep.subr.bf16.mxu0 0
      %2034 = vmatpush1.bf16.msra.mxu0 0
      %2035 = vmatprep.subr.bf16.mxu0 0
      %2036 = vmatpush1.bf16.msra.mxu0 0
      %2037 = vmatprep.subr.bf16.mxu0 0
      %2038 = vmatpush1.bf16.msra.mxu0 0
      %2039 = vmatprep.subr.bf16.mxu0 0
      %2040 = vmatpush1.bf16.msra.mxu0 0
      %2041 = vmatprep.subr.bf16.mxu0 0
      %2042 = vmatpush1.bf16.msra.mxu0 0
      %2043 = vmatprep.subr.bf16.mxu0 0
      %2044 = vmatpush1.bf16.msra.mxu0 0
      %2045 = vmatprep.subr.bf16.mxu0 0
      %2046 = vmatpush1.bf16.msra.mxu0 0
      %2047 = vmatprep.subr.bf16.mxu0 0
      %2048 = vmatpush1.bf16.msra.mxu0 0
      %2049 = vmatprep.subr.bf16.mxu0 0
      %2050 = vmatpush1.bf16.msra.mxu0 0
      %2051 = vmatprep.subr.bf16.mxu0 0
      %2052 = vmatpush1.bf16.msra.mxu0 0
      %2053 = vmatprep.subr.bf16.mxu0 0
      %2054 = vmatpush1.bf16.msra.mxu0 0
      %2055 = vmatprep.subr.bf16.mxu0 0
      %2056 = vmatpush1.bf16.msra.mxu0 0
      %2057 = vmatprep.subr.bf16.mxu0 0
      %2058 = vmatpush1.bf16.msra.mxu0 0
      %2059 = vmatprep.mubr.bf16.mxu0 0
      %2060 = vmatmul.mubr.bf16.gmra.mrb[0].mxu0 %v2015
      %v2061 = vpop.f32.mrb[0].mxu0
      %v2062 = vadd.f32 0.0, %v2061
      %v2063 = vpop.f32.mrb[0].mxu0
      %v2064 = vpop.f32.mrb[0].mxu0
      %v2065 = vadd.f32 0.0, %v2064
      %v2066 = vpop.f32.mrb[0].mxu0
      %2067 = vmatprep.mubr.bf16.mxu0 0
      %2068 = vmatmul.mubr.bf16.gmra.mrb[0].mxu0 %v2018
      %v2069 = vpop.f32.mrb[0].mxu0
      %v2070 = vadd.f32 0.0, %v2069
      %v2071 = vpop.f32.mrb[0].mxu0
      %v2072 = vpop.f32.mrb[0].mxu0
      %v2073 = vadd.f32 0.0, %v2072
      %v2074 = vpop.f32.mrb[0].mxu0
      %2075 = vmatprep.mubr.bf16.mxu0 0
      %2076 = vmatmul.mubr.bf16.gmra.mrb[0].mxu0 %v2021
      %v2077 = vpop.f32.mrb[0].mxu0
      %v2078 = vadd.f32 0.0, %v2077
      %v2079 = vpop.f32.mrb[0].mxu0
      %v2080 = vpop.f32.mrb[0].mxu0
      %v2081 = vpop.f32.mrb[0].mxu0
      %2082 = vdwg.mxu0
      %v2083 = vpack.c.bf16 %v2065, %v2062
      %v2084 = vpack.c.bf16 %v2073, %v2070
      %v2085 = vpack.c.bf16 %v2078, %v2078
      %v2089 = vunpack.c.l.b16 %v2083
      %v2090 = vunpack.c.h.b16 %v2083
      %v2091 = vunpack.c.l.b16 %v2084
      %v2092 = vunpack.c.h.b16 %v2084
      %v2093 = vunpack.c.l.b16 %v2085
      %v2094 = vpack.c.b16 %v2089, %v2089
      %v2095 = vpack.c.b16 %v2090, %v2090
      %v2096 = vpack.c.b16 %v2091, %v2091
      %v2097 = vpack.c.b16 %v2092, %v2092
      %v2098 = vpack.c.b16 %v2093, %v2093
      %2104 = vst [vmem:[#allocation4] sm:$0xf] %v2094
      %2105 = vst [vmem:[#allocation4 + $0x4] sm:$0xf] %v2095
      %2106 = vst [vmem:[#allocation4 + $0x8] sm:$0xf] %v2096
      %2107 = vst [vmem:[#allocation4 + $0xc] sm:$0xf] %v2097
      %2108 = vst [vmem:[#allocation4 + $0x10] sm:$0x3] %v2098
      %v2109 = vld [vmem:[#allocation4] sm:$0x7]
      %2110 = vst [vmem:[#allocation5] sm:$0x7] %v2109
      %v2111 = vld [vmem:[#allocation4 + $0x4] sm:$0xf]
      %v2113 = vshrl.u32 %v2111, 16
      %v2115 = vrot.slane %v2113, 4
      %v2116 = vshll.u32 %v2111, 16
      %v2118 = vrot.slane %v2116, 5
      %v2119 = vor.u32 %v2115, %v2118
      %v2120 = vrot.slane %v2119, 4
      %2122 = vst [vmem:[#allocation5 + $0x4] sm:$0x7] %v2120
      %v2123 = vld [vmem:[#allocation4] sm:$0xf]
      %v2125 = vshrl.u32 %v2123, 16
      %v2127 = vrot.slane %v2125, 4
      %v2128 = vshll.u32 %v2123, 16
      %v2130 = vrot.slane %v2128, 5
      %v2131 = vor.u32 %v2127, %v2130
      %v2132 = vrot.slane %v2131, 4
      %2134 = vst [vmem:[#allocation5 + $0x8] sm:$0x7] %v2132
      %v2135 = vld [vmem:[#allocation4 + $0x8] sm:$0xe]
      %v2137 = vrot.slane %v2135, 5
      %v2138 = vrot.slane %v2137, 4
      %2140 = vst [vmem:[#allocation5 + $0xc] sm:$0x7] %v2138
      %v2141 = vld [vmem:[#allocation4 + $0xc] sm:$0xe]
      %v2142 = vld [vmem:[#allocation4 + $0x10] sm:$0x1]
      %v2144 = vshrl.u32 %v2141, 16
      %v2146 = vrot.slane %v2144, 5
      %v2147 = vshll.u32 %v2141, 16
      %v2149 = vrot.slane %v2147, 6
      %v2150 = vor.u32 %v2146, %v2149
      %v2151 = vrot.slane %v2150, 4
      %v2153 = vshll.u32 %v2142, 16
      %v2155 = vrot.slane %v2153, 6
      %v2156 = vsel %vm902, %v2151, %v2155
      %2158 = vst [vmem:[#allocation5 + $0x10] sm:$0x7] %v2156
      %v2159 = vld [vmem:[#allocation4 + $0x8] sm:$0xe]
      %v2160 = vld [vmem:[#allocation4 + $0xc] sm:$0x1]
      %v2162 = vshrl.u32 %v2159, 16
      %v2164 = vrot.slane %v2162, 5
      %v2165 = vshll.u32 %v2159, 16
      %v2167 = vrot.slane %v2165, 6
      %v2168 = vor.u32 %v2164, %v2167
      %v2169 = vrot.slane %v2168, 4
      %v2171 = vshll.u32 %v2160, 16
      %v2173 = vrot.slane %v2171, 6
      %v2174 = vsel %vm902, %v2169, %v2173
      %2176 = vst [vmem:[#allocation5 + $0x14] sm:$0x7] %v2174
      %v2177 = vld [vmem:[#allocation4] sm:$0xe]
      %v2178 = vld [vmem:[#allocation4 + $0x4] sm:$0x1]
      %v2180 = vshrl.u32 %v2177, 16
      %v2182 = vrot.slane %v2180, 5
      %v2183 = vshll.u32 %v2177, 16
      %v2185 = vrot.slane %v2183, 6
      %v2186 = vor.u32 %v2182, %v2185
      %v2187 = vrot.slane %v2186, 4
      %v2189 = vshll.u32 %v2178, 16
      %v2191 = vrot.slane %v2189, 6
      %v2192 = vsel %vm902, %v2187, %v2191
      %2194 = vst [vmem:[#allocation5 + $0x18] sm:$0x7] %v2192
      %v2195 = vld [vmem:[#allocation4 + $0x4] sm:$0xc]
      %v2196 = vld [vmem:[#allocation4 + $0x8] sm:$0x1]
      %vm2199 = vcmask 1041408
      %vm2200 = vcmask 1045508
      %vm2201 = vmor %vm2199, %vm2200
      %v2202 = vrot.slane %v2195, 6
      %v2203 = vrot.slane %v2202, 4
      %v2204 = vrot.slane %v2196, 6
      %v2205 = vsel %vm2201, %v2203, %v2204
      %2207 = vst [vmem:[#allocation5 + $0x1c] sm:$0x7] %v2205
      %v2208 = vld [vmem:[#allocation4] sm:$0xc]
      %v2209 = vld [vmem:[#allocation4 + $0x4] sm:$0x1]
      %v2212 = vrot.slane %v2208, 6
      %v2213 = vrot.slane %v2212, 4
      %v2214 = vrot.slane %v2209, 6
      %v2215 = vsel %vm2201, %v2213, %v2214
      %2217 = vst [vmem:[#allocation5 + $0x20] sm:$0x7] %v2215
      %v2218 = vld [vmem:[#allocation5] sm:$0x77]
      %v2219 = vld [vmem:[#allocation5 + $0x8] sm:$0x77]
      %v2220 = vld [vmem:[#allocation5 + $0x10] sm:$0x77]
      %v2221 = vld [vmem:[#allocation5 + $0x18] sm:$0x77]
      %v2222 = vld [vmem:[#allocation5 + $0x20] sm:$0x7]
      %v2223 = vld [vmem:[%s7] sm:$0xf]
      %v2224 = vld [vmem:[%s7 + $0x4] sm:$0xf]
      %v2225 = vld [vmem:[%s7 + $0x8] sm:$0xf]
      %v2226 = vld [vmem:[%s7 + $0xc] sm:$0xf]
      %v2227 = vld [vmem:[%s7 + $0x10] sm:$0xf]
      %v2228 = vld [vmem:[%s7 + $0x14] sm:$0xf]
      %v2229 = vld [vmem:[%s7 + $0x18] sm:$0xf]
      %v2230 = vld [vmem:[%s7 + $0x1c] sm:$0xf]
      %v2231 = vld [vmem:[%s7 + $0x20] sm:$0xf]
      %v2232 = vld [vmem:[%s7 + $0x24] sm:$0xf]
      %v2233 = vld [vmem:[%s7 + $0x28] sm:$0xf]
      %v2234 = vld [vmem:[%s7 + $0x2c] sm:$0xf]
      %v2235 = vld [vmem:[%s7 + $0x30] sm:$0xf]
      %v2236 = vld [vmem:[%s7 + $0x34] sm:$0xf]
      %v2237 = vld [vmem:[%s7 + $0x38] sm:$0xf]
      %v2238 = vld [vmem:[%s7 + $0x3c] sm:$0xf]
      %v2239 = vld [vmem:[%s7 + $0x40] sm:$0xf]
      %v2240 = vld [vmem:[%s7 + $0x44] sm:$0xf]
      %v2241 = vld [vmem:[%s7 + $0x48] sm:$0xf]
      %v2242 = vld [vmem:[%s7 + $0x4c] sm:$0xf]
      %v2243 = vld [vmem:[%s7 + $0x50] sm:$0xf]
      %v2244 = vld [vmem:[%s7 + $0x54] sm:$0xf]
      %v2245 = vld [vmem:[%s7 + $0x58] sm:$0xf]
      %v2246 = vld [vmem:[%s7 + $0x5c] sm:$0xf]
      %v2247 = vld [vmem:[%s7 + $0x60] sm:$0xf]
      %v2248 = vld [vmem:[%s7 + $0x64] sm:$0xf]
      %v2249 = vld [vmem:[%s7 + $0x68] sm:$0xf]
      %v2250 = vld [vmem:[%s7 + $0x6c] sm:$0xf]
      %v2251 = vld [vmem:[%s7 + $0x70] sm:$0xf]
      %v2252 = vld [vmem:[%s7 + $0x74] sm:$0xf]
      %v2253 = vld [vmem:[%s7 + $0x78] sm:$0xf]
      %v2254 = vld [vmem:[%s7 + $0x7c] sm:$0xf]
      %v2255 = vld [vmem:[%s7 + $0x80] sm:$0xf]
      %v2256 = vld [vmem:[%s7 + $0x84] sm:$0xf]
      %v2257 = vld [vmem:[%s7 + $0x88] sm:$0xf]
      %v2258 = vld [vmem:[%s7 + $0x8c] sm:$0xf]
      %v2259 = vld [vmem:[%s7 + $0x90] sm:$0xf]
      %v2260 = vld [vmem:[%s7 + $0x94] sm:$0xf]
      %v2261 = vld [vmem:[%s7 + $0x98] sm:$0xf]
      %v2262 = vld [vmem:[%s7 + $0x9c] sm:$0xf]
      %v2263 = vld [vmem:[%s7 + $0xa0] sm:$0xf]
      %v2264 = vld [vmem:[%s7 + $0xa4] sm:$0xf]
      %v2265 = vld [vmem:[%s7 + $0xa8] sm:$0xf]
      %v2266 = vld [vmem:[%s7 + $0xac] sm:$0xf]
      %v2267 = vld [vmem:[%s7 + $0xb0] sm:$0xf]
      %v2268 = vld [vmem:[%s7 + $0xb4] sm:$0xf]
      %v2269 = vld [vmem:[%s7 + $0xb8] sm:$0xf]
      %v2270 = vld [vmem:[%s7 + $0xbc] sm:$0xf]
      %v2271 = vld [vmem:[%s7 + $0xc0] sm:$0xf]
      %v2272 = vld [vmem:[%s7 + $0xc4] sm:$0xf]
      %v2273 = vld [vmem:[%s7 + $0xc8] sm:$0xf]
      %v2274 = vld [vmem:[%s7 + $0xcc] sm:$0xf]
      %v2275 = vld [vmem:[%s7 + $0xd0] sm:$0xf]
      %v2276 = vld [vmem:[%s7 + $0xd4] sm:$0xf]
      %v2277 = vld [vmem:[%s7 + $0xd8] sm:$0xf]
      %v2278 = vld [vmem:[%s7 + $0xdc] sm:$0xf]
      %v2279 = vld [vmem:[%s7 + $0xe0] sm:$0xf]
      %v2280 = vld [vmem:[%s7 + $0xe4] sm:$0xf]
      %v2281 = vld [vmem:[%s7 + $0xe8] sm:$0xf]
      %v2282 = vld [vmem:[%s7 + $0xec] sm:$0xf]
      %v2283 = vld [vmem:[%s7 + $0xf0] sm:$0xf]
      %v2284 = vld [vmem:[%s7 + $0xf4] sm:$0xf]
      %v2285 = vld [vmem:[%s7 + $0xf8] sm:$0xf]
      %v2286 = vld [vmem:[%s7 + $0xfc] sm:$0xf]
      %v2287 = vld [vmem:[%s7 + $0x100] sm:$0xf]
      %v2288 = vld [vmem:[%s7 + $0x104] sm:$0xf]
      %v2289 = vld [vmem:[%s7 + $0x108] sm:$0xf]
      %v2290 = vld [vmem:[%s7 + $0x10c] sm:$0xf]
      %v2291 = vld [vmem:[%s7 + $0x110] sm:$0xf]
      %v2292 = vld [vmem:[%s7 + $0x114] sm:$0xf]
      %v2293 = vld [vmem:[%s7 + $0x118] sm:$0xf]
      %v2294 = vld [vmem:[%s7 + $0x11c] sm:$0xf]
      %v2295 = vld [vmem:[%s7 + $0x120] sm:$0xf]
      %v2296 = vld [vmem:[%s7 + $0x124] sm:$0xf]
      %v2297 = vld [vmem:[%s7 + $0x128] sm:$0xf]
      %v2298 = vld [vmem:[%s7 + $0x12c] sm:$0xf]
      %v2299 = vld [vmem:[%s7 + $0x130] sm:$0xf]
      %v2300 = vld [vmem:[%s7 + $0x134] sm:$0xf]
      %v2301 = vld [vmem:[%s7 + $0x138] sm:$0xf]
      %v2302 = vld [vmem:[%s7 + $0x13c] sm:$0xf]
      %v2303 = vld [vmem:[%s7 + $0x140] sm:$0xf]
      %v2304 = vld [vmem:[%s7 + $0x144] sm:$0xf]
      %v2305 = vld [vmem:[%s7 + $0x148] sm:$0xf]
      %v2306 = vld [vmem:[%s7 + $0x14c] sm:$0xf]
      %v2307 = vld [vmem:[%s7 + $0x150] sm:$0xf]
      %v2308 = vld [vmem:[%s7 + $0x154] sm:$0xf]
      %v2309 = vld [vmem:[%s7 + $0x158] sm:$0xf]
      %v2310 = vld [vmem:[%s7 + $0x15c] sm:$0xf]
      %v2311 = vld [vmem:[%s7 + $0x160] sm:$0xf]
      %v2312 = vld [vmem:[%s7 + $0x164] sm:$0xf]
      %v2313 = vld [vmem:[%s7 + $0x168] sm:$0xf]
      %v2314 = vld [vmem:[%s7 + $0x16c] sm:$0xf]
      %v2315 = vld [vmem:[%s7 + $0x170] sm:$0xf]
      %v2316 = vld [vmem:[%s7 + $0x174] sm:$0xf]
      %v2317 = vld [vmem:[%s7 + $0x178] sm:$0xf]
      %v2318 = vld [vmem:[%s7 + $0x17c] sm:$0xf]
      %v2319 = vld [vmem:[%s7 + $0x180] sm:$0xf]
      %v2320 = vld [vmem:[%s7 + $0x184] sm:$0xf]
      %v2321 = vld [vmem:[%s7 + $0x188] sm:$0xf]
      %v2322 = vld [vmem:[%s7 + $0x18c] sm:$0xf]
      %v2323 = vld [vmem:[%s7 + $0x190] sm:$0xf]
      %v2324 = vld [vmem:[%s7 + $0x194] sm:$0xf]
      %v2325 = vld [vmem:[%s7 + $0x198] sm:$0xf]
      %v2326 = vld [vmem:[%s7 + $0x19c] sm:$0xf]
      %v2327 = vld [vmem:[%s7 + $0x1a0] sm:$0xf]
      %v2328 = vld [vmem:[%s7 + $0x1a4] sm:$0xf]
      %v2329 = vld [vmem:[%s7 + $0x1a8] sm:$0xf]
      %v2330 = vld [vmem:[%s7 + $0x1ac] sm:$0xf]
      %v2331 = vld [vmem:[%s7 + $0x1b0] sm:$0xf]
      %v2332 = vld [vmem:[%s7 + $0x1b4] sm:$0xf]
      %v2333 = vld [vmem:[%s7 + $0x1b8] sm:$0xf]
      %v2334 = vld [vmem:[%s7 + $0x1bc] sm:$0xf]
      %v2335 = vld [vmem:[%s7 + $0x1c0] sm:$0xf]
      %v2336 = vld [vmem:[%s7 + $0x1c4] sm:$0xf]
      %v2337 = vld [vmem:[%s7 + $0x1c8] sm:$0xf]
      %v2338 = vld [vmem:[%s7 + $0x1cc] sm:$0xf]
      %v2339 = vld [vmem:[%s7 + $0x1d0] sm:$0xf]
      %v2340 = vld [vmem:[%s7 + $0x1d4] sm:$0xf]
      %v2341 = vld [vmem:[%s7 + $0x1d8] sm:$0xf]
      %v2342 = vld [vmem:[%s7 + $0x1dc] sm:$0xf]
      %v2343 = vld [vmem:[%s7 + $0x1e0] sm:$0xf]
      %v2344 = vld [vmem:[%s7 + $0x1e4] sm:$0xf]
      %v2345 = vld [vmem:[%s7 + $0x1e8] sm:$0xf]
      %v2346 = vld [vmem:[%s7 + $0x1ec] sm:$0xf]
      %v2347 = vld [vmem:[%s7 + $0x1f0] sm:$0xf]
      %v2348 = vld [vmem:[%s7 + $0x1f4] sm:$0xf]
      %v2349 = vld [vmem:[%s7 + $0x1f8] sm:$0xf]
      %v2350 = vld [vmem:[%s7 + $0x1fc] sm:$0xf]
      %v2351 = vld [vmem:[%s7 + $0x200] sm:$0xf]
      %v2352 = vld [vmem:[%s7 + $0x204] sm:$0xf]
      %v2353 = vld [vmem:[%s7 + $0x208] sm:$0xf]
      %v2354 = vld [vmem:[%s7 + $0x20c] sm:$0xf]
      %v2355 = vld [vmem:[%s7 + $0x210] sm:$0xf]
      %v2356 = vld [vmem:[%s7 + $0x214] sm:$0xf]
      %v2357 = vld [vmem:[%s7 + $0x218] sm:$0xf]
      %v2358 = vld [vmem:[%s7 + $0x21c] sm:$0xf]
      %v2359 = vld [vmem:[%s7 + $0x220] sm:$0xf]
      %v2360 = vld [vmem:[%s7 + $0x224] sm:$0xf]
      %v2361 = vld [vmem:[%s7 + $0x228] sm:$0xf]
      %v2362 = vld [vmem:[%s7 + $0x22c] sm:$0xf]
      %v2363 = vld [vmem:[%s7 + $0x230] sm:$0xf]
      %v2364 = vld [vmem:[%s7 + $0x234] sm:$0xf]
      %v2365 = vld [vmem:[%s7 + $0x238] sm:$0xf]
      %v2366 = vld [vmem:[%s7 + $0x23c] sm:$0xf]
      %v2367 = vld [vmem:[%s8] sm:$0x1]
      %v2369 = vlaneseq
      %v2370 = vshrl.u32 %v2369, 7
      %v2371 = vsub.s32 0, %v2370
      %v2372 = vrot.slane %v2367, %v2371
      %v2379 = vunpack.c.l.b16 %v2218
      %v2380 = vunpack.c.h.b16 %v2218
      %v2381 = vunpack.c.l.b16 %v2219
      %v2382 = vunpack.c.h.b16 %v2219
      %v2383 = vunpack.c.l.b16 %v2220
      %v2384 = vunpack.c.h.b16 %v2220
      %v2385 = vunpack.c.l.b16 %v2221
      %v2386 = vunpack.c.h.b16 %v2221
      %v2387 = vunpack.c.l.b16 %v2222
      %v2388 = vpack.c.b16 %v2379, %v2379
      %v2389 = vpack.c.b16 %v2380, %v2380
      %v2390 = vpack.c.b16 %v2381, %v2381
      %v2391 = vpack.c.b16 %v2382, %v2382
      %v2392 = vpack.c.b16 %v2383, %v2383
      %v2393 = vpack.c.b16 %v2384, %v2384
      %v2394 = vpack.c.b16 %v2385, %v2385
      %v2395 = vpack.c.b16 %v2386, %v2386
      %v2396 = vpack.c.b16 %v2387, %v2387
      %v2550 = vunpack.c.l.b16 %v2223
      %v2551 = vunpack.c.l.b16 %v2224
      %v2552 = vunpack.c.l.b16 %v2225
      %v2553 = vunpack.c.l.b16 %v2226
      %v2554 = vunpack.c.l.b16 %v2227
      %v2555 = vunpack.c.l.b16 %v2228
      %v2556 = vunpack.c.l.b16 %v2229
      %v2557 = vunpack.c.l.b16 %v2230
      %v2558 = vunpack.c.l.b16 %v2231
      %v2559 = vunpack.c.l.b16 %v2232
      %v2560 = vunpack.c.l.b16 %v2233
      %v2561 = vunpack.c.l.b16 %v2234
      %v2562 = vunpack.c.l.b16 %v2235
      %v2563 = vunpack.c.l.b16 %v2236
      %v2564 = vunpack.c.l.b16 %v2237
      %v2565 = vunpack.c.l.b16 %v2238
      %v2566 = vunpack.c.l.b16 %v2239
      %v2567 = vunpack.c.l.b16 %v2240
      %v2568 = vunpack.c.l.b16 %v2241
      %v2569 = vunpack.c.l.b16 %v2242
      %v2570 = vunpack.c.l.b16 %v2243
      %v2571 = vunpack.c.l.b16 %v2244
      %v2572 = vunpack.c.l.b16 %v2245
      %v2573 = vunpack.c.l.b16 %v2246
      %v2574 = vunpack.c.l.b16 %v2247
      %v2575 = vunpack.c.l.b16 %v2248
      %v2576 = vunpack.c.l.b16 %v2249
      %v2577 = vunpack.c.l.b16 %v2250
      %v2578 = vunpack.c.l.b16 %v2251
      %v2579 = vunpack.c.l.b16 %v2252
      %v2580 = vunpack.c.l.b16 %v2253
      %v2581 = vunpack.c.l.b16 %v2254
      %v2582 = vunpack.c.l.b16 %v2255
      %v2583 = vunpack.c.l.b16 %v2256
      %v2584 = vunpack.c.l.b16 %v2257
      %v2585 = vunpack.c.l.b16 %v2258
      %v2586 = vunpack.c.l.b16 %v2259
      %v2587 = vunpack.c.l.b16 %v2260
      %v2588 = vunpack.c.l.b16 %v2261
      %v2589 = vunpack.c.l.b16 %v2262
      %v2590 = vunpack.c.l.b16 %v2263
      %v2591 = vunpack.c.l.b16 %v2264
      %v2592 = vunpack.c.l.b16 %v2265
      %v2593 = vunpack.c.l.b16 %v2266
      %v2594 = vunpack.c.l.b16 %v2267
      %v2595 = vunpack.c.l.b16 %v2268
      %v2596 = vunpack.c.l.b16 %v2269
      %v2597 = vunpack.c.l.b16 %v2270
      %v2598 = vunpack.c.l.b16 %v2271
      %v2599 = vunpack.c.l.b16 %v2272
      %v2600 = vunpack.c.l.b16 %v2273
      %v2601 = vunpack.c.l.b16 %v2274
      %v2602 = vunpack.c.l.b16 %v2275
      %v2603 = vunpack.c.l.b16 %v2276
      %v2604 = vunpack.c.l.b16 %v2277
      %v2605 = vunpack.c.l.b16 %v2278
      %v2606 = vunpack.c.l.b16 %v2279
      %v2607 = vunpack.c.l.b16 %v2280
      %v2608 = vunpack.c.l.b16 %v2281
      %v2609 = vunpack.c.l.b16 %v2282
      %v2610 = vunpack.c.l.b16 %v2283
      %v2611 = vunpack.c.l.b16 %v2284
      %v2612 = vunpack.c.l.b16 %v2285
      %v2613 = vunpack.c.l.b16 %v2286
      %v2614 = vunpack.c.l.b16 %v2287
      %v2615 = vunpack.c.l.b16 %v2288
      %v2616 = vunpack.c.l.b16 %v2289
      %v2617 = vunpack.c.l.b16 %v2290
      %v2618 = vunpack.c.l.b16 %v2291
      %v2619 = vunpack.c.l.b16 %v2292
      %v2620 = vunpack.c.l.b16 %v2293
      %v2621 = vunpack.c.l.b16 %v2294
      %v2622 = vunpack.c.l.b16 %v2295
      %v2623 = vunpack.c.l.b16 %v2296
      %v2624 = vunpack.c.l.b16 %v2297
      %v2625 = vunpack.c.l.b16 %v2298
      %v2626 = vunpack.c.l.b16 %v2299
      %v2627 = vunpack.c.l.b16 %v2300
      %v2628 = vunpack.c.l.b16 %v2301
      %v2629 = vunpack.c.l.b16 %v2302
      %v2630 = vunpack.c.l.b16 %v2303
      %v2631 = vunpack.c.l.b16 %v2304
      %v2632 = vunpack.c.l.b16 %v2305
      %v2633 = vunpack.c.l.b16 %v2306
      %v2634 = vunpack.c.l.b16 %v2307
      %v2635 = vunpack.c.l.b16 %v2308
      %v2636 = vunpack.c.l.b16 %v2309
      %v2637 = vunpack.c.l.b16 %v2310
      %v2638 = vunpack.c.l.b16 %v2311
      %v2639 = vunpack.c.l.b16 %v2312
      %v2640 = vunpack.c.l.b16 %v2313
      %v2641 = vunpack.c.l.b16 %v2314
      %v2642 = vunpack.c.l.b16 %v2315
      %v2643 = vunpack.c.l.b16 %v2316
      %v2644 = vunpack.c.l.b16 %v2317
      %v2645 = vunpack.c.l.b16 %v2318
      %v2646 = vunpack.c.l.b16 %v2319
      %v2647 = vunpack.c.l.b16 %v2320
      %v2648 = vunpack.c.l.b16 %v2321
      %v2649 = vunpack.c.l.b16 %v2322
      %v2650 = vunpack.c.l.b16 %v2323
      %v2651 = vunpack.c.l.b16 %v2324
      %v2652 = vunpack.c.l.b16 %v2325
      %v2653 = vunpack.c.l.b16 %v2326
      %v2654 = vunpack.c.l.b16 %v2327
      %v2655 = vunpack.c.l.b16 %v2328
      %v2656 = vunpack.c.l.b16 %v2329
      %v2657 = vunpack.c.l.b16 %v2330
      %v2658 = vunpack.c.l.b16 %v2331
      %v2659 = vunpack.c.l.b16 %v2332
      %v2660 = vunpack.c.l.b16 %v2333
      %v2661 = vunpack.c.l.b16 %v2334
      %v2662 = vunpack.c.l.b16 %v2335
      %v2663 = vunpack.c.l.b16 %v2336
      %v2664 = vunpack.c.l.b16 %v2337
      %v2665 = vunpack.c.l.b16 %v2338
      %v2666 = vunpack.c.l.b16 %v2339
      %v2667 = vunpack.c.l.b16 %v2340
      %v2668 = vunpack.c.l.b16 %v2341
      %v2669 = vunpack.c.l.b16 %v2342
      %v2670 = vunpack.c.l.b16 %v2343
      %v2671 = vunpack.c.l.b16 %v2344
      %v2672 = vunpack.c.l.b16 %v2345
      %v2673 = vunpack.c.l.b16 %v2346
      %v2674 = vunpack.c.l.b16 %v2347
      %v2675 = vunpack.c.l.b16 %v2348
      %v2676 = vunpack.c.l.b16 %v2349
      %v2677 = vunpack.c.l.b16 %v2350
      %v2678 = vunpack.c.l.b16 %v2351
      %v2679 = vunpack.c.l.b16 %v2352
      %v2680 = vunpack.c.l.b16 %v2353
      %v2681 = vunpack.c.l.b16 %v2354
      %v2682 = vunpack.c.l.b16 %v2355
      %v2683 = vunpack.c.l.b16 %v2356
      %v2684 = vunpack.c.l.b16 %v2357
      %v2685 = vunpack.c.l.b16 %v2358
      %v2686 = vunpack.c.l.b16 %v2359
      %v2687 = vunpack.c.l.b16 %v2360
      %v2688 = vunpack.c.l.b16 %v2361
      %v2689 = vunpack.c.l.b16 %v2362
      %v2690 = vunpack.c.l.b16 %v2363
      %v2691 = vunpack.c.l.b16 %v2364
      %v2692 = vunpack.c.l.b16 %v2365
      %v2693 = vunpack.c.l.b16 %v2366
      %v2694 = vpack.c.b16 %v2551, %v2550
      %v2695 = vpack.c.b16 %v2553, %v2552
      %v2696 = vpack.c.b16 %v2555, %v2554
      %v2697 = vpack.c.b16 %v2557, %v2556
      %v2698 = vpack.c.b16 %v2559, %v2558
      %v2699 = vpack.c.b16 %v2561, %v2560
      %v2700 = vpack.c.b16 %v2563, %v2562
      %v2701 = vpack.c.b16 %v2565, %v2564
      %v2702 = vpack.c.b16 %v2567, %v2566
      %v2703 = vpack.c.b16 %v2569, %v2568
      %v2704 = vpack.c.b16 %v2571, %v2570
      %v2705 = vpack.c.b16 %v2573, %v2572
      %v2706 = vpack.c.b16 %v2575, %v2574
      %v2707 = vpack.c.b16 %v2577, %v2576
      %v2708 = vpack.c.b16 %v2579, %v2578
      %v2709 = vpack.c.b16 %v2581, %v2580
      %v2710 = vpack.c.b16 %v2583, %v2582
      %v2711 = vpack.c.b16 %v2585, %v2584
      %v2712 = vpack.c.b16 %v2587, %v2586
      %v2713 = vpack.c.b16 %v2589, %v2588
      %v2714 = vpack.c.b16 %v2591, %v2590
      %v2715 = vpack.c.b16 %v2593, %v2592
      %v2716 = vpack.c.b16 %v2595, %v2594
      %v2717 = vpack.c.b16 %v2597, %v2596
      %v2718 = vpack.c.b16 %v2599, %v2598
      %v2719 = vpack.c.b16 %v2601, %v2600
      %v2720 = vpack.c.b16 %v2603, %v2602
      %v2721 = vpack.c.b16 %v2605, %v2604
      %v2722 = vpack.c.b16 %v2607, %v2606
      %v2723 = vpack.c.b16 %v2609, %v2608
      %v2724 = vpack.c.b16 %v2611, %v2610
      %v2725 = vpack.c.b16 %v2613, %v2612
      %v2726 = vpack.c.b16 %v2615, %v2614
      %v2727 = vpack.c.b16 %v2617, %v2616
      %v2728 = vpack.c.b16 %v2619, %v2618
      %v2729 = vpack.c.b16 %v2621, %v2620
      %v2730 = vpack.c.b16 %v2623, %v2622
      %v2731 = vpack.c.b16 %v2625, %v2624
      %v2732 = vpack.c.b16 %v2627, %v2626
      %v2733 = vpack.c.b16 %v2629, %v2628
      %v2734 = vpack.c.b16 %v2631, %v2630
      %v2735 = vpack.c.b16 %v2633, %v2632
      %v2736 = vpack.c.b16 %v2635, %v2634
      %v2737 = vpack.c.b16 %v2637, %v2636
      %v2738 = vpack.c.b16 %v2639, %v2638
      %v2739 = vpack.c.b16 %v2641, %v2640
      %v2740 = vpack.c.b16 %v2643, %v2642
      %v2741 = vpack.c.b16 %v2645, %v2644
      %v2742 = vpack.c.b16 %v2647, %v2646
      %v2743 = vpack.c.b16 %v2649, %v2648
      %v2744 = vpack.c.b16 %v2651, %v2650
      %v2745 = vpack.c.b16 %v2653, %v2652
      %v2746 = vpack.c.b16 %v2655, %v2654
      %v2747 = vpack.c.b16 %v2657, %v2656
      %v2748 = vpack.c.b16 %v2659, %v2658
      %v2749 = vpack.c.b16 %v2661, %v2660
      %v2750 = vpack.c.b16 %v2663, %v2662
      %v2751 = vpack.c.b16 %v2665, %v2664
      %v2752 = vpack.c.b16 %v2667, %v2666
      %v2753 = vpack.c.b16 %v2669, %v2668
      %v2754 = vpack.c.b16 %v2671, %v2670
      %v2755 = vpack.c.b16 %v2673, %v2672
      %v2756 = vpack.c.b16 %v2675, %v2674
      %v2757 = vpack.c.b16 %v2677, %v2676
      %v2758 = vpack.c.b16 %v2679, %v2678
      %v2759 = vpack.c.b16 %v2681, %v2680
      %v2760 = vpack.c.b16 %v2683, %v2682
      %v2761 = vpack.c.b16 %v2685, %v2684
      %v2762 = vpack.c.b16 %v2687, %v2686
      %v2763 = vpack.c.b16 %v2689, %v2688
      %v2764 = vpack.c.b16 %v2691, %v2690
      %v2765 = vpack.c.b16 %v2693, %v2692
      %2838 = vmatprep.subr.bf16.mxu0 0
      %2839 = vmatpush1.bf16.msra.mxu0 %v2694
      %2840 = vmatprep.subr.bf16.mxu0 0
      %2841 = vmatpush1.bf16.msra.mxu0 %v2695
      %2842 = vmatprep.subr.bf16.mxu0 0
      %2843 = vmatpush1.bf16.msra.mxu0 %v2696
      %2844 = vmatprep.subr.bf16.mxu0 0
      %2845 = vmatpush1.bf16.msra.mxu0 %v2697
      %2846 = vmatprep.subr.bf16.mxu0 0
      %2847 = vmatpush1.bf16.msra.mxu0 %v2698
      %2848 = vmatprep.subr.bf16.mxu0 0
      %2849 = vmatpush1.bf16.msra.mxu0 %v2699
      %2850 = vmatprep.subr.bf16.mxu0 0
      %2851 = vmatpush1.bf16.msra.mxu0 %v2700
      %2852 = vmatprep.subr.bf16.mxu0 0
      %2853 = vmatpush1.bf16.msra.mxu0 %v2701
      %2854 = vmatprep.subr.bf16.mxu0 0
      %2855 = vmatpush1.bf16.msra.mxu0 %v2702
      %2856 = vmatprep.subr.bf16.mxu0 0
      %2857 = vmatpush1.bf16.msra.mxu0 %v2703
      %2858 = vmatprep.subr.bf16.mxu0 0
      %2859 = vmatpush1.bf16.msra.mxu0 %v2704
      %2860 = vmatprep.subr.bf16.mxu0 0
      %2861 = vmatpush1.bf16.msra.mxu0 %v2705
      %2862 = vmatprep.subr.bf16.mxu0 0
      %2863 = vmatpush1.bf16.msra.mxu0 %v2706
      %2864 = vmatprep.subr.bf16.mxu0 0
      %2865 = vmatpush1.bf16.msra.mxu0 %v2707
      %2866 = vmatprep.subr.bf16.mxu0 0
      %2867 = vmatpush1.bf16.msra.mxu0 %v2708
      %2868 = vmatprep.subr.bf16.mxu0 0
      %2869 = vmatpush1.bf16.msra.mxu0 %v2709
      %2870 = vmatprep.mubr.bf16.mxu0 %v2389
      %2871 = vmatmul.mubr.bf16.gmra.mrb[0].mxu0 %v2388
      %v2872 = vpop.f32.mrb[0].mxu0
      %v2873 = vadd.f32 %v2372, %v2872
      %v2874 = vpop.f32.mrb[0].mxu0
      %v2875 = vpop.f32.mrb[0].mxu0
      %v2876 = vpop.f32.mrb[0].mxu0
      %2877 = vdwg.mxu0
      %2878 = vmatprep.subr.bf16.mxu0 0
      %2879 = vmatpush1.bf16.msra.mxu0 %v2710
      %2880 = vmatprep.subr.bf16.mxu0 0
      %2881 = vmatpush1.bf16.msra.mxu0 %v2711
      %2882 = vmatprep.subr.bf16.mxu0 0
      %2883 = vmatpush1.bf16.msra.mxu0 %v2712
      %2884 = vmatprep.subr.bf16.mxu0 0
      %2885 = vmatpush1.bf16.msra.mxu0 %v2713
      %2886 = vmatprep.subr.bf16.mxu0 0
      %2887 = vmatpush1.bf16.msra.mxu0 %v2714
      %2888 = vmatprep.subr.bf16.mxu0 0
      %2889 = vmatpush1.bf16.msra.mxu0 %v2715
      %2890 = vmatprep.subr.bf16.mxu0 0
      %2891 = vmatpush1.bf16.msra.mxu0 %v2716
      %2892 = vmatprep.subr.bf16.mxu0 0
      %2893 = vmatpush1.bf16.msra.mxu0 %v2717
      %2894 = vmatprep.subr.bf16.mxu0 0
      %2895 = vmatpush1.bf16.msra.mxu0 %v2718
      %2896 = vmatprep.subr.bf16.mxu0 0
      %2897 = vmatpush1.bf16.msra.mxu0 %v2719
      %2898 = vmatprep.subr.bf16.mxu0 0
      %2899 = vmatpush1.bf16.msra.mxu0 %v2720
      %2900 = vmatprep.subr.bf16.mxu0 0
      %2901 = vmatpush1.bf16.msra.mxu0 %v2721
      %2902 = vmatprep.subr.bf16.mxu0 0
      %2903 = vmatpush1.bf16.msra.mxu0 %v2722
      %2904 = vmatprep.subr.bf16.mxu0 0
      %2905 = vmatpush1.bf16.msra.mxu0 %v2723
      %2906 = vmatprep.subr.bf16.mxu0 0
      %2907 = vmatpush1.bf16.msra.mxu0 %v2724
      %2908 = vmatprep.subr.bf16.mxu0 0
      %2909 = vmatpush1.bf16.msra.mxu0 %v2725
      %2910 = vmatprep.mubr.bf16.mxu0 %v2391
      %2911 = vmatmul.mubr.bf16.gmra.mrb[0].mxu0 %v2390
      %v2912 = vpop.f32.mrb[0].mxu0
      %v2913 = vadd.f32 %v2873, %v2912
      %v2914 = vpop.f32.mrb[0].mxu0
      %v2915 = vpop.f32.mrb[0].mxu0
      %v2916 = vpop.f32.mrb[0].mxu0
      %2917 = vdwg.mxu0
      %2918 = vmatprep.subr.bf16.mxu0 0
      %2919 = vmatpush1.bf16.msra.mxu0 %v2726
      %2920 = vmatprep.subr.bf16.mxu0 0
      %2921 = vmatpush1.bf16.msra.mxu0 %v2727
      %2922 = vmatprep.subr.bf16.mxu0 0
      %2923 = vmatpush1.bf16.msra.mxu0 %v2728
      %2924 = vmatprep.subr.bf16.mxu0 0
      %2925 = vmatpush1.bf16.msra.mxu0 %v2729
      %2926 = vmatprep.subr.bf16.mxu0 0
      %2927 = vmatpush1.bf16.msra.mxu0 %v2730
      %2928 = vmatprep.subr.bf16.mxu0 0
      %2929 = vmatpush1.bf16.msra.mxu0 %v2731
      %2930 = vmatprep.subr.bf16.mxu0 0
      %2931 = vmatpush1.bf16.msra.mxu0 %v2732
      %2932 = vmatprep.subr.bf16.mxu0 0
      %2933 = vmatpush1.bf16.msra.mxu0 %v2733
      %2934 = vmatprep.subr.bf16.mxu0 0
      %2935 = vmatpush1.bf16.msra.mxu0 %v2734
      %2936 = vmatprep.subr.bf16.mxu0 0
      %2937 = vmatpush1.bf16.msra.mxu0 %v2735
      %2938 = vmatprep.subr.bf16.mxu0 0
      %2939 = vmatpush1.bf16.msra.mxu0 %v2736
      %2940 = vmatprep.subr.bf16.mxu0 0
      %2941 = vmatpush1.bf16.msra.mxu0 %v2737
      %2942 = vmatprep.subr.bf16.mxu0 0
      %2943 = vmatpush1.bf16.msra.mxu0 %v2738
      %2944 = vmatprep.subr.bf16.mxu0 0
      %2945 = vmatpush1.bf16.msra.mxu0 %v2739
      %2946 = vmatprep.subr.bf16.mxu0 0
      %2947 = vmatpush1.bf16.msra.mxu0 %v2740
      %2948 = vmatprep.subr.bf16.mxu0 0
      %2949 = vmatpush1.bf16.msra.mxu0 %v2741
      %2950 = vmatprep.mubr.bf16.mxu0 %v2393
      %2951 = vmatmul.mubr.bf16.gmra.mrb[0].mxu0 %v2392
      %v2952 = vpop.f32.mrb[0].mxu0
      %v2953 = vadd.f32 %v2913, %v2952
      %v2954 = vpop.f32.mrb[0].mxu0
      %v2955 = vpop.f32.mrb[0].mxu0
      %v2956 = vpop.f32.mrb[0].mxu0
      %2957 = vdwg.mxu0
      %2958 = vmatprep.subr.bf16.mxu0 0
      %2959 = vmatpush1.bf16.msra.mxu0 %v2742
      %2960 = vmatprep.subr.bf16.mxu0 0
      %2961 = vmatpush1.bf16.msra.mxu0 %v2743
      %2962 = vmatprep.subr.bf16.mxu0 0
      %2963 = vmatpush1.bf16.msra.mxu0 %v2744
      %2964 = vmatprep.subr.bf16.mxu0 0
      %2965 = vmatpush1.bf16.msra.mxu0 %v2745
      %2966 = vmatprep.subr.bf16.mxu0 0
      %2967 = vmatpush1.bf16.msra.mxu0 %v2746
      %2968 = vmatprep.subr.bf16.mxu0 0
      %2969 = vmatpush1.bf16.msra.mxu0 %v2747
      %2970 = vmatprep.subr.bf16.mxu0 0
      %2971 = vmatpush1.bf16.msra.mxu0 %v2748
      %2972 = vmatprep.subr.bf16.mxu0 0
      %2973 = vmatpush1.bf16.msra.mxu0 %v2749
      %2974 = vmatprep.subr.bf16.mxu0 0
      %2975 = vmatpush1.bf16.msra.mxu0 %v2750
      %2976 = vmatprep.subr.bf16.mxu0 0
      %2977 = vmatpush1.bf16.msra.mxu0 %v2751
      %2978 = vmatprep.subr.bf16.mxu0 0
      %2979 = vmatpush1.bf16.msra.mxu0 %v2752
      %2980 = vmatprep.subr.bf16.mxu0 0
      %2981 = vmatpush1.bf16.msra.mxu0 %v2753
      %2982 = vmatprep.subr.bf16.mxu0 0
      %2983 = vmatpush1.bf16.msra.mxu0 %v2754
      %2984 = vmatprep.subr.bf16.mxu0 0
      %2985 = vmatpush1.bf16.msra.mxu0 %v2755
      %2986 = vmatprep.subr.bf16.mxu0 0
      %2987 = vmatpush1.bf16.msra.mxu0 %v2756
      %2988 = vmatprep.subr.bf16.mxu0 0
      %2989 = vmatpush1.bf16.msra.mxu0 %v2757
      %2990 = vmatprep.mubr.bf16.mxu0 %v2395
      %2991 = vmatmul.mubr.bf16.gmra.mrb[0].mxu0 %v2394
      %v2992 = vpop.f32.mrb[0].mxu0
      %v2993 = vadd.f32 %v2953, %v2992
      %v2994 = vpop.f32.mrb[0].mxu0
      %v2995 = vpop.f32.mrb[0].mxu0
      %v2996 = vpop.f32.mrb[0].mxu0
      %2997 = vdwg.mxu0
      %2998 = vmatprep.subr.bf16.mxu0 0
      %2999 = vmatpush1.bf16.msra.mxu0 %v2758
      %3000 = vmatprep.subr.bf16.mxu0 0
      %3001 = vmatpush1.bf16.msra.mxu0 %v2759
      %3002 = vmatprep.subr.bf16.mxu0 0
      %3003 = vmatpush1.bf16.msra.mxu0 %v2760
      %3004 = vmatprep.subr.bf16.mxu0 0
      %3005 = vmatpush1.bf16.msra.mxu0 %v2761
      %3006 = vmatprep.subr.bf16.mxu0 0
      %3007 = vmatpush1.bf16.msra.mxu0 %v2762
      %3008 = vmatprep.subr.bf16.mxu0 0
      %3009 = vmatpush1.bf16.msra.mxu0 %v2763
      %3010 = vmatprep.subr.bf16.mxu0 0
      %3011 = vmatpush1.bf16.msra.mxu0 %v2764
      %3012 = vmatprep.subr.bf16.mxu0 0
      %3013 = vmatpush1.bf16.msra.mxu0 %v2765
      %3014 = vmatprep.subr.bf16.mxu0 0
      %3015 = vmatpush1.bf16.msra.mxu0 0
      %3016 = vmatprep.subr.bf16.mxu0 0
      %3017 = vmatpush1.bf16.msra.mxu0 0
      %3018 = vmatprep.subr.bf16.mxu0 0
      %3019 = vmatpush1.bf16.msra.mxu0 0
      %3020 = vmatprep.subr.bf16.mxu0 0
      %3021 = vmatpush1.bf16.msra.mxu0 0
      %3022 = vmatprep.subr.bf16.mxu0 0
      %3023 = vmatpush1.bf16.msra.mxu0 0
      %3024 = vmatprep.subr.bf16.mxu0 0
      %3025 = vmatpush1.bf16.msra.mxu0 0
      %3026 = vmatprep.subr.bf16.mxu0 0
      %3027 = vmatpush1.bf16.msra.mxu0 0
      %3028 = vmatprep.subr.bf16.mxu0 0
      %3029 = vmatpush1.bf16.msra.mxu0 0
      %3030 = vmatprep.mubr.bf16.mxu0 0
      %3031 = vmatmul.mubr.bf16.gmra.mrb[0].mxu0 %v2396
      %v3032 = vpop.f32.mrb[0].mxu0
      %v3033 = vadd.f32 %v2993, %v3032
      %v3034 = vpop.f32.mrb[0].mxu0
      %v3035 = vpop.f32.mrb[0].mxu0
      %v3036 = vpop.f32.mrb[0].mxu0
      %3037 = vdwg.mxu0
      %v3038 = vmax.f32 %v3033, 0.0
      %v3039 = vpack.c.bf16 %v3038, %v3038
      %3040 = vst [vmem:[#allocation6] sm:$0x7] %v3039
      %v3041 = vld [vmem:[%s10] sm:$0x1]
      %v3042 = vld [vmem:[#allocation6] sm:$0x1]
      %v3043 = vld [vmem:[%s9] sm:$0xf]
      %v3044 = vld [vmem:[%s9 + $0x4] sm:$0xf]
      %v3045 = vld [vmem:[%s9 + $0x8] sm:$0xf]
      %v3046 = vld [vmem:[%s9 + $0xc] sm:$0xf]
      %v3047 = vld [vmem:[%s9 + $0x10] sm:$0xf]
      %v3048 = vld [vmem:[%s9 + $0x14] sm:$0xf]
      %v3049 = vld [vmem:[%s9 + $0x18] sm:$0xf]
      %v3050 = vld [vmem:[%s9 + $0x1c] sm:$0xf]
      %v3051 = vld [vmem:[%s9 + $0x20] sm:$0xf]
      %v3052 = vld [vmem:[%s9 + $0x24] sm:$0xf]
      %v3053 = vld [vmem:[%s9 + $0x28] sm:$0xf]
      %v3054 = vld [vmem:[%s9 + $0x2c] sm:$0xf]
      %v3055 = vld [vmem:[%s9 + $0x30] sm:$0xf]
      %v3056 = vld [vmem:[%s9 + $0x34] sm:$0xf]
      %v3057 = vld [vmem:[%s9 + $0x38] sm:$0xf]
      %v3058 = vld [vmem:[%s9 + $0x3c] sm:$0xf]
      %v3075 = vunpack.c.l.b16 %v3043
      %v3076 = vunpack.c.l.b16 %v3044
      %v3077 = vunpack.c.l.b16 %v3045
      %v3078 = vunpack.c.l.b16 %v3046
      %v3079 = vunpack.c.l.b16 %v3047
      %v3080 = vunpack.c.l.b16 %v3048
      %v3081 = vunpack.c.l.b16 %v3049
      %v3082 = vunpack.c.l.b16 %v3050
      %v3083 = vunpack.c.l.b16 %v3051
      %v3084 = vunpack.c.l.b16 %v3052
      %v3085 = vunpack.c.l.b16 %v3053
      %v3086 = vunpack.c.l.b16 %v3054
      %v3087 = vunpack.c.l.b16 %v3055
      %v3088 = vunpack.c.l.b16 %v3056
      %v3089 = vunpack.c.l.b16 %v3057
      %v3090 = vunpack.c.l.b16 %v3058
      %v3091 = vpack.c.b16 %v3076, %v3075
      %v3092 = vpack.c.b16 %v3078, %v3077
      %v3093 = vpack.c.b16 %v3080, %v3079
      %v3094 = vpack.c.b16 %v3082, %v3081
      %v3095 = vpack.c.b16 %v3084, %v3083
      %v3096 = vpack.c.b16 %v3086, %v3085
      %v3097 = vpack.c.b16 %v3088, %v3087
      %v3098 = vpack.c.b16 %v3090, %v3089
      %3107 = vmatprep.subr.bf16.mxu0 0
      %3108 = vmatpush1.bf16.msra.mxu0 %v3091
      %3109 = vmatprep.subr.bf16.mxu0 0
      %3110 = vmatpush1.bf16.msra.mxu0 %v3092
      %3111 = vmatprep.subr.bf16.mxu0 0
      %3112 = vmatpush1.bf16.msra.mxu0 %v3093
      %3113 = vmatprep.subr.bf16.mxu0 0
      %3114 = vmatpush1.bf16.msra.mxu0 %v3094
      %3115 = vmatprep.subr.bf16.mxu0 0
      %3116 = vmatpush1.bf16.msra.mxu0 %v3095
      %3117 = vmatprep.subr.bf16.mxu0 0
      %3118 = vmatpush1.bf16.msra.mxu0 %v3096
      %3119 = vmatprep.subr.bf16.mxu0 0
      %3120 = vmatpush1.bf16.msra.mxu0 %v3097
      %3121 = vmatprep.subr.bf16.mxu0 0
      %3122 = vmatpush1.bf16.msra.mxu0 %v3098
      %3123 = vmatprep.subr.bf16.mxu0 0
      %3124 = vmatpush1.bf16.msra.mxu0 0
      %3125 = vmatprep.subr.bf16.mxu0 0
      %3126 = vmatpush1.bf16.msra.mxu0 0
      %3127 = vmatprep.subr.bf16.mxu0 0
      %3128 = vmatpush1.bf16.msra.mxu0 0
      %3129 = vmatprep.subr.bf16.mxu0 0
      %3130 = vmatpush1.bf16.msra.mxu0 0
      %3131 = vmatprep.subr.bf16.mxu0 0
      %3132 = vmatpush1.bf16.msra.mxu0 0
      %3133 = vmatprep.subr.bf16.mxu0 0
      %3134 = vmatpush1.bf16.msra.mxu0 0
      %3135 = vmatprep.subr.bf16.mxu0 0
      %3136 = vmatpush1.bf16.msra.mxu0 0
      %3137 = vmatprep.subr.bf16.mxu0 0
      %3138 = vmatpush1.bf16.msra.mxu0 0
      %3139 = vmatprep.mubr.bf16.mxu0 0
      %3140 = vmatmul.mubr.bf16.gmra.mrb[0].mxu0 %v3042
      %v3141 = vpop.f32.mrb[0].mxu0
      %v3142 = vadd.f32 0.0, %v3141
      %v3143 = vpop.f32.mrb[0].mxu0
      %v3144 = vpop.f32.mrb[0].mxu0
      %v3145 = vpop.f32.mrb[0].mxu0
      %3146 = vdwg.mxu0
      %v3147 = vadd.f32 %v3041, %v3142
      %s3148 = scalar_lea.vmem %s9, 64
      %v3149 = vld [vmem:[%s3148] sm:$0xf]
      %v3150 = vld [vmem:[%s3148 + $0x4] sm:$0xf]
      %v3151 = vld [vmem:[%s3148 + $0x8] sm:$0xf]
      %v3152 = vld [vmem:[%s3148 + $0xc] sm:$0xf]
      %v3153 = vld [vmem:[%s3148 + $0x10] sm:$0xf]
      %v3154 = vld [vmem:[%s3148 + $0x14] sm:$0xf]
      %v3155 = vld [vmem:[%s3148 + $0x18] sm:$0xf]
      %v3156 = vld [vmem:[%s3148 + $0x1c] sm:$0xf]
      %v3157 = vld [vmem:[%s3148 + $0x20] sm:$0xf]
      %v3158 = vld [vmem:[%s3148 + $0x24] sm:$0xf]
      %v3159 = vld [vmem:[%s3148 + $0x28] sm:$0xf]
      %v3160 = vld [vmem:[%s3148 + $0x2c] sm:$0xf]
      %v3161 = vld [vmem:[%s3148 + $0x30] sm:$0xf]
      %v3162 = vld [vmem:[%s3148 + $0x34] sm:$0xf]
      %v3163 = vld [vmem:[%s3148 + $0x38] sm:$0xf]
      %v3164 = vld [vmem:[%s3148 + $0x3c] sm:$0xf]
      %v3166 = vunpack.c.l.b16 %v3042
      %v3167 = vpack.c.b16 %v3166, %v3166
      %v3169 = vshrl.u32 %v3167, 16
      %v3188 = vunpack.c.l.b16 %v3149
      %v3189 = vunpack.c.l.b16 %v3150
      %v3190 = vunpack.c.l.b16 %v3151
      %v3191 = vunpack.c.l.b16 %v3152
      %v3192 = vunpack.c.l.b16 %v3153
      %v3193 = vunpack.c.l.b16 %v3154
      %v3194 = vunpack.c.l.b16 %v3155
      %v3195 = vunpack.c.l.b16 %v3156
      %v3196 = vunpack.c.l.b16 %v3157
      %v3197 = vunpack.c.l.b16 %v3158
      %v3198 = vunpack.c.l.b16 %v3159
      %v3199 = vunpack.c.l.b16 %v3160
      %v3200 = vunpack.c.l.b16 %v3161
      %v3201 = vunpack.c.l.b16 %v3162
      %v3202 = vunpack.c.l.b16 %v3163
      %v3203 = vunpack.c.l.b16 %v3164
      %v3204 = vpack.c.b16 %v3189, %v3188
      %v3205 = vpack.c.b16 %v3191, %v3190
      %v3206 = vpack.c.b16 %v3193, %v3192
      %v3207 = vpack.c.b16 %v3195, %v3194
      %v3208 = vpack.c.b16 %v3197, %v3196
      %v3209 = vpack.c.b16 %v3199, %v3198
      %v3210 = vpack.c.b16 %v3201, %v3200
      %v3211 = vpack.c.b16 %v3203, %v3202
      %3220 = vmatprep.subr.bf16.mxu0 0
      %3221 = vmatpush1.bf16.msra.mxu0 %v3204
      %3222 = vmatprep.subr.bf16.mxu0 0
      %3223 = vmatpush1.bf16.msra.mxu0 %v3205
      %3224 = vmatprep.subr.bf16.mxu0 0
      %3225 = vmatpush1.bf16.msra.mxu0 %v3206
      %3226 = vmatprep.subr.bf16.mxu0 0
      %3227 = vmatpush1.bf16.msra.mxu0 %v3207
      %3228 = vmatprep.subr.bf16.mxu0 0
      %3229 = vmatpush1.bf16.msra.mxu0 %v3208
      %3230 = vmatprep.subr.bf16.mxu0 0
      %3231 = vmatpush1.bf16.msra.mxu0 %v3209
      %3232 = vmatprep.subr.bf16.mxu0 0
      %3233 = vmatpush1.bf16.msra.mxu0 %v3210
      %3234 = vmatprep.subr.bf16.mxu0 0
      %3235 = vmatpush1.bf16.msra.mxu0 %v3211
      %3236 = vmatprep.subr.bf16.mxu0 0
      %3237 = vmatpush1.bf16.msra.mxu0 0
      %3238 = vmatprep.subr.bf16.mxu0 0
      %3239 = vmatpush1.bf16.msra.mxu0 0
      %3240 = vmatprep.subr.bf16.mxu0 0
      %3241 = vmatpush1.bf16.msra.mxu0 0
      %3242 = vmatprep.subr.bf16.mxu0 0
      %3243 = vmatpush1.bf16.msra.mxu0 0
      %3244 = vmatprep.subr.bf16.mxu0 0
      %3245 = vmatpush1.bf16.msra.mxu0 0
      %3246 = vmatprep.subr.bf16.mxu0 0
      %3247 = vmatpush1.bf16.msra.mxu0 0
      %3248 = vmatprep.subr.bf16.mxu0 0
      %3249 = vmatpush1.bf16.msra.mxu0 0
      %3250 = vmatprep.subr.bf16.mxu0 0
      %3251 = vmatpush1.bf16.msra.mxu0 0
      %3252 = vmatprep.mubr.bf16.mxu0 0
      %3253 = vmatmul.mubr.bf16.gmra.mrb[0].mxu0 %v3169
      %v3254 = vpop.f32.mrb[0].mxu0
      %v3255 = vadd.f32 0.0, %v3254
      %v3256 = vpop.f32.mrb[0].mxu0
      %v3257 = vpop.f32.mrb[0].mxu0
      %v3258 = vpop.f32.mrb[0].mxu0
      %3259 = vdwg.mxu0
      %v3260 = vadd.f32 %v3147, %v3255
      %v3261 = vld [vmem:[#allocation6] sm:$0x2]
      %s3262 = scalar_lea.vmem %s9, 128
      %v3263 = vld [vmem:[%s3262] sm:$0xf]
      %v3264 = vld [vmem:[%s3262 + $0x4] sm:$0xf]
      %v3265 = vld [vmem:[%s3262 + $0x8] sm:$0xf]
      %v3266 = vld [vmem:[%s3262 + $0xc] sm:$0xf]
      %v3267 = vld [vmem:[%s3262 + $0x10] sm:$0xf]
      %v3268 = vld [vmem:[%s3262 + $0x14] sm:$0xf]
      %v3269 = vld [vmem:[%s3262 + $0x18] sm:$0xf]
      %v3270 = vld [vmem:[%s3262 + $0x1c] sm:$0xf]
      %v3271 = vld [vmem:[%s3262 + $0x20] sm:$0xf]
      %v3272 = vld [vmem:[%s3262 + $0x24] sm:$0xf]
      %v3273 = vld [vmem:[%s3262 + $0x28] sm:$0xf]
      %v3274 = vld [vmem:[%s3262 + $0x2c] sm:$0xf]
      %v3275 = vld [vmem:[%s3262 + $0x30] sm:$0xf]
      %v3276 = vld [vmem:[%s3262 + $0x34] sm:$0xf]
      %v3277 = vld [vmem:[%s3262 + $0x38] sm:$0xf]
      %v3278 = vld [vmem:[%s3262 + $0x3c] sm:$0xf]
      %v3280 = vunpack.c.l.b16 %v3261
      %v3281 = vpack.c.b16 %v3280, %v3280
      %v3282 = vrot.slane %v3281, 1
      %v3300 = vunpack.c.l.b16 %v3263
      %v3301 = vunpack.c.l.b16 %v3264
      %v3302 = vunpack.c.l.b16 %v3265
      %v3303 = vunpack.c.l.b16 %v3266
      %v3304 = vunpack.c.l.b16 %v3267
      %v3305 = vunpack.c.l.b16 %v3268
      %v3306 = vunpack.c.l.b16 %v3269
      %v3307 = vunpack.c.l.b16 %v3270
      %v3308 = vunpack.c.l.b16 %v3271
      %v3309 = vunpack.c.l.b16 %v3272
      %v3310 = vunpack.c.l.b16 %v3273
      %v3311 = vunpack.c.l.b16 %v3274
      %v3312 = vunpack.c.l.b16 %v3275
      %v3313 = vunpack.c.l.b16 %v3276
      %v3314 = vunpack.c.l.b16 %v3277
      %v3315 = vunpack.c.l.b16 %v3278
      %v3316 = vpack.c.b16 %v3301, %v3300
      %v3317 = vpack.c.b16 %v3303, %v3302
      %v3318 = vpack.c.b16 %v3305, %v3304
      %v3319 = vpack.c.b16 %v3307, %v3306
      %v3320 = vpack.c.b16 %v3309, %v3308
      %v3321 = vpack.c.b16 %v3311, %v3310
      %v3322 = vpack.c.b16 %v3313, %v3312
      %v3323 = vpack.c.b16 %v3315, %v3314
      %3332 = vmatprep.subr.bf16.mxu0 0
      %3333 = vmatpush1.bf16.msra.mxu0 %v3316
      %3334 = vmatprep.subr.bf16.mxu0 0
      %3335 = vmatpush1.bf16.msra.mxu0 %v3317
      %3336 = vmatprep.subr.bf16.mxu0 0
      %3337 = vmatpush1.bf16.msra.mxu0 %v3318
      %3338 = vmatprep.subr.bf16.mxu0 0
      %3339 = vmatpush1.bf16.msra.mxu0 %v3319
      %3340 = vmatprep.subr.bf16.mxu0 0
      %3341 = vmatpush1.bf16.msra.mxu0 %v3320
      %3342 = vmatprep.subr.bf16.mxu0 0
      %3343 = vmatpush1.bf16.msra.mxu0 %v3321
      %3344 = vmatprep.subr.bf16.mxu0 0
      %3345 = vmatpush1.bf16.msra.mxu0 %v3322
      %3346 = vmatprep.subr.bf16.mxu0 0
      %3347 = vmatpush1.bf16.msra.mxu0 %v3323
      %3348 = vmatprep.subr.bf16.mxu0 0
      %3349 = vmatpush1.bf16.msra.mxu0 0
      %3350 = vmatprep.subr.bf16.mxu0 0
      %3351 = vmatpush1.bf16.msra.mxu0 0
      %3352 = vmatprep.subr.bf16.mxu0 0
      %3353 = vmatpush1.bf16.msra.mxu0 0
      %3354 = vmatprep.subr.bf16.mxu0 0
      %3355 = vmatpush1.bf16.msra.mxu0 0
      %3356 = vmatprep.subr.bf16.mxu0 0
      %3357 = vmatpush1.bf16.msra.mxu0 0
      %3358 = vmatprep.subr.bf16.mxu0 0
      %3359 = vmatpush1.bf16.msra.mxu0 0
      %3360 = vmatprep.subr.bf16.mxu0 0
      %3361 = vmatpush1.bf16.msra.mxu0 0
      %3362 = vmatprep.subr.bf16.mxu0 0
      %3363 = vmatpush1.bf16.msra.mxu0 0
      %3364 = vmatprep.mubr.bf16.mxu0 0
      %3365 = vmatmul.mubr.bf16.gmra.mrb[0].mxu0 %v3282
      %v3366 = vpop.f32.mrb[0].mxu0
      %v3367 = vadd.f32 0.0, %v3366
      %v3368 = vpop.f32.mrb[0].mxu0
      %v3369 = vpop.f32.mrb[0].mxu0
      %v3370 = vpop.f32.mrb[0].mxu0
      %3371 = vdwg.mxu0
      %v3372 = vadd.f32 %v3260, %v3367
      %s3373 = scalar_lea.vmem %s9, 192
      %v3374 = vld [vmem:[%s3373] sm:$0xf]
      %v3375 = vld [vmem:[%s3373 + $0x4] sm:$0xf]
      %v3376 = vld [vmem:[%s3373 + $0x8] sm:$0xf]
      %v3377 = vld [vmem:[%s3373 + $0xc] sm:$0xf]
      %v3378 = vld [vmem:[%s3373 + $0x10] sm:$0xf]
      %v3379 = vld [vmem:[%s3373 + $0x14] sm:$0xf]
      %v3380 = vld [vmem:[%s3373 + $0x18] sm:$0xf]
      %v3381 = vld [vmem:[%s3373 + $0x1c] sm:$0xf]
      %v3382 = vld [vmem:[%s3373 + $0x20] sm:$0xf]
      %v3383 = vld [vmem:[%s3373 + $0x24] sm:$0xf]
      %v3384 = vld [vmem:[%s3373 + $0x28] sm:$0xf]
      %v3385 = vld [vmem:[%s3373 + $0x2c] sm:$0xf]
      %v3386 = vld [vmem:[%s3373 + $0x30] sm:$0xf]
      %v3387 = vld [vmem:[%s3373 + $0x34] sm:$0xf]
      %v3388 = vld [vmem:[%s3373 + $0x38] sm:$0xf]
      %v3389 = vld [vmem:[%s3373 + $0x3c] sm:$0xf]
      %v3391 = vshrl.u32 %v3281, 16
      %v3393 = vrot.slane %v3391, 1
      %v3411 = vunpack.c.l.b16 %v3374
      %v3412 = vunpack.c.l.b16 %v3375
      %v3413 = vunpack.c.l.b16 %v3376
      %v3414 = vunpack.c.l.b16 %v3377
      %v3415 = vunpack.c.l.b16 %v3378
      %v3416 = vunpack.c.l.b16 %v3379
      %v3417 = vunpack.c.l.b16 %v3380
      %v3418 = vunpack.c.l.b16 %v3381
      %v3419 = vunpack.c.l.b16 %v3382
      %v3420 = vunpack.c.l.b16 %v3383
      %v3421 = vunpack.c.l.b16 %v3384
      %v3422 = vunpack.c.l.b16 %v3385
      %v3423 = vunpack.c.l.b16 %v3386
      %v3424 = vunpack.c.l.b16 %v3387
      %v3425 = vunpack.c.l.b16 %v3388
      %v3426 = vunpack.c.l.b16 %v3389
      %v3427 = vpack.c.b16 %v3412, %v3411
      %v3428 = vpack.c.b16 %v3414, %v3413
      %v3429 = vpack.c.b16 %v3416, %v3415
      %v3430 = vpack.c.b16 %v3418, %v3417
      %v3431 = vpack.c.b16 %v3420, %v3419
      %v3432 = vpack.c.b16 %v3422, %v3421
      %v3433 = vpack.c.b16 %v3424, %v3423
      %v3434 = vpack.c.b16 %v3426, %v3425
      %3443 = vmatprep.subr.bf16.mxu0 0
      %3444 = vmatpush1.bf16.msra.mxu0 %v3427
      %3445 = vmatprep.subr.bf16.mxu0 0
      %3446 = vmatpush1.bf16.msra.mxu0 %v3428
      %3447 = vmatprep.subr.bf16.mxu0 0
      %3448 = vmatpush1.bf16.msra.mxu0 %v3429
      %3449 = vmatprep.subr.bf16.mxu0 0
      %3450 = vmatpush1.bf16.msra.mxu0 %v3430
      %3451 = vmatprep.subr.bf16.mxu0 0
      %3452 = vmatpush1.bf16.msra.mxu0 %v3431
      %3453 = vmatprep.subr.bf16.mxu0 0
      %3454 = vmatpush1.bf16.msra.mxu0 %v3432
      %3455 = vmatprep.subr.bf16.mxu0 0
      %3456 = vmatpush1.bf16.msra.mxu0 %v3433
      %3457 = vmatprep.subr.bf16.mxu0 0
      %3458 = vmatpush1.bf16.msra.mxu0 %v3434
      %3459 = vmatprep.subr.bf16.mxu0 0
      %3460 = vmatpush1.bf16.msra.mxu0 0
      %3461 = vmatprep.subr.bf16.mxu0 0
      %3462 = vmatpush1.bf16.msra.mxu0 0
      %3463 = vmatprep.subr.bf16.mxu0 0
      %3464 = vmatpush1.bf16.msra.mxu0 0
      %3465 = vmatprep.subr.bf16.mxu0 0
      %3466 = vmatpush1.bf16.msra.mxu0 0
      %3467 = vmatprep.subr.bf16.mxu0 0
      %3468 = vmatpush1.bf16.msra.mxu0 0
      %3469 = vmatprep.subr.bf16.mxu0 0
      %3470 = vmatpush1.bf16.msra.mxu0 0
      %3471 = vmatprep.subr.bf16.mxu0 0
      %3472 = vmatpush1.bf16.msra.mxu0 0
      %3473 = vmatprep.subr.bf16.mxu0 0
      %3474 = vmatpush1.bf16.msra.mxu0 0
      %3475 = vmatprep.mubr.bf16.mxu0 0
      %3476 = vmatmul.mubr.bf16.gmra.mrb[0].mxu0 %v3393
      %v3477 = vpop.f32.mrb[0].mxu0
      %v3478 = vadd.f32 0.0, %v3477
      %v3479 = vpop.f32.mrb[0].mxu0
      %v3480 = vpop.f32.mrb[0].mxu0
      %v3481 = vpop.f32.mrb[0].mxu0
      %3482 = vdwg.mxu0
      %v3483 = vadd.f32 %v3372, %v3478
      %v3484 = vld [vmem:[#allocation6] sm:$0x4]
      %s3485 = scalar_lea.vmem %s9, 256
      %v3486 = vld [vmem:[%s3485] sm:$0xf]
      %v3487 = vld [vmem:[%s3485 + $0x4] sm:$0xf]
      %v3488 = vld [vmem:[%s3485 + $0x8] sm:$0xf]
      %v3489 = vld [vmem:[%s3485 + $0xc] sm:$0xf]
      %v3490 = vld [vmem:[%s3485 + $0x10] sm:$0xf]
      %v3491 = vld [vmem:[%s3485 + $0x14] sm:$0xf]
      %v3492 = vld [vmem:[%s3485 + $0x18] sm:$0xf]
      %v3493 = vld [vmem:[%s3485 + $0x1c] sm:$0xf]
      %v3494 = vld [vmem:[%s3485 + $0x20] sm:$0xf]
      %v3495 = vld [vmem:[%s3485 + $0x24] sm:$0xf]
      %v3496 = vld [vmem:[%s3485 + $0x28] sm:$0xf]
      %v3497 = vld [vmem:[%s3485 + $0x2c] sm:$0xf]
      %v3498 = vld [vmem:[%s3485 + $0x30] sm:$0xf]
      %v3499 = vld [vmem:[%s3485 + $0x34] sm:$0xf]
      %v3500 = vld [vmem:[%s3485 + $0x38] sm:$0xf]
      %v3501 = vld [vmem:[%s3485 + $0x3c] sm:$0xf]
      %v3503 = vunpack.c.l.b16 %v3484
      %v3504 = vpack.c.b16 %v3503, %v3503
      %v3505 = vrot.slane %v3504, 2
      %v3523 = vunpack.c.l.b16 %v3486
      %v3524 = vunpack.c.l.b16 %v3487
      %v3525 = vunpack.c.l.b16 %v3488
      %v3526 = vunpack.c.l.b16 %v3489
      %v3527 = vunpack.c.l.b16 %v3490
      %v3528 = vunpack.c.l.b16 %v3491
      %v3529 = vunpack.c.l.b16 %v3492
      %v3530 = vunpack.c.l.b16 %v3493
      %v3531 = vunpack.c.l.b16 %v3494
      %v3532 = vunpack.c.l.b16 %v3495
      %v3533 = vunpack.c.l.b16 %v3496
      %v3534 = vunpack.c.l.b16 %v3497
      %v3535 = vunpack.c.l.b16 %v3498
      %v3536 = vunpack.c.l.b16 %v3499
      %v3537 = vunpack.c.l.b16 %v3500
      %v3538 = vunpack.c.l.b16 %v3501
      %v3539 = vpack.c.b16 %v3524, %v3523
      %v3540 = vpack.c.b16 %v3526, %v3525
      %v3541 = vpack.c.b16 %v3528, %v3527
      %v3542 = vpack.c.b16 %v3530, %v3529
      %v3543 = vpack.c.b16 %v3532, %v3531
      %v3544 = vpack.c.b16 %v3534, %v3533
      %v3545 = vpack.c.b16 %v3536, %v3535
      %v3546 = vpack.c.b16 %v3538, %v3537
      %3555 = vmatprep.subr.bf16.mxu0 0
      %3556 = vmatpush1.bf16.msra.mxu0 %v3539
      %3557 = vmatprep.subr.bf16.mxu0 0
      %3558 = vmatpush1.bf16.msra.mxu0 %v3540
      %3559 = vmatprep.subr.bf16.mxu0 0
      %3560 = vmatpush1.bf16.msra.mxu0 %v3541
      %3561 = vmatprep.subr.bf16.mxu0 0
      %3562 = vmatpush1.bf16.msra.mxu0 %v3542
      %3563 = vmatprep.subr.bf16.mxu0 0
      %3564 = vmatpush1.bf16.msra.mxu0 %v3543
      %3565 = vmatprep.subr.bf16.mxu0 0
      %3566 = vmatpush1.bf16.msra.mxu0 %v3544
      %3567 = vmatprep.subr.bf16.mxu0 0
      %3568 = vmatpush1.bf16.msra.mxu0 %v3545
      %3569 = vmatprep.subr.bf16.mxu0 0
      %3570 = vmatpush1.bf16.msra.mxu0 %v3546
      %3571 = vmatprep.subr.bf16.mxu0 0
      %3572 = vmatpush1.bf16.msra.mxu0 0
      %3573 = vmatprep.subr.bf16.mxu0 0
      %3574 = vmatpush1.bf16.msra.mxu0 0
      %3575 = vmatprep.subr.bf16.mxu0 0
      %3576 = vmatpush1.bf16.msra.mxu0 0
      %3577 = vmatprep.subr.bf16.mxu0 0
      %3578 = vmatpush1.bf16.msra.mxu0 0
      %3579 = vmatprep.subr.bf16.mxu0 0
      %3580 = vmatpush1.bf16.msra.mxu0 0
      %3581 = vmatprep.subr.bf16.mxu0 0
      %3582 = vmatpush1.bf16.msra.mxu0 0
      %3583 = vmatprep.subr.bf16.mxu0 0
      %3584 = vmatpush1.bf16.msra.mxu0 0
      %3585 = vmatprep.subr.bf16.mxu0 0
      %3586 = vmatpush1.bf16.msra.mxu0 0
      %3587 = vmatprep.mubr.bf16.mxu0 0
      %3588 = vmatmul.mubr.bf16.gmra.mrb[0].mxu0 %v3505
      %v3589 = vpop.f32.mrb[0].mxu0
      %v3590 = vadd.f32 0.0, %v3589
      %v3591 = vpop.f32.mrb[0].mxu0
      %v3592 = vpop.f32.mrb[0].mxu0
      %v3593 = vpop.f32.mrb[0].mxu0
      %3594 = vdwg.mxu0
      %v3595 = vadd.f32 %v3483, %v3590
      %s3596 = scalar_lea.vmem %s9, 320
      %v3597 = vld [vmem:[%s3596] sm:$0xf]
      %v3598 = vld [vmem:[%s3596 + $0x4] sm:$0xf]
      %v3599 = vld [vmem:[%s3596 + $0x8] sm:$0xf]
      %v3600 = vld [vmem:[%s3596 + $0xc] sm:$0xf]
      %v3601 = vld [vmem:[%s3596 + $0x10] sm:$0xf]
      %v3602 = vld [vmem:[%s3596 + $0x14] sm:$0xf]
      %v3603 = vld [vmem:[%s3596 + $0x18] sm:$0xf]
      %v3604 = vld [vmem:[%s3596 + $0x1c] sm:$0xf]
      %v3605 = vld [vmem:[%s3596 + $0x20] sm:$0xf]
      %v3606 = vld [vmem:[%s3596 + $0x24] sm:$0xf]
      %v3607 = vld [vmem:[%s3596 + $0x28] sm:$0xf]
      %v3608 = vld [vmem:[%s3596 + $0x2c] sm:$0xf]
      %v3609 = vld [vmem:[%s3596 + $0x30] sm:$0xf]
      %v3610 = vld [vmem:[%s3596 + $0x34] sm:$0xf]
      %v3611 = vld [vmem:[%s3596 + $0x38] sm:$0xf]
      %v3612 = vld [vmem:[%s3596 + $0x3c] sm:$0xf]
      %v3614 = vshrl.u32 %v3504, 16
      %v3616 = vrot.slane %v3614, 2
      %v3634 = vunpack.c.l.b16 %v3597
      %v3635 = vunpack.c.l.b16 %v3598
      %v3636 = vunpack.c.l.b16 %v3599
      %v3637 = vunpack.c.l.b16 %v3600
      %v3638 = vunpack.c.l.b16 %v3601
      %v3639 = vunpack.c.l.b16 %v3602
      %v3640 = vunpack.c.l.b16 %v3603
      %v3641 = vunpack.c.l.b16 %v3604
      %v3642 = vunpack.c.l.b16 %v3605
      %v3643 = vunpack.c.l.b16 %v3606
      %v3644 = vunpack.c.l.b16 %v3607
      %v3645 = vunpack.c.l.b16 %v3608
      %v3646 = vunpack.c.l.b16 %v3609
      %v3647 = vunpack.c.l.b16 %v3610
      %v3648 = vunpack.c.l.b16 %v3611
      %v3649 = vunpack.c.l.b16 %v3612
      %v3650 = vpack.c.b16 %v3635, %v3634
      %v3651 = vpack.c.b16 %v3637, %v3636
      %v3652 = vpack.c.b16 %v3639, %v3638
      %v3653 = vpack.c.b16 %v3641, %v3640
      %v3654 = vpack.c.b16 %v3643, %v3642
      %v3655 = vpack.c.b16 %v3645, %v3644
      %v3656 = vpack.c.b16 %v3647, %v3646
      %v3657 = vpack.c.b16 %v3649, %v3648
      %3666 = vmatprep.subr.bf16.mxu0 0
      %3667 = vmatpush1.bf16.msra.mxu0 %v3650
      %3668 = vmatprep.subr.bf16.mxu0 0
      %3669 = vmatpush1.bf16.msra.mxu0 %v3651
      %3670 = vmatprep.subr.bf16.mxu0 0
      %3671 = vmatpush1.bf16.msra.mxu0 %v3652
      %3672 = vmatprep.subr.bf16.mxu0 0
      %3673 = vmatpush1.bf16.msra.mxu0 %v3653
      %3674 = vmatprep.subr.bf16.mxu0 0
      %3675 = vmatpush1.bf16.msra.mxu0 %v3654
      %3676 = vmatprep.subr.bf16.mxu0 0
      %3677 = vmatpush1.bf16.msra.mxu0 %v3655
      %3678 = vmatprep.subr.bf16.mxu0 0
      %3679 = vmatpush1.bf16.msra.mxu0 %v3656
      %3680 = vmatprep.subr.bf16.mxu0 0
      %3681 = vmatpush1.bf16.msra.mxu0 %v3657
      %3682 = vmatprep.subr.bf16.mxu0 0
      %3683 = vmatpush1.bf16.msra.mxu0 0
      %3684 = vmatprep.subr.bf16.mxu0 0
      %3685 = vmatpush1.bf16.msra.mxu0 0
      %3686 = vmatprep.subr.bf16.mxu0 0
      %3687 = vmatpush1.bf16.msra.mxu0 0
      %3688 = vmatprep.subr.bf16.mxu0 0
      %3689 = vmatpush1.bf16.msra.mxu0 0
      %3690 = vmatprep.subr.bf16.mxu0 0
      %3691 = vmatpush1.bf16.msra.mxu0 0
      %3692 = vmatprep.subr.bf16.mxu0 0
      %3693 = vmatpush1.bf16.msra.mxu0 0
      %3694 = vmatprep.subr.bf16.mxu0 0
      %3695 = vmatpush1.bf16.msra.mxu0 0
      %3696 = vmatprep.subr.bf16.mxu0 0
      %3697 = vmatpush1.bf16.msra.mxu0 0
      %3698 = vmatprep.mubr.bf16.mxu0 0
      %3699 = vmatmul.mubr.bf16.gmra.mrb[0].mxu0 %v3616
      %v3700 = vpop.f32.mrb[0].mxu0
      %v3701 = vadd.f32 0.0, %v3700
      %v3702 = vpop.f32.mrb[0].mxu0
      %v3703 = vpop.f32.mrb[0].mxu0
      %v3704 = vpop.f32.mrb[0].mxu0
      %3705 = vdwg.mxu0
      %v3706 = vadd.f32 %v3595, %v3701
      %3707 = vst [vmem:[%s382] sm:$0x1] %v3706
      %p3708 = scmp.lt.s32.totalorder %s22, 1
      %s3709 = scalar_select %p3708, %s22, 1
      %s3710 = scalar_lea.vmem %s11, %s3709
      // Predicated region
      $region65: #{forward.1} parent=63 // pred_check
        %p3711 = pneg %p276
      $region66: #{forward.1} parent=63 // pred_check_branch
        %3713 = sbr.rel (%p3711) target = $region68
      $region67: #{forward.1} parent=63 // pred_region
        _
      $region68: #{forward.1} parent=63 // pred_fallthru
        _
    $region64: #{forward.1} parent=5 // pred_fallthru
      _
    %p3714 = scmp.le.s32.totalorder 2, %s17
    // Predicated region
    $region69: #{forward.1} parent=5 // pred_check
      %p3715 = pneg %p3714
    $region70: #{forward.1} parent=5 // pred_check_branch
      %3717 = sbr.rel (%p3715) target = $region72
    $region71: #{forward.1} parent=5 // pred_region
      %s3718 = ssub.s32 %s17, 2
      // Predicated region
      $region73: #{forward.1} parent=71 // pred_check
        %p3719 = pneg %p282
      $region74: #{forward.1} parent=71 // pred_check_branch
        %3721 = sbr.rel (%p3719) target = $region76
      $region75: #{forward.1} parent=71 // pred_region
        %p3722 = scmp.lt.s32.totalorder %s23, 1
        %s3723 = scalar_select %p3722, %s23, 1
        %s3724 = scalar_lea.vmem %s11, %s3723
      $region76: #{forward.1} parent=71 // pred_fallthru
        _
    $region72: #{forward.1} parent=5 // pred_fallthru
      _
  $region6: #{forward.1} parent=0 // loop_footer
    %s21 = sadd.s32 1, %s17
  $region7: #{forward.1} parent=0 // loop_footer_branch
    %16 = sbr.rel target = $region3
  $region8: #{forward.1} parent=0 // loop_exit
    _

</llo_original>
